<compile_context>
chip_gen: v7x
topology: tpu7x:2x2x1
jax: 0.10.0
libtpu: 0.0.40
codegen_flags: <defaults>
</compile_context>

<pallas_src>
import numpy as np
import jax
import jax.numpy as jnp
from jax.experimental import pallas as pl
from jax.experimental.pallas import tpu as pltpu

LANE = 128
MXU_DTYPE = jnp.bfloat16   # MXU operand / carried-activation dtype; accumulation stays f32


def _round_up(x, m):
    return ((x + m - 1) // m) * m


def carried_width(c):
    # lane-dense when it does not blow up HBM traffic; otherwise keep narrow
    return _round_up(c, LANE) if c >= LANE else _round_up(c, 8)


def _vmem_cap_bytes():
    try:
        return int(pltpu.get_tpu_info().vmem_capacity_bytes * 3 // 4)
    except Exception:
        return 48 << 20          # safe for v7x (64 MiB physical VMEM)


def choose_vmem_limit(need_bytes):
    # <=12 MiB always fits the default scoped-VMEM limit on v5e/v6e/v7x
    if need_bytes <= (12 << 20):
        return None
    return int(min(_vmem_cap_bytes(), need_bytes + (8 << 20)))


# --------------------- flat, spatially pre-padded activation layout ---------------------
# Per image: [base zero rows][row0 (W px) + 2 zeros][row1 + 2 zeros]...[rowH-1 + 2 zeros][tail zeros]
# so the 9 taps of a pad-1 3x3 conv are contiguous row-slices at offset base+(di-1)*(W+2)+(dj-1).

def flat_geom(H, W):
    W2 = W + 2
    base = _round_up(W + 3, 8)                       # leading halo (aligned)
    L = _round_up(base + H * W2 + (W + 3), 8)        # trailing halo + alignment
    return W2, base, L


def pack_padded(y_nhwc, H, W):
    """(N, H, W, C) -> flat padded (N*L, C)."""
    N, _, _, C = y_nhwc.shape
    W2, base, L = flat_geom(H, W)
    y = jnp.pad(y_nhwc, ((0, 0), (0, 0), (0, 2), (0, 0)))          # 2 zero cols per row
    y = y.reshape(N, H * W2, C)
    y = jnp.pad(y, ((0, 0), (base, L - base - H * W2), (0, 0)))    # halo rows
    return y.reshape(N * L, C)


def make_col_mask(H, W):
    """1.0 for real pixels, 0.0 for the 2 pad/garbage columns of each row (shape (H*(W+2), 1))."""
    W2 = W + 2
    m = (np.arange(H * W2) % W2) < W
    return jnp.asarray(m.astype(np.float32)).reshape(-1, 1)


# ----------------------------- Pallas kernels -----------------------------

def matmul_bias_kernel(x_ref, w_ref, b_ref, o_ref):
    # y = x @ w + b   (expand 1x1conv+BN, linear head)
    acc = jnp.dot(x_ref[...], w_ref[...], preferred_element_type=jnp.float32)
    o_ref[...] = (acc + b_ref[...]).astype(o_ref.dtype)


def make_resblock_kernel(H, W, base, L, stride, has_proj):
    """Fused ResBlock: conv3x3(+BN folded)+ReLU -> conv1x1(+BN) -> +skip -> ReLU.
    Input block: one image in the flat padded layout (L, Ccin) bf16.
    Output: stride==1 -> next layer's flat padded layout (L, Ccout);
            stride==2 -> raw (H*(W+2), Ccout) stride-1 grid (wrapper subsamples)."""
    W2 = W + 2
    HW2 = H * W2

    def body(x_ref, w1_ref, b1_ref, w2_ref, wsk_ref, bo_ref, mask_ref, o_ref):
        x = x_ref[...]                                           # (L, Ccin) bf16
        # 9 conv taps = contiguous row slices of the flat padded image (no im2col in HBM)
        taps = []
        for di in range(3):
            for dj in range(3):
                s = base + (di - 1) * W2 + (dj - 1)
                taps.append(x[s:s + HW2, :])
        patches = jnp.concatenate(taps, axis=-1)                 # (HW2, 9*Ccin) bf16
        h = jnp.dot(patches, w1_ref[...], preferred_element_type=jnp.float32)
        h = jnp.maximum(h + b1_ref[...], 0.0).astype(MXU_DTYPE)  # BN folded, ReLU
        h = jnp.dot(h, w2_ref[...], preferred_element_type=jnp.float32)
        xs = x[base:base + HW2, :]                               # skip-branch rows
        if wsk_ref is not None:
            sk = jnp.dot(xs, wsk_ref[...], preferred_element_type=jnp.float32)
        else:
            sk = xs.astype(jnp.float32)                          # identity skip (exact add in f32)
        out = jnp.maximum(h + sk + bo_ref[...], 0.0) * mask_ref[...]   # zero pad/garbage cols
        out = out.astype(o_ref.dtype)
        if stride == 1:
            # emit directly in the next block's padded flat layout
            o_ref[...] = jnp.zeros_like(o_ref)                   # halo rows
            o_ref[pl.ds(base, HW2), :] = out
        else:
            o_ref[...] = out

    if has_proj:
        def kernel(x_ref, w1_ref, b1_ref, w2_ref, wsk_ref, bo_ref, mask_ref, o_ref):
            body(x_ref, w1_ref, b1_ref, w2_ref, wsk_ref, bo_ref, mask_ref, o_ref)
    else:
        def kernel(x_ref, w1_ref, b1_ref, w2_ref, bo_ref, mask_ref, o_ref):
            body(x_ref, w1_ref, b1_ref, w2_ref, None, bo_ref, mask_ref, o_ref)
    return kernel


# ----------------------------- pallas_call drivers -----------------------------

def run_rowwise(kernel, row_arrays, const_arrays, n_cols, *, out_dtype,
                min_tiles=4, tm_max=1024):
    """Row-tiled pallas_call: row_arrays [M, K_i] tiled over rows; const_arrays resident."""
    M = row_arrays[0].shape[0]
    out_isz = np.dtype(out_dtype).itemsize
    per_row = sum(a.shape[1] * a.dtype.itemsize for a in row_arrays) + n_cols * (out_isz + 4)
    const_b = sum(int(a.size) * a.dtype.itemsize for a in const_arrays)

    if M <= 8:
        tm = M                                           # single full-array block
    else:
        avail = max((12 << 20) - 2 * const_b, 1 << 20)   # double-buffered rows + consts
        tm = int(max(8, min(tm_max, (avail // (2 * per_row)) // 8 * 8)))
        # keep >= min_tiles grid steps: megacore sharding on v7x + DMA/compute overlap
        tm = min(tm, _round_up(int(pl.cdiv(M, min_tiles)), 8))
    n_tiles = int(pl.cdiv(M, tm))                        # partial last block; no row padding
    need = 2 * tm * per_row + 2 * const_b

    in_specs = ([pl.BlockSpec((tm, a.shape[1]), lambda i: (i, 0)) for a in row_arrays]
                + [pl.BlockSpec(a.shape, lambda i: (0, 0)) for a in const_arrays])

    return pl.pallas_call(
        kernel,
        out_shape=jax.ShapeDtypeStruct((M, n_cols), out_dtype),
        grid_spec=pltpu.PrefetchScalarGridSpec(
            num_scalar_prefetch=0,
            grid=(n_tiles,),
            in_specs=in_specs,
            out_specs=pl.BlockSpec((tm, n_cols), lambda i: (i, 0)),
        ),
        compiler_params=pltpu.CompilerParams(
            dimension_semantics=("parallel",),
            vmem_limit_bytes=choose_vmem_limit(need),
        ),
    )(*row_arrays, *const_arrays)


# ----------------------------- layer wrappers -----------------------------

def fold_bn(bn, eps=1e-5):
    gamma, beta, mean, var = bn
    scale = gamma / jnp.sqrt(var + eps)
    bias = beta - mean * scale
    return scale.reshape(1, -1), bias.reshape(1, -1)


def expand_apply(x_nhwc, w, bn):
    """1x1 conv (no bias) + BatchNorm (eval), no ReLU; output packed in the flat padded layout."""
    N, H, W, Cin = x_nhwc.shape
    Cout = w.shape[0]
    Cc = carried_width(Cout)
    s, b = fold_bn(bn)
    wm = jnp.pad(w[:, :, 0, 0].T * s, ((0, 0), (0, Cc - Cout))).astype(MXU_DTYPE)
    bp = jnp.pad(b, ((0, 0), (0, Cc - Cout))).astype(jnp.float32)
    rows = x_nhwc.reshape(-1, Cin).astype(MXU_DTYPE)
    y = run_rowwise(matmul_bias_kernel, [rows], [wm, bp], Cc, out_dtype=MXU_DTYPE)
    return pack_padded(y.reshape(N, H, W, Cc), H, W), H, W, Cout, Cc


def resblock_apply(flat_in, N, H, W, Cin, Ccin, p):
    Cout = p["w1"].shape[0]
    Ccout = carried_width(Cout)
    stride = 1 if Cin >= Cout else 2
    has_proj = not (stride == 1 and Cin == Cout)
    W2, base, L = flat_geom(H, W)
    HW2 = H * W2

    s1, b1 = fold_bn(p["bn1"])
    s2, b2 = fold_bn(p["bn2"])
    # fold BN scales into the weights (f32), pad to carried widths, cast to bf16
    w1 = jnp.transpose(p["w1"], (2, 3, 1, 0)).reshape(9, Cin, Cout) * s1   # (kh,kw,cin,cout)
    w1 = jnp.pad(w1, ((0, 0), (0, Ccin - Cin), (0, Ccout - Cout)))
    w1 = w1.reshape(9 * Ccin, Ccout).astype(MXU_DTYPE)
    b1p = jnp.pad(b1, ((0, 0), (0, Ccout - Cout))).astype(jnp.float32)
    w2 = jnp.pad(p["w2"][:, :, 0, 0].T * s2,
                 ((0, Ccout - Cout), (0, Ccout - Cout))).astype(MXU_DTYPE)

    consts = [w1, b1p, w2]
    if has_proj:
        ssk, bsk = fold_bn(p["bnsk"])
        wsk = jnp.pad(p["wsk"][:, :, 0, 0].T * ssk,
                      ((0, Ccin - Cin), (0, Ccout - Cout))).astype(MXU_DTYPE)
        consts.append(wsk)
        bo = b2 + bsk
    else:
        bo = b2
    consts.append(jnp.pad(bo, ((0, 0), (0, Ccout - Cout))).astype(jnp.float32))
    consts.append(make_col_mask(H, W))

    out_rows = L if stride == 1 else HW2
    kernel = make_resblock_kernel(H, W, base, L, stride, has_proj)

    const_b = sum(int(a.size) * a.dtype.itemsize for a in consts)
    # working set: double-buffered in/out blocks + consts + in-kernel f32/bf16 temporaries
    need = (2 * (L * Ccin + out_rows * Ccout) * 2 + 2 * const_b
            + HW2 * (9 * Ccin * 2 + 3 * Ccout * 4))

    out = pl.pallas_call(
        kernel,
        out_shape=jax.ShapeDtypeStruct((N * out_rows, Ccout), MXU_DTYPE),
        grid_spec=pltpu.PrefetchScalarGridSpec(
            num_scalar_prefetch=0,
            grid=(N,),                                        # per-image blocks
            in_specs=[pl.BlockSpec((L, Ccin), lambda n: (n, 0))]
                     + [pl.BlockSpec(c.shape, lambda n: (0, 0)) for c in consts],
            out_specs=pl.BlockSpec((out_rows, Ccout), lambda n: (n, 0)),
        ),
        compiler_params=pltpu.CompilerParams(
            dimension_semantics=("parallel",),
            vmem_limit_bytes=choose_vmem_limit(need),
        ),
    )(flat_in, *consts)

    if stride == 1:
        return out, H, W, Cout, Ccout
    # stride 2: subsample the stride-1 grid and repack for the next block (tiny XLA glue)
    Ho, Wo = (H + 1) // 2, (W + 1) // 2
    y = out.reshape(N, H, W2, Ccout)[:, ::2, ::2, :][:, :, :Wo, :]
    return pack_padded(y, Ho, Wo), Ho, Wo, Cout, Ccout


def linear_head(pooled, w, b, C, Cc):
    N = pooled.shape[0]
    O = w.shape[0]
    Op = _round_up(O, LANE)
    wk = jnp.pad(w.T, ((0, Cc - C), (0, Op - O))).astype(MXU_DTYPE)
    bp = jnp.pad(b.reshape(1, -1), ((0, 0), (0, Op - O))).astype(jnp.float32)
    out = run_rowwise(matmul_bias_kernel, [pooled.astype(MXU_DTYPE)], [wk, bp], Op,
                      out_dtype=jnp.float32)
    return out[:, :O]


def resnet_forward(x_nchw, params):
    x = jnp.transpose(x_nchw, (0, 2, 3, 1))                       # NHWC, channels on lanes
    N = x.shape[0]
    flat, H, W, C, Cc = expand_apply(x, params["expand_w"], params["expand_bn"])
    for blk in params["blocks"]:
        flat, H, W, C, Cc = resblock_apply(flat, N, H, W, C, Cc, blk)
    _, _, L = flat_geom(H, W)
    # global avg pool over the flat padded layout (halo/pad entries are zero)
    pooled = flat.reshape(N, L, Cc).astype(jnp.float32).sum(axis=1) / float(H * W)
    return linear_head(pooled, params["head_w"], params["head_b"], C, Cc)


# ----------------------------- pure-JAX reference -----------------------------

def ref_resnet_forward(x_nchw, params, eps=1e-5):
    dn = ("NCHW", "OIHW", "NCHW")

    def bn(h, p):
        g, b, m, v = p
        s = g / jnp.sqrt(v + eps)
        return h * s[None, :, None, None] + (b - m * s)[None, :, None, None]

    def conv(h, w, stride, pad):
        return jax.lax.conv_general_dilated(h, w, (stride, stride),
                                            [(pad, pad), (pad, pad)], dimension_numbers=dn)

    h = bn(conv(x_nchw, params["expand_w"], 1, 0), params["expand_bn"])
    for p in params["blocks"]:
        cout, cin = p["w1"].shape[0], p["w1"].shape[1]
        stride = 1 if cin >= cout else 2
        identity = (stride == 1 and cin == cout)
        m = jax.nn.relu(bn(conv(h, p["w1"], stride, 1), p["bn1"]))
        m = bn(conv(m, p["w2"], 1, 0), p["bn2"])
        sk = h if identity else bn(conv(h, p["wsk"], stride, 0), p["bnsk"])
        h = jax.nn.relu(m + sk)
    pooled = jnp.mean(h, axis=(2, 3))
    return pooled @ params["head_w"].T + params["head_b"]


# ----------------------------- params & main -----------------------------

def init_params(key, in_channels, block_features, num_classes=10):
    feats = [block_features[0]] + list(block_features)
    keys = iter(jax.random.split(key, 8 + 8 * (len(feats) - 1)))

    def bn_params(c):
        k1, k2, k3, k4 = jax.random.split(next(keys), 4)
        gamma = 1.0 + 0.1 * jax.random.normal(k1, (c,), jnp.float32)
        beta = 0.1 * jax.random.normal(k2, (c,), jnp.float32)
        mean = 0.1 * jax.random.normal(k3, (c,), jnp.float32)
        var = jnp.abs(1.0 + 0.1 * jax.random.normal(k4, (c,), jnp.float32))
        return (gamma, beta, mean, var)

    params = dict(
        expand_w=0.2 * jax.random.normal(next(keys), (feats[0], in_channels, 1, 1), jnp.float32),
        expand_bn=bn_params(feats[0]),
        blocks=[],
        head_w=0.2 * jax.random.normal(next(keys), (num_classes, feats[-1]), jnp.float32),
        head_b=0.05 * jax.random.normal(next(keys), (num_classes,), jnp.float32),
    )
    for i in range(len(feats) - 1):
        cin, cout = feats[i], feats[i + 1]
        blk = dict(
            w1=0.2 * jax.random.normal(next(keys), (cout, cin, 3, 3), jnp.float32),
            bn1=bn_params(cout),
            w2=0.2 * jax.random.normal(next(keys), (cout, cout, 1, 1), jnp.float32),
            bn2=bn_params(cout),
        )
        stride = 1 if cin >= cout else 2
        if not (stride == 1 and cin == cout):
            blk["wsk"] = 0.2 * jax.random.normal(next(keys), (cout, cin, 1, 1), jnp.float32)
            blk["bnsk"] = bn_params(cout)
        params["blocks"].append(blk)
    return params


if __name__ == "__main__":
    key = jax.random.PRNGKey(0)
    kx, kp = jax.random.split(key)

    N, Cin, H, W = 2, 3, 16, 16
    block_features = [8, 16]     # expand(3->8), ResBlock(8->8, identity), ResBlock(8->16, stride 2, proj)
    num_classes = 10

    x = 0.5 + 0.6 * jax.random.normal(kx, (N, Cin, H, W), jnp.float32)
    x = jnp.clip(x, 0.0, 1.0)    # mirrors the module-level `x = x.clamp(0, 1)`
    params = init_params(kp, Cin, block_features, num_classes)

    y = jax.jit(resnet_forward)(x, params)
    jax.block_until_ready(y)

    y_ref = ref_resnet_forward(x, params)
    assert y.shape == y_ref.shape == (N, num_classes)
    err = float(jnp.max(jnp.abs(y - y_ref)))
    # bf16 MXU operands / carried activations with f32 accumulation -> scale-aware tolerance
    tol = 5e-2 * max(1.0, float(jnp.max(jnp.abs(y_ref))))
    assert err < tol, f"max abs error {err} (tol {tol})"
    print("KERNEL_OK")
</pallas_src>

<mosaic_0001>
module attributes {stable_mosaic.version = 11 : i64} {
  func.func @matmul_bias_kernel(%arg0: i32, %arg1: memref<128x3xbf16, #tpu.memory_space<vmem>>, %arg2: memref<3x8xbf16, #tpu.memory_space<vmem>>, %arg3: memref<1x8xf32, #tpu.memory_space<vmem>>, %arg4: memref<128x8xbf16, #tpu.memory_space<vmem>>) attributes {dimension_semantics = [#tpu.dimension_semantics<parallel>], iteration_bounds = array<i64: 4>, scalar_prefetch = 0 : i64, scratch_operands = 0 : i64, tpu.core_type = #tpu.core_type<tc>, window_params = [{transform_indices = @transform_0, window_bounds = array<i64: 128, 3>}, {pipeline_mode = #tpu.pipeline_mode<synchronous>, transform_indices = @transform_1, window_bounds = array<i64: 3, 8>}, {pipeline_mode = #tpu.pipeline_mode<synchronous>, transform_indices = @transform_2, window_bounds = array<i64: 1, 8>}, {transform_indices = @transform_3, window_bounds = array<i64: 128, 8>}]} {
    %c0 = arith.constant 0 : index
    %c0_0 = arith.constant 0 : index
    %0 = vector.load %arg1[%c0, %c0_0] : memref<128x3xbf16, #tpu.memory_space<vmem>>, vector<128x3xbf16>
    %c0_1 = arith.constant 0 : index
    %c0_2 = arith.constant 0 : index
    %1 = vector.load %arg2[%c0_1, %c0_2] : memref<3x8xbf16, #tpu.memory_space<vmem>>, vector<3x8xbf16>
    %cst = arith.constant dense<0.000000e+00> : vector<128x8xf32>
    %2 = tpu.matmul %0, %1, %cst {dimension_numbers = #tpu.dot_dimension_numbers<[1], [0], [0], [1], [0, 0, 1, 1], [], []>} : vector<128x3xbf16>, vector<3x8xbf16>, vector<128x8xf32> -> vector<128x8xf32>
    %c0_3 = arith.constant 0 : index
    %c0_4 = arith.constant 0 : index
    %3 = vector.load %arg3[%c0_3, %c0_4] : memref<1x8xf32, #tpu.memory_space<vmem>>, vector<1x8xf32>
    %4 = vector.broadcast %3 : vector<1x8xf32> to vector<128x8xf32>
    %5 = arith.addf %2, %4 : vector<128x8xf32>
    %6 = arith.truncf %5 : vector<128x8xf32> to vector<128x8xbf16>
    %c0_5 = arith.constant 0 : index
    %c0_6 = arith.constant 0 : index
    %7 = vector.load %arg4[%c0_5, %c0_6] : memref<128x8xbf16, #tpu.memory_space<vmem>>, vector<128x8xbf16>
    tpu.vector_store %arg4[%c0_5, %c0_6], %6 {strides = array<i32>} : memref<128x8xbf16, #tpu.memory_space<vmem>>, vector<128x8xbf16>,
    return
  }
  func.func @transform_0(%arg0: i32) -> (i32, i32) {
    %c0_i32 = arith.constant 0 : i32
    %c0_i32_0 = arith.constant 0 : i32
    return %arg0, %c0_i32 : i32, i32
  }
  func.func @transform_1(%arg0: i32) -> (i32, i32) {
    %c0_i32 = arith.constant 0 : i32
    %c0_i32_0 = arith.constant 0 : i32
    %c0_i32_1 = arith.constant 0 : i32
    return %c0_i32, %c0_i32_0 : i32, i32
  }
  func.func @transform_2(%arg0: i32) -> (i32, i32) {
    %c0_i32 = arith.constant 0 : i32
    %c0_i32_0 = arith.constant 0 : i32
    %c0_i32_1 = arith.constant 0 : i32
    return %c0_i32, %c0_i32_0 : i32, i32
  }
  func.func @transform_3(%arg0: i32) -> (i32, i32) {
    %c0_i32 = arith.constant 0 : i32
    %c0_i32_0 = arith.constant 0 : i32
    return %arg0, %c0_i32 : i32, i32
  }
}

module attributes {stable_mosaic.version = 11 : i64} {
  func.func @kernel(%arg0: i32, %arg1: memref<336x8xbf16, #tpu.memory_space<vmem>>, %arg2: memref<72x8xbf16, #tpu.memory_space<vmem>>, %arg3: memref<1x8xf32, #tpu.memory_space<vmem>>, %arg4: memref<8x8xbf16, #tpu.memory_space<vmem>>, %arg5: memref<1x8xf32, #tpu.memory_space<vmem>>, %arg6: memref<288x1xf32, #tpu.memory_space<vmem>>, %arg7: memref<336x8xbf16, #tpu.memory_space<vmem>>) attributes {dimension_semantics = [#tpu.dimension_semantics<parallel>], iteration_bounds = array<i64: 2>, scalar_prefetch = 0 : i64, scratch_operands = 0 : i64, tpu.core_type = #tpu.core_type<tc>, window_params = [{transform_indices = @transform_0, window_bounds = array<i64: 336, 8>}, {pipeline_mode = #tpu.pipeline_mode<synchronous>, transform_indices = @transform_1, window_bounds = array<i64: 72, 8>}, {pipeline_mode = #tpu.pipeline_mode<synchronous>, transform_indices = @transform_2, window_bounds = array<i64: 1, 8>}, {pipeline_mode = #tpu.pipeline_mode<synchronous>, transform_indices = @transform_3, window_bounds = array<i64: 8, 8>}, {pipeline_mode = #tpu.pipeline_mode<synchronous>, transform_indices = @transform_4, window_bounds = array<i64: 1, 8>}, {pipeline_mode = #tpu.pipeline_mode<synchronous>, transform_indices = @transform_5, window_bounds = array<i64: 288, 1>}, {transform_indices = @transform_6, window_bounds = array<i64: 336, 8>}]} {
    %c0 = arith.constant 0 : index
    %c0_0 = arith.constant 0 : index
    %0 = vector.load %arg1[%c0, %c0_0] : memref<336x8xbf16, #tpu.memory_space<vmem>>, vector<336x8xbf16>
    %1 = vector.extract_strided_slice %0 {offsets = [5, 0], sizes = [288, 8], strides = [1, 1]} : vector<336x8xbf16> to vector<288x8xbf16>
    %2 = vector.extract_strided_slice %0 {offsets = [6, 0], sizes = [288, 8], strides = [1, 1]} : vector<336x8xbf16> to vector<288x8xbf16>
    %3 = vector.extract_strided_slice %0 {offsets = [7, 0], sizes = [288, 8], strides = [1, 1]} : vector<336x8xbf16> to vector<288x8xbf16>
    %4 = vector.extract_strided_slice %0 {offsets = [23, 0], sizes = [288, 8], strides = [1, 1]} : vector<336x8xbf16> to vector<288x8xbf16>
    %5 = vector.extract_strided_slice %0 {offsets = [24, 0], sizes = [288, 8], strides = [1, 1]} : vector<336x8xbf16> to vector<288x8xbf16>
    %6 = vector.extract_strided_slice %0 {offsets = [25, 0], sizes = [288, 8], strides = [1, 1]} : vector<336x8xbf16> to vector<288x8xbf16>
    %7 = vector.extract_strided_slice %0 {offsets = [41, 0], sizes = [288, 8], strides = [1, 1]} : vector<336x8xbf16> to vector<288x8xbf16>
    %8 = vector.extract_strided_slice %0 {offsets = [42, 0], sizes = [288, 8], strides = [1, 1]} : vector<336x8xbf16> to vector<288x8xbf16>
    %9 = vector.extract_strided_slice %0 {offsets = [43, 0], sizes = [288, 8], strides = [1, 1]} : vector<336x8xbf16> to vector<288x8xbf16>
    %10 = tpu.concatenate %1, %2, %3, %4, %5, %6, %7, %8, %9 in 1 : vector<288x8xbf16>, vector<288x8xbf16>, vector<288x8xbf16>, vector<288x8xbf16>, vector<288x8xbf16>, vector<288x8xbf16>, vector<288x8xbf16>, vector<288x8xbf16>, vector<288x8xbf16> -> vector<288x72xbf16>
    %c0_1 = arith.constant 0 : index
    %c0_2 = arith.constant 0 : index
    %11 = vector.load %arg2[%c0_1, %c0_2] : memref<72x8xbf16, #tpu.memory_space<vmem>>, vector<72x8xbf16>
    %cst = arith.constant dense<0.000000e+00> : vector<288x8xf32>
    %12 = tpu.matmul %10, %11, %cst {dimension_numbers = #tpu.dot_dimension_numbers<[1], [0], [0], [1], [0, 0, 1, 1], [], []>} : vector<288x72xbf16>, vector<72x8xbf16>, vector<288x8xf32> -> vector<288x8xf32>
    %c0_3 = arith.constant 0 : index
    %c0_4 = arith.constant 0 : index
    %13 = vector.load %arg3[%c0_3, %c0_4] : memref<1x8xf32, #tpu.memory_space<vmem>>, vector<1x8xf32>
    %14 = vector.broadcast %13 : vector<1x8xf32> to vector<288x8xf32>
    %15 = arith.addf %12, %14 : vector<288x8xf32>
    %cst_5 = arith.constant 0.000000e+00 : f32
    %16 = vector.broadcast %cst_5 : f32 to vector<288x8xf32>
    %17 = arith.maximumf %15, %16 : vector<288x8xf32>
    %18 = arith.truncf %17 : vector<288x8xf32> to vector<288x8xbf16>
    %c0_6 = arith.constant 0 : index
    %c0_7 = arith.constant 0 : index
    %19 = vector.load %arg4[%c0_6, %c0_7] : memref<8x8xbf16, #tpu.memory_space<vmem>>, vector<8x8xbf16>
    %cst_8 = arith.constant dense<0.000000e+00> : vector<288x8xf32>
    %20 = tpu.matmul %18, %19, %cst_8 {dimension_numbers = #tpu.dot_dimension_numbers<[1], [0], [0], [1], [0, 0, 1, 1], [], []>} : vector<288x8xbf16>, vector<8x8xbf16>, vector<288x8xf32> -> vector<288x8xf32>
    %21 = vector.extract_strided_slice %0 {offsets = [24, 0], sizes = [288, 8], strides = [1, 1]} : vector<336x8xbf16> to vector<288x8xbf16>
    %22 = arith.extf %21 : vector<288x8xbf16> to vector<288x8xf32>
    %23 = arith.addf %20, %22 : vector<288x8xf32>
    %c0_9 = arith.constant 0 : index
    %c0_10 = arith.constant 0 : index
    %24 = vector.load %arg5[%c0_9, %c0_10] : memref<1x8xf32, #tpu.memory_space<vmem>>, vector<1x8xf32>
    %25 = vector.broadcast %24 : vector<1x8xf32> to vector<288x8xf32>
    %26 = arith.addf %23, %25 : vector<288x8xf32>
    %cst_11 = arith.constant 0.000000e+00 : f32
    %27 = vector.broadcast %cst_11 : f32 to vector<288x8xf32>
    %28 = arith.maximumf %26, %27 : vector<288x8xf32>
    %c0_12 = arith.constant 0 : index
    %c0_13 = arith.constant 0 : index
    %29 = vector.load %arg6[%c0_12, %c0_13] : memref<288x1xf32, #tpu.memory_space<vmem>>, vector<288x1xf32>
    %30 = vector.broadcast %29 : vector<288x1xf32> to vector<288x8xf32>
    %31 = arith.mulf %28, %30 : vector<288x8xf32>
    %32 = arith.truncf %31 : vector<288x8xf32> to vector<288x8xbf16>
    %cst_14 = arith.constant 0.000000e+00 : bf16
    %33 = vector.broadcast %cst_14 : bf16 to vector<336x8xbf16>
    %c0_15 = arith.constant 0 : index
    %c0_16 = arith.constant 0 : index
    %34 = vector.load %arg7[%c0_15, %c0_16] : memref<336x8xbf16, #tpu.memory_space<vmem>>, vector<336x8xbf16>
    tpu.vector_store %arg7[%c0_15, %c0_16], %33 {strides = array<i32>} : memref<336x8xbf16, #tpu.memory_space<vmem>>, vector<336x8xbf16>,
    %c24 = arith.constant 24 : index
    %c0_17 = arith.constant 0 : index
    %35 = vector.load %arg7[%c24, %c0_17] : memref<336x8xbf16, #tpu.memory_space<vmem>>, vector<288x8xbf16>
    tpu.vector_store %arg7[%c24, %c0_17], %32 {strides = array<i32>} : memref<336x8xbf16, #tpu.memory_space<vmem>>, vector<288x8xbf16>,
    return
  }
  func.func @transform_0(%arg0: i32) -> (i32, i32) {
    %c0_i32 = arith.constant 0 : i32
    %c0_i32_0 = arith.constant 0 : i32
    return %arg0, %c0_i32 : i32, i32
  }
  func.func @transform_1(%arg0: i32) -> (i32, i32) {
    %c0_i32 = arith.constant 0 : i32
    %c0_i32_0 = arith.constant 0 : i32
    %c0_i32_1 = arith.constant 0 : i32
    return %c0_i32, %c0_i32_0 : i32, i32
  }
  func.func @transform_2(%arg0: i32) -> (i32, i32) {
    %c0_i32 = arith.constant 0 : i32
    %c0_i32_0 = arith.constant 0 : i32
    %c0_i32_1 = arith.constant 0 : i32
    return %c0_i32, %c0_i32_0 : i32, i32
  }
  func.func @transform_3(%arg0: i32) -> (i32, i32) {
    %c0_i32 = arith.constant 0 : i32
    %c0_i32_0 = arith.constant 0 : i32
    %c0_i32_1 = arith.constant 0 : i32
    return %c0_i32, %c0_i32_0 : i32, i32
  }
  func.func @transform_4(%arg0: i32) -> (i32, i32) {
    %c0_i32 = arith.constant 0 : i32
    %c0_i32_0 = arith.constant 0 : i32
    %c0_i32_1 = arith.constant 0 : i32
    return %c0_i32, %c0_i32_0 : i32, i32
  }
  func.func @transform_5(%arg0: i32) -> (i32, i32) {
    %c0_i32 = arith.constant 0 : i32
    %c0_i32_0 = arith.constant 0 : i32
    %c0_i32_1 = arith.constant 0 : i32
    return %c0_i32, %c0_i32_0 : i32, i32
  }
  func.func @transform_6(%arg0: i32) -> (i32, i32) {
    %c0_i32 = arith.constant 0 : i32
    %c0_i32_0 = arith.constant 0 : i32
    return %arg0, %c0_i32 : i32, i32
  }
}

module attributes {stable_mosaic.version = 11 : i64} {
  func.func @kernel(%arg0: i32, %arg1: memref<336x8xbf16, #tpu.memory_space<vmem>>, %arg2: memref<72x16xbf16, #tpu.memory_space<vmem>>, %arg3: memref<1x16xf32, #tpu.memory_space<vmem>>, %arg4: memref<16x16xbf16, #tpu.memory_space<vmem>>, %arg5: memref<8x16xbf16, #tpu.memory_space<vmem>>, %arg6: memref<1x16xf32, #tpu.memory_space<vmem>>, %arg7: memref<288x1xf32, #tpu.memory_space<vmem>>, %arg8: memref<288x16xbf16, #tpu.memory_space<vmem>>) attributes {dimension_semantics = [#tpu.dimension_semantics<parallel>], iteration_bounds = array<i64: 2>, scalar_prefetch = 0 : i64, scratch_operands = 0 : i64, tpu.core_type = #tpu.core_type<tc>, window_params = [{transform_indices = @transform_0, window_bounds = array<i64: 336, 8>}, {pipeline_mode = #tpu.pipeline_mode<synchronous>, transform_indices = @transform_1, window_bounds = array<i64: 72, 16>}, {pipeline_mode = #tpu.pipeline_mode<synchronous>, transform_indices = @transform_2, window_bounds = array<i64: 1, 16>}, {pipeline_mode = #tpu.pipeline_mode<synchronous>, transform_indices = @transform_3, window_bounds = array<i64: 16, 16>}, {pipeline_mode = #tpu.pipeline_mode<synchronous>, transform_indices = @transform_4, window_bounds = array<i64: 8, 16>}, {pipeline_mode = #tpu.pipeline_mode<synchronous>, transform_indices = @transform_5, window_bounds = array<i64: 1, 16>}, {pipeline_mode = #tpu.pipeline_mode<synchronous>, transform_indices = @transform_6, window_bounds = array<i64: 288, 1>}, {transform_indices = @transform_7, window_bounds = array<i64: 288, 16>}]} {
    %c0 = arith.constant 0 : index
    %c0_0 = arith.constant 0 : index
    %0 = vector.load %arg1[%c0, %c0_0] : memref<336x8xbf16, #tpu.memory_space<vmem>>, vector<336x8xbf16>
    %1 = vector.extract_strided_slice %0 {offsets = [5, 0], sizes = [288, 8], strides = [1, 1]} : vector<336x8xbf16> to vector<288x8xbf16>
    %2 = vector.extract_strided_slice %0 {offsets = [6, 0], sizes = [288, 8], strides = [1, 1]} : vector<336x8xbf16> to vector<288x8xbf16>
    %3 = vector.extract_strided_slice %0 {offsets = [7, 0], sizes = [288, 8], strides = [1, 1]} : vector<336x8xbf16> to vector<288x8xbf16>
    %4 = vector.extract_strided_slice %0 {offsets = [23, 0], sizes = [288, 8], strides = [1, 1]} : vector<336x8xbf16> to vector<288x8xbf16>
    %5 = vector.extract_strided_slice %0 {offsets = [24, 0], sizes = [288, 8], strides = [1, 1]} : vector<336x8xbf16> to vector<288x8xbf16>
    %6 = vector.extract_strided_slice %0 {offsets = [25, 0], sizes = [288, 8], strides = [1, 1]} : vector<336x8xbf16> to vector<288x8xbf16>
    %7 = vector.extract_strided_slice %0 {offsets = [41, 0], sizes = [288, 8], strides = [1, 1]} : vector<336x8xbf16> to vector<288x8xbf16>
    %8 = vector.extract_strided_slice %0 {offsets = [42, 0], sizes = [288, 8], strides = [1, 1]} : vector<336x8xbf16> to vector<288x8xbf16>
    %9 = vector.extract_strided_slice %0 {offsets = [43, 0], sizes = [288, 8], strides = [1, 1]} : vector<336x8xbf16> to vector<288x8xbf16>
    %10 = tpu.concatenate %1, %2, %3, %4, %5, %6, %7, %8, %9 in 1 : vector<288x8xbf16>, vector<288x8xbf16>, vector<288x8xbf16>, vector<288x8xbf16>, vector<288x8xbf16>, vector<288x8xbf16>, vector<288x8xbf16>, vector<288x8xbf16>, vector<288x8xbf16> -> vector<288x72xbf16>
    %c0_1 = arith.constant 0 : index
    %c0_2 = arith.constant 0 : index
    %11 = vector.load %arg2[%c0_1, %c0_2] : memref<72x16xbf16, #tpu.memory_space<vmem>>, vector<72x16xbf16>
    %cst = arith.constant dense<0.000000e+00> : vector<288x16xf32>
    %12 = tpu.matmul %10, %11, %cst {dimension_numbers = #tpu.dot_dimension_numbers<[1], [0], [0], [1], [0, 0, 1, 1], [], []>} : vector<288x72xbf16>, vector<72x16xbf16>, vector<288x16xf32> -> vector<288x16xf32>
    %c0_3 = arith.constant 0 : index
    %c0_4 = arith.constant 0 : index
    %13 = vector.load %arg3[%c0_3, %c0_4] : memref<1x16xf32, #tpu.memory_space<vmem>>, vector<1x16xf32>
    %14 = vector.broadcast %13 : vector<1x16xf32> to vector<288x16xf32>
    %15 = arith.addf %12, %14 : vector<288x16xf32>
    %cst_5 = arith.constant 0.000000e+00 : f32
    %16 = vector.broadcast %cst_5 : f32 to vector<288x16xf32>
    %17 = arith.maximumf %15, %16 : vector<288x16xf32>
    %18 = arith.truncf %17 : vector<288x16xf32> to vector<288x16xbf16>
    %c0_6 = arith.constant 0 : index
    %c0_7 = arith.constant 0 : index
    %19 = vector.load %arg4[%c0_6, %c0_7] : memref<16x16xbf16, #tpu.memory_space<vmem>>, vector<16x16xbf16>
    %cst_8 = arith.constant dense<0.000000e+00> : vector<288x16xf32>
    %20 = tpu.matmul %18, %19, %cst_8 {dimension_numbers = #tpu.dot_dimension_numbers<[1], [0], [0], [1], [0, 0, 1, 1], [], []>} : vector<288x16xbf16>, vector<16x16xbf16>, vector<288x16xf32> -> vector<288x16xf32>
    %21 = vector.extract_strided_slice %0 {offsets = [24, 0], sizes = [288, 8], strides = [1, 1]} : vector<336x8xbf16> to vector<288x8xbf16>
    %c0_9 = arith.constant 0 : index
    %c0_10 = arith.constant 0 : index
    %22 = vector.load %arg5[%c0_9, %c0_10] : memref<8x16xbf16, #tpu.memory_space<vmem>>, vector<8x16xbf16>
    %cst_11 = arith.constant dense<0.000000e+00> : vector<288x16xf32>
    %23 = tpu.matmul %21, %22, %cst_11 {dimension_numbers = #tpu.dot_dimension_numbers<[1], [0], [0], [1], [0, 0, 1, 1], [], []>} : vector<288x8xbf16>, vector<8x16xbf16>, vector<288x16xf32> -> vector<288x16xf32>
    %24 = arith.addf %20, %23 : vector<288x16xf32>
    %c0_12 = arith.constant 0 : index
    %c0_13 = arith.constant 0 : index
    %25 = vector.load %arg6[%c0_12, %c0_13] : memref<1x16xf32, #tpu.memory_space<vmem>>, vector<1x16xf32>
    %26 = vector.broadcast %25 : vector<1x16xf32> to vector<288x16xf32>
    %27 = arith.addf %24, %26 : vector<288x16xf32>
    %cst_14 = arith.constant 0.000000e+00 : f32
    %28 = vector.broadcast %cst_14 : f32 to vector<288x16xf32>
    %29 = arith.maximumf %27, %28 : vector<288x16xf32>
    %c0_15 = arith.constant 0 : index
    %c0_16 = arith.constant 0 : index
    %30 = vector.load %arg7[%c0_15, %c0_16] : memref<288x1xf32, #tpu.memory_space<vmem>>, vector<288x1xf32>
    %31 = vector.broadcast %30 : vector<288x1xf32> to vector<288x16xf32>
    %32 = arith.mulf %29, %31 : vector<288x16xf32>
    %33 = arith.truncf %32 : vector<288x16xf32> to vector<288x16xbf16>
    %c0_17 = arith.constant 0 : index
    %c0_18 = arith.constant 0 : index
    %34 = vector.load %arg8[%c0_17, %c0_18] : memref<288x16xbf16, #tpu.memory_space<vmem>>, vector<288x16xbf16>
    tpu.vector_store %arg8[%c0_17, %c0_18], %33 {strides = array<i32>} : memref<288x16xbf16, #tpu.memory_space<vmem>>, vector<288x16xbf16>,
    return
  }
  func.func @transform_0(%arg0: i32) -> (i32, i32) {
    %c0_i32 = arith.constant 0 : i32
    %c0_i32_0 = arith.constant 0 : i32
    return %arg0, %c0_i32 : i32, i32
  }
  func.func @transform_1(%arg0: i32) -> (i32, i32) {
    %c0_i32 = arith.constant 0 : i32
    %c0_i32_0 = arith.constant 0 : i32
    %c0_i32_1 = arith.constant 0 : i32
    return %c0_i32, %c0_i32_0 : i32, i32
  }
  func.func @transform_2(%arg0: i32) -> (i32, i32) {
    %c0_i32 = arith.constant 0 : i32
    %c0_i32_0 = arith.constant 0 : i32
    %c0_i32_1 = arith.constant 0 : i32
    return %c0_i32, %c0_i32_0 : i32, i32
  }
  func.func @transform_3(%arg0: i32) -> (i32, i32) {
    %c0_i32 = arith.constant 0 : i32
    %c0_i32_0 = arith.constant 0 : i32
    %c0_i32_1 = arith.constant 0 : i32
    return %c0_i32, %c0_i32_0 : i32, i32
  }
  func.func @transform_4(%arg0: i32) -> (i32, i32) {
    %c0_i32 = arith.constant 0 : i32
    %c0_i32_0 = arith.constant 0 : i32
    %c0_i32_1 = arith.constant 0 : i32
    return %c0_i32, %c0_i32_0 : i32, i32
  }
  func.func @transform_5(%arg0: i32) -> (i32, i32) {
    %c0_i32 = arith.constant 0 : i32
    %c0_i32_0 = arith.constant 0 : i32
    %c0_i32_1 = arith.constant 0 : i32
    return %c0_i32, %c0_i32_0 : i32, i32
  }
  func.func @transform_6(%arg0: i32) -> (i32, i32) {
    %c0_i32 = arith.constant 0 : i32
    %c0_i32_0 = arith.constant 0 : i32
    %c0_i32_1 = arith.constant 0 : i32
    return %c0_i32, %c0_i32_0 : i32, i32
  }
  func.func @transform_7(%arg0: i32) -> (i32, i32) {
    %c0_i32 = arith.constant 0 : i32
    %c0_i32_0 = arith.constant 0 : i32
    return %arg0, %c0_i32 : i32, i32
  }
}

module attributes {stable_mosaic.version = 11 : i64} {
  func.func @matmul_bias_kernel(%arg0: i32, %arg1: memref<2x16xbf16, #tpu.memory_space<vmem>>, %arg2: memref<16x128xbf16, #tpu.memory_space<vmem>>, %arg3: memref<1x128xf32, #tpu.memory_space<vmem>>, %arg4: memref<2x128xf32, #tpu.memory_space<vmem>>) attributes {dimension_semantics = [#tpu.dimension_semantics<parallel>], iteration_bounds = array<i64: 1>, scalar_prefetch = 0 : i64, scratch_operands = 0 : i64, tpu.core_type = #tpu.core_type<tc>, window_params = [{transform_indices = @transform_0, window_bounds = array<i64: 2, 16>}, {pipeline_mode = #tpu.pipeline_mode<synchronous>, transform_indices = @transform_1, window_bounds = array<i64: 16, 128>}, {pipeline_mode = #tpu.pipeline_mode<synchronous>, transform_indices = @transform_2, window_bounds = array<i64: 1, 128>}, {transform_indices = @transform_3, window_bounds = array<i64: 2, 128>}]} {
    %c0 = arith.constant 0 : index
    %c0_0 = arith.constant 0 : index
    %0 = vector.load %arg1[%c0, %c0_0] : memref<2x16xbf16, #tpu.memory_space<vmem>>, vector<2x16xbf16>
    %c0_1 = arith.constant 0 : index
    %c0_2 = arith.constant 0 : index
    %1 = vector.load %arg2[%c0_1, %c0_2] : memref<16x128xbf16, #tpu.memory_space<vmem>>, vector<16x128xbf16>
    %cst = arith.constant dense<0.000000e+00> : vector<2x128xf32>
    %2 = tpu.matmul %0, %1, %cst {dimension_numbers = #tpu.dot_dimension_numbers<[1], [0], [0], [1], [0, 0, 1, 1], [], []>} : vector<2x16xbf16>, vector<16x128xbf16>, vector<2x128xf32> -> vector<2x128xf32>
    %c0_3 = arith.constant 0 : index
    %c0_4 = arith.constant 0 : index
    %3 = vector.load %arg3[%c0_3, %c0_4] : memref<1x128xf32, #tpu.memory_space<vmem>>, vector<1x128xf32>
    %4 = vector.broadcast %3 : vector<1x128xf32> to vector<2x128xf32>
    %5 = arith.addf %2, %4 : vector<2x128xf32>
    %c0_5 = arith.constant 0 : index
    %c0_6 = arith.constant 0 : index
    %6 = vector.load %arg4[%c0_5, %c0_6] : memref<2x128xf32, #tpu.memory_space<vmem>>, vector<2x128xf32>
    tpu.vector_store %arg4[%c0_5, %c0_6], %5 {strides = array<i32>} : memref<2x128xf32, #tpu.memory_space<vmem>>, vector<2x128xf32>,
    return
  }
  func.func @transform_0(%arg0: i32) -> (i32, i32) {
    %c0_i32 = arith.constant 0 : i32
    %c0_i32_0 = arith.constant 0 : i32
    return %arg0, %c0_i32 : i32, i32
  }
  func.func @transform_1(%arg0: i32) -> (i32, i32) {
    %c0_i32 = arith.constant 0 : i32
    %c0_i32_0 = arith.constant 0 : i32
    %c0_i32_1 = arith.constant 0 : i32
    return %c0_i32, %c0_i32_0 : i32, i32
  }
  func.func @transform_2(%arg0: i32) -> (i32, i32) {
    %c0_i32 = arith.constant 0 : i32
    %c0_i32_0 = arith.constant 0 : i32
    %c0_i32_1 = arith.constant 0 : i32
    return %c0_i32, %c0_i32_0 : i32, i32
  }
  func.func @transform_3(%arg0: i32) -> (i32, i32) {
    %c0_i32 = arith.constant 0 : i32
    %c0_i32_0 = arith.constant 0 : i32
    return %arg0, %c0_i32 : i32, i32
  }
}

</mosaic_0001>

<llo_original>
// kernel: resnet_forward.4
$region0: #{resnet_forward.4}
  #allocation0 [shape = 'u32[]', space=smem, size = 0x4, offset = 0x4, fixed_abs, tag = 'smem constant byte address 0x4 - core index']
  #allocation1 [shape = 'u32[144,128]{1,0:T(1,128)}', space=vmem, size = 0x12000, scoped, tag = 'internal scratch']
  %s0 = inlined_call_operand.vmem [shape: bf16[512,3], index: 0, kind: input, shape index: {}]
  %s1 = inlined_call_operand.vmem [shape: bf16[3,8], index: 1, kind: input, shape index: {}]
  %s2 = inlined_call_operand.vmem [shape: f32[1,8], index: 2, kind: input, shape index: {}]
  %s3 = inlined_call_operand.vmem [shape: bf16[512,8], index: 3, kind: output, shape index: {}]
  %s4 = sld [smem:[#allocation0]]
  $region45: #{resnet_forward.4} parent=0
    _
  %s6 = ssub.s32 1, %s4
  %s7 = scalar_select 0, %s6, %s4
  loop: start=0, step=1, limit=6
  $region2: #{resnet_forward.4} parent=0 // loop_pre_header
    _
  $region3: #{resnet_forward.4} parent=0 // loop_header
    %s9 = sphi 0, %s13
    %p10 = scmp.ge.s32.totalorder %s9, 6
    %s19 = sphi 0, %s21
    %s22 = sphi 0, %s19
    %s23 = sphi 0, %s22
    %s39 = sphi 0, %s23
    %s43 = sphi 0, %s43
    %s45 = sphi 0, %s43
    %s46 = sphi 0, %s45
    %s60 = sphi 0, %s46
    %s64 = sphi 0, %s64
    %s66 = sphi 0, %s64
    %s67 = sphi 0, %s66
    %s81 = sphi 0, %s67
    %s87 = sphi 0, %s89
    %s90 = sphi 0, %s87
    %s91 = sphi 0, %s90
    %s107 = sphi 0, %s91
  $region4: #{resnet_forward.4} parent=0 // loop_header_branch
    %12 = sbr.rel (%p10) target = $region8
  $region5: #{resnet_forward.4} parent=0 // loop_body
    %s14 = ssub.s32 %s9, 1
    %s15 = ssub.s32 %s9, 2
    %s16 = sadd.s32 %s9, 1
    %s17 = ssub.s32 %s9, %s16
    %p18 = scmp.eq.s32.totalorder %s17, 0
    %s20 = sadd.s32 %s19, 1
    %s21 = scalar_select %p18, %s19, %s20
    %p24 = pneg %p18
    %p25 = scmp.eq.s32.totalorder %s9, 3
    %p26 = por %p24, %p25
    %p27 = scmp.ne.s32.totalorder %s19, %s22
    %p28 = scmp.eq.s32.totalorder %s9, 0
    %p29 = por %p27, %p28
    %p30 = scmp.ne.s32.totalorder %s19, %s22
    %p31 = scmp.eq.s32.totalorder %s14, 3
    %p32 = por %p30, %p31
    %p33 = scmp.ne.s32.totalorder %s22, %s23
    %p34 = scmp.eq.s32.totalorder %s14, 0
    %p35 = por %p33, %p34
    %p36 = scmp.ne.s32.totalorder %s22, %s23
    %p37 = scmp.eq.s32.totalorder %s15, 3
    %p38 = por %p36, %p37
    %p40 = scmp.ne.s32.totalorder %s23, %s39
    %p41 = scmp.eq.s32.totalorder %s15, 0
    %p42 = por %p40, %p41
    %s44 = sadd.s32 %s43, 1
    %p47 = scmp.eq.s32.totalorder %s9, 3
    %p48 = scmp.ne.s32.totalorder %s43, %s45
    %p49 = scmp.eq.s32.totalorder %s9, 0
    %p50 = por %p48, %p49
    %p51 = scmp.ne.s32.totalorder %s43, %s45
    %p52 = scmp.eq.s32.totalorder %s14, 3
    %p53 = por %p51, %p52
    %p54 = scmp.ne.s32.totalorder %s45, %s46
    %p55 = scmp.eq.s32.totalorder %s14, 0
    %p56 = por %p54, %p55
    %p57 = scmp.ne.s32.totalorder %s45, %s46
    %p58 = scmp.eq.s32.totalorder %s15, 3
    %p59 = por %p57, %p58
    %p61 = scmp.ne.s32.totalorder %s46, %s60
    %p62 = scmp.eq.s32.totalorder %s15, 0
    %p63 = por %p61, %p62
    %s65 = sadd.s32 %s64, 1
    %p68 = scmp.eq.s32.totalorder %s9, 3
    %p69 = scmp.ne.s32.totalorder %s64, %s66
    %p70 = scmp.eq.s32.totalorder %s9, 0
    %p71 = por %p69, %p70
    %p72 = scmp.ne.s32.totalorder %s64, %s66
    %p73 = scmp.eq.s32.totalorder %s14, 3
    %p74 = por %p72, %p73
    %p75 = scmp.ne.s32.totalorder %s66, %s67
    %p76 = scmp.eq.s32.totalorder %s14, 0
    %p77 = por %p75, %p76
    %p78 = scmp.ne.s32.totalorder %s66, %s67
    %p79 = scmp.eq.s32.totalorder %s15, 3
    %p80 = por %p78, %p79
    %p82 = scmp.ne.s32.totalorder %s67, %s81
    %p83 = scmp.eq.s32.totalorder %s15, 0
    %p84 = por %p82, %p83
    %s85 = ssub.s32 %s9, %s16
    %p86 = scmp.eq.s32.totalorder %s85, 0
    %s88 = sadd.s32 %s87, 1
    %s89 = scalar_select %p86, %s87, %s88
    %p92 = pneg %p86
    %p93 = scmp.eq.s32.totalorder %s9, 3
    %p94 = por %p92, %p93
    %p95 = scmp.ne.s32.totalorder %s87, %s90
    %p96 = scmp.eq.s32.totalorder %s9, 0
    %p97 = por %p95, %p96
    %p98 = scmp.ne.s32.totalorder %s87, %s90
    %p99 = scmp.eq.s32.totalorder %s14, 3
    %p100 = por %p98, %p99
    %p101 = scmp.ne.s32.totalorder %s90, %s91
    %p102 = scmp.eq.s32.totalorder %s14, 0
    %p103 = por %p101, %p102
    %p104 = scmp.ne.s32.totalorder %s90, %s91
    %p105 = scmp.eq.s32.totalorder %s15, 3
    %p106 = por %p104, %p105
    %p108 = scmp.ne.s32.totalorder %s91, %s107
    %p109 = scmp.eq.s32.totalorder %s15, 0
    %p110 = por %p108, %p109
    %p111 = scmp.le.s32.totalorder 1, %s9
    %p112 = scmp.lt.s32.totalorder %s9, 5
    %p113 = pnand %p111, %p112
    %p114 = pneg %p113
    // Predicated region
    $region9: #{resnet_forward.4} parent=5 // pred_check
      _
    $region10: #{resnet_forward.4} parent=5 // pred_check_branch
      %116 = sbr.rel (%p113) target = $region12
    $region11: #{resnet_forward.4} parent=5 // pred_region
      %s117 = ssub.s32 %s9, 1
      // Predicated region
      $region13: #{resnet_forward.4} parent=11 // pred_check
        %p118 = pneg %p56
      $region14: #{resnet_forward.4} parent=11 // pred_check_branch
        %120 = sbr.rel (%p118) target = $region16
      $region15: #{resnet_forward.4} parent=11 // pred_region
        _
      $region16: #{resnet_forward.4} parent=11 // pred_fallthru
        _
      // Predicated region
      $region17: #{resnet_forward.4} parent=11 // pred_check
        %p121 = pneg %p77
      $region18: #{resnet_forward.4} parent=11 // pred_check_branch
        %123 = sbr.rel (%p121) target = $region20
      $region19: #{resnet_forward.4} parent=11 // pred_region
        _
      $region20: #{resnet_forward.4} parent=11 // pred_fallthru
        _
    $region12: #{resnet_forward.4} parent=5 // pred_fallthru
      _
    %p124 = scmp.lt.s32.totalorder %s9, 4
    // Predicated region
    $region21: #{resnet_forward.4} parent=5 // pred_check
      %p125 = pneg %p124
    $region22: #{resnet_forward.4} parent=5 // pred_check_branch
      %127 = sbr.rel (%p125) target = $region24
    $region23: #{resnet_forward.4} parent=5 // pred_region
      // Predicated region
      $region25: #{resnet_forward.4} parent=23 // pred_check
        %p128 = pneg %p29
      $region26: #{resnet_forward.4} parent=23 // pred_check_branch
        %130 = sbr.rel (%p128) target = $region28
      $region27: #{resnet_forward.4} parent=23 // pred_region
        %s131 = smul.u32 16, %s9
        %p132 = scmp.lt.s32.totalorder %s131, 63
        %s133 = scalar_select %p132, %s131, 63
        %s134 = smul.addr %s133, 4
        %s135 = scalar_lea.vmem %s0, %s134
        %s136 = smul.u32 16, %s9
      $region28: #{resnet_forward.4} parent=23 // pred_fallthru
        _
    $region24: #{resnet_forward.4} parent=5 // pred_fallthru
      _
    %p137 = scmp.le.s32.totalorder 1, %s9
    %p138 = scmp.lt.s32.totalorder %s9, 5
    %p139 = pnand %p137, %p138
    %p140 = pneg %p139
    // Predicated region
    $region29: #{resnet_forward.4} parent=5 // pred_check
      _
    $region30: #{resnet_forward.4} parent=5 // pred_check_branch
      %142 = sbr.rel (%p139) target = $region32
    $region31: #{resnet_forward.4} parent=5 // pred_region
      %s143 = ssub.s32 %s9, 1
      %s144 = smul.u32 16, %s14
      %p145 = scmp.lt.s32.totalorder %s144, 63
      %s146 = scalar_select %p145, %s144, 63
      %s147 = smul.addr %s146, 4
      %s148 = scalar_lea.vmem %s0, %s147
      %p149 = pneg %p35
      %p150 = pneg %p32
      %p151 = pneg %p56
      %p152 = pneg %p53
      %p153 = pneg %p77
      %p154 = pneg %p74
      %p155 = pneg %p103
      %p156 = pneg %p100
      %s157 = smul.u32 16, %s14
      %p158 = scmp.lt.s32.totalorder %s157, 63
      %s159 = scalar_select %p158, %s157, 63
      %s160 = smul.addr %s159, 4
      %s161 = scalar_lea.vmem %s3, %s160
      %s162 = smul.u32 16, %s14
      %p163 = scmp.lt.s32.totalorder %s162, 63
      %s164 = scalar_select %p163, %s162, 63
      %s165 = smul.addr %s164, 4
      %s166 = scalar_lea.vmem %s0, %s165
      %s167 = smul.u32 16, %s14
      %s168 = smul.u32 16, %s14
      %p169 = scmp.lt.s32.totalorder %s168, 63
      %s170 = scalar_select %p169, %s168, 63
      %s171 = smul.addr %s170, 4
      %s172 = scalar_lea.vmem %s3, %s171
      %s173 = smul.u32 16, %s14
      %v175 = vld [vmem:[%s166] sm:$0xf]
      %v176 = vld [vmem:[%s166 + $0x4] sm:$0xf]
      %v177 = vld [vmem:[%s166 + $0x8] sm:$0xf]
      %v178 = vld [vmem:[%s166 + $0xc] sm:$0xf]
      %v179 = vld [vmem:[%s166 + $0x10] sm:$0xf]
      %v180 = vld [vmem:[%s166 + $0x14] sm:$0xf]
      %v181 = vld [vmem:[%s166 + $0x18] sm:$0xf]
      %v182 = vld [vmem:[%s166 + $0x1c] sm:$0xf]
      %v183 = vld [vmem:[%s166 + $0x20] sm:$0xf]
      %v184 = vld [vmem:[%s166 + $0x24] sm:$0xf]
      %v185 = vld [vmem:[%s166 + $0x28] sm:$0xf]
      %v186 = vld [vmem:[%s166 + $0x2c] sm:$0xf]
      %v187 = vld [vmem:[%s166 + $0x30] sm:$0xf]
      %v188 = vld [vmem:[%s166 + $0x34] sm:$0xf]
      %v189 = vld [vmem:[%s166 + $0x38] sm:$0xf]
      %v190 = vld [vmem:[%s166 + $0x3c] sm:$0xf]
      %v191 = vld [vmem:[%s1] sm:$0x3]
      %v192 = vld [vmem:[%s2] sm:$0x1]
      %v194 = vlaneseq
      %v195 = vshrl.u32 %v194, 7
      %v196 = vsub.s32 0, %v195
      %v197 = vrot.slane %v192, %v196
      %v215 = vunpack.c.l.b16 %v175
      %v216 = vunpack.c.l.b16 %v176
      %v217 = vunpack.c.l.b16 %v177
      %v218 = vunpack.c.l.b16 %v178
      %v219 = vunpack.c.l.b16 %v179
      %v220 = vunpack.c.l.b16 %v180
      %v221 = vunpack.c.l.b16 %v181
      %v222 = vunpack.c.l.b16 %v182
      %v223 = vunpack.c.l.b16 %v183
      %v224 = vunpack.c.l.b16 %v184
      %v225 = vunpack.c.l.b16 %v185
      %v226 = vunpack.c.l.b16 %v186
      %v227 = vunpack.c.l.b16 %v187
      %v228 = vunpack.c.l.b16 %v188
      %v229 = vunpack.c.l.b16 %v189
      %v230 = vunpack.c.l.b16 %v190
      %v231 = vpack.c.b16 %v216, %v215
      %v232 = vpack.c.b16 %v218, %v217
      %v233 = vpack.c.b16 %v220, %v219
      %v234 = vpack.c.b16 %v222, %v221
      %v235 = vpack.c.b16 %v224, %v223
      %v236 = vpack.c.b16 %v226, %v225
      %v237 = vpack.c.b16 %v228, %v227
      %v238 = vpack.c.b16 %v230, %v229
      %vm239 = vcmask 23552
      %v241 = vsel %vm239, %v231, 0
      %v244 = vsel %vm239, %v232, 0
      %v247 = vsel %vm239, %v233, 0
      %v250 = vsel %vm239, %v234, 0
      %v253 = vsel %vm239, %v235, 0
      %v256 = vsel %vm239, %v236, 0
      %v259 = vsel %vm239, %v237, 0
      %v262 = vsel %vm239, %v238, 0
      %vm264 = vcmask 1040384
      %vm265 = vcmask 1041408
      %v266 = vsel %vm264, 4294967295, 65535
      %v267 = vsel %vm265, %v266, 0
      %v269 = vand.u32 %v191, %v267
      %271 = vmatprep.subr.bf16.mxu0 0
      %272 = vmatpush1.bf16.msra.mxu0 %v269
      %273 = vmatprep.subr.bf16.mxu0 0
      %274 = vmatpush1.bf16.msra.mxu0 0
      %275 = vmatprep.subr.bf16.mxu0 0
      %276 = vmatpush1.bf16.msra.mxu0 0
      %277 = vmatprep.subr.bf16.mxu0 0
      %278 = vmatpush1.bf16.msra.mxu0 0
      %279 = vmatprep.subr.bf16.mxu0 0
      %280 = vmatpush1.bf16.msra.mxu0 0
      %281 = vmatprep.subr.bf16.mxu0 0
      %282 = vmatpush1.bf16.msra.mxu0 0
      %283 = vmatprep.subr.bf16.mxu0 0
      %284 = vmatpush1.bf16.msra.mxu0 0
      %285 = vmatprep.subr.bf16.mxu0 0
      %286 = vmatpush1.bf16.msra.mxu0 0
      %287 = vmatprep.subr.bf16.mxu0 0
      %288 = vmatpush1.bf16.msra.mxu0 0
      %289 = vmatprep.subr.bf16.mxu0 0
      %290 = vmatpush1.bf16.msra.mxu0 0
      %291 = vmatprep.subr.bf16.mxu0 0
      %292 = vmatpush1.bf16.msra.mxu0 0
      %293 = vmatprep.subr.bf16.mxu0 0
      %294 = vmatpush1.bf16.msra.mxu0 0
      %295 = vmatprep.subr.bf16.mxu0 0
      %296 = vmatpush1.bf16.msra.mxu0 0
      %297 = vmatprep.subr.bf16.mxu0 0
      %298 = vmatpush1.bf16.msra.mxu0 0
      %299 = vmatprep.subr.bf16.mxu0 0
      %300 = vmatpush1.bf16.msra.mxu0 0
      %301 = vmatprep.subr.bf16.mxu0 0
      %302 = vmatpush1.bf16.msra.mxu0 0
      %303 = vmatprep.mubr.bf16.mxu0 0
      %304 = vmatmul.mubr.bf16.gmra.mrb[0].mxu0 %v241
      %v305 = vpop.f32.mrb[0].mxu0
      %v306 = vadd.f32 %v197, %v305
      %v307 = vpop.f32.mrb[0].mxu0
      %v308 = vpop.f32.mrb[0].mxu0
      %v309 = vadd.f32 %v197, %v308
      %v310 = vpop.f32.mrb[0].mxu0
      %311 = vmatprep.mubr.bf16.mxu0 0
      %312 = vmatmul.mubr.bf16.gmra.mrb[0].mxu0 %v244
      %v313 = vpop.f32.mrb[0].mxu0
      %v314 = vadd.f32 %v197, %v313
      %v315 = vpop.f32.mrb[0].mxu0
      %v316 = vpop.f32.mrb[0].mxu0
      %v317 = vadd.f32 %v197, %v316
      %v318 = vpop.f32.mrb[0].mxu0
      %319 = vmatprep.mubr.bf16.mxu0 0
      %320 = vmatmul.mubr.bf16.gmra.mrb[0].mxu0 %v247
      %v321 = vpop.f32.mrb[0].mxu0
      %v322 = vadd.f32 %v197, %v321
      %v323 = vpop.f32.mrb[0].mxu0
      %v324 = vpop.f32.mrb[0].mxu0
      %v325 = vadd.f32 %v197, %v324
      %v326 = vpop.f32.mrb[0].mxu0
      %327 = vmatprep.mubr.bf16.mxu0 0
      %328 = vmatmul.mubr.bf16.gmra.mrb[0].mxu0 %v250
      %v329 = vpop.f32.mrb[0].mxu0
      %v330 = vadd.f32 %v197, %v329
      %v331 = vpop.f32.mrb[0].mxu0
      %v332 = vpop.f32.mrb[0].mxu0
      %v333 = vadd.f32 %v197, %v332
      %v334 = vpop.f32.mrb[0].mxu0
      %335 = vmatprep.mubr.bf16.mxu0 0
      %336 = vmatmul.mubr.bf16.gmra.mrb[0].mxu0 %v253
      %v337 = vpop.f32.mrb[0].mxu0
      %v338 = vadd.f32 %v197, %v337
      %v339 = vpop.f32.mrb[0].mxu0
      %v340 = vpop.f32.mrb[0].mxu0
      %v341 = vadd.f32 %v197, %v340
      %v342 = vpop.f32.mrb[0].mxu0
      %343 = vmatprep.mubr.bf16.mxu0 0
      %344 = vmatmul.mubr.bf16.gmra.mrb[0].mxu0 %v256
      %v345 = vpop.f32.mrb[0].mxu0
      %v346 = vadd.f32 %v197, %v345
      %v347 = vpop.f32.mrb[0].mxu0
      %v348 = vpop.f32.mrb[0].mxu0
      %v349 = vadd.f32 %v197, %v348
      %v350 = vpop.f32.mrb[0].mxu0
      %351 = vmatprep.mubr.bf16.mxu0 0
      %352 = vmatmul.mubr.bf16.gmra.mrb[0].mxu0 %v259
      %v353 = vpop.f32.mrb[0].mxu0
      %v354 = vadd.f32 %v197, %v353
      %v355 = vpop.f32.mrb[0].mxu0
      %v356 = vpop.f32.mrb[0].mxu0
      %v357 = vadd.f32 %v197, %v356
      %v358 = vpop.f32.mrb[0].mxu0
      %359 = vmatprep.mubr.bf16.mxu0 0
      %360 = vmatmul.mubr.bf16.gmra.mrb[0].mxu0 %v262
      %v361 = vpop.f32.mrb[0].mxu0
      %v362 = vadd.f32 %v197, %v361
      %v363 = vpop.f32.mrb[0].mxu0
      %v364 = vpop.f32.mrb[0].mxu0
      %v365 = vadd.f32 %v197, %v364
      %v366 = vpop.f32.mrb[0].mxu0
      %367 = vdwg.mxu0
      %v368 = vpack.c.bf16 %v309, %v306
      %v369 = vpack.c.bf16 %v317, %v314
      %v370 = vpack.c.bf16 %v325, %v322
      %v371 = vpack.c.bf16 %v333, %v330
      %v372 = vpack.c.bf16 %v341, %v338
      %v373 = vpack.c.bf16 %v349, %v346
      %v374 = vpack.c.bf16 %v357, %v354
      %v375 = vpack.c.bf16 %v365, %v362
      %v384 = vunpack.c.l.b16 %v368
      %v385 = vunpack.c.h.b16 %v368
      %v386 = vunpack.c.l.b16 %v369
      %v387 = vunpack.c.h.b16 %v369
      %v388 = vunpack.c.l.b16 %v370
      %v389 = vunpack.c.h.b16 %v370
      %v390 = vunpack.c.l.b16 %v371
      %v391 = vunpack.c.h.b16 %v371
      %v392 = vunpack.c.l.b16 %v372
      %v393 = vunpack.c.h.b16 %v372
      %v394 = vunpack.c.l.b16 %v373
      %v395 = vunpack.c.h.b16 %v373
      %v396 = vunpack.c.l.b16 %v374
      %v397 = vunpack.c.h.b16 %v374
      %v398 = vunpack.c.l.b16 %v375
      %v399 = vunpack.c.h.b16 %v375
      %v400 = vpack.c.b16 %v384, %v384
      %v401 = vpack.c.b16 %v385, %v385
      %v402 = vpack.c.b16 %v386, %v386
      %v403 = vpack.c.b16 %v387, %v387
      %v404 = vpack.c.b16 %v388, %v388
      %v405 = vpack.c.b16 %v389, %v389
      %v406 = vpack.c.b16 %v390, %v390
      %v407 = vpack.c.b16 %v391, %v391
      %v408 = vpack.c.b16 %v392, %v392
      %v409 = vpack.c.b16 %v393, %v393
      %v410 = vpack.c.b16 %v394, %v394
      %v411 = vpack.c.b16 %v395, %v395
      %v412 = vpack.c.b16 %v396, %v396
      %v413 = vpack.c.b16 %v397, %v397
      %v414 = vpack.c.b16 %v398, %v398
      %v415 = vpack.c.b16 %v399, %v399
      %vm432 = vcmask 60416
      %433 = vst.msk [vmem:[%s172] sm:$0xf] %vm432, %v400
      %434 = vst.msk [vmem:[%s172 + $0x4] sm:$0xf] %vm432, %v401
      %435 = vst.msk [vmem:[%s172 + $0x8] sm:$0xf] %vm432, %v402
      %436 = vst.msk [vmem:[%s172 + $0xc] sm:$0xf] %vm432, %v403
      %437 = vst.msk [vmem:[%s172 + $0x10] sm:$0xf] %vm432, %v404
      %438 = vst.msk [vmem:[%s172 + $0x14] sm:$0xf] %vm432, %v405
      %439 = vst.msk [vmem:[%s172 + $0x18] sm:$0xf] %vm432, %v406
      %440 = vst.msk [vmem:[%s172 + $0x1c] sm:$0xf] %vm432, %v407
      %441 = vst.msk [vmem:[%s172 + $0x20] sm:$0xf] %vm432, %v408
      %442 = vst.msk [vmem:[%s172 + $0x24] sm:$0xf] %vm432, %v409
      %443 = vst.msk [vmem:[%s172 + $0x28] sm:$0xf] %vm432, %v410
      %444 = vst.msk [vmem:[%s172 + $0x2c] sm:$0xf] %vm432, %v411
      %445 = vst.msk [vmem:[%s172 + $0x30] sm:$0xf] %vm432, %v412
      %446 = vst.msk [vmem:[%s172 + $0x34] sm:$0xf] %vm432, %v413
      %447 = vst.msk [vmem:[%s172 + $0x38] sm:$0xf] %vm432, %v414
      %448 = vst.msk [vmem:[%s172 + $0x3c] sm:$0xf] %vm432, %v415
      %s449 = smul.u32 16, %s14
      %p450 = scmp.lt.s32.totalorder %s449, 63
      %s451 = scalar_select %p450, %s449, 63
      %s452 = smul.addr %s451, 4
      %s453 = scalar_lea.vmem %s3, %s452
      // Predicated region
      $region33: #{resnet_forward.4} parent=31 // pred_check
        %p454 = pneg %p100
      $region34: #{resnet_forward.4} parent=31 // pred_check_branch
        %456 = sbr.rel (%p454) target = $region36
      $region35: #{resnet_forward.4} parent=31 // pred_region
        %s457 = smul.u32 16, %s14
      $region36: #{resnet_forward.4} parent=31 // pred_fallthru
        _
    $region32: #{resnet_forward.4} parent=5 // pred_fallthru
      _
    %p458 = scmp.le.s32.totalorder 2, %s9
    // Predicated region
    $region37: #{resnet_forward.4} parent=5 // pred_check
      %p459 = pneg %p458
    $region38: #{resnet_forward.4} parent=5 // pred_check_branch
      %461 = sbr.rel (%p459) target = $region40
    $region39: #{resnet_forward.4} parent=5 // pred_region
      %s462 = ssub.s32 %s9, 2
      // Predicated region
      $region41: #{resnet_forward.4} parent=39 // pred_check
        %p463 = pneg %p106
      $region42: #{resnet_forward.4} parent=39 // pred_check_branch
        %465 = sbr.rel (%p463) target = $region44
      $region43: #{resnet_forward.4} parent=39 // pred_region
        %s466 = smul.u32 16, %s15
        %p467 = scmp.lt.s32.totalorder %s466, 63
        %s468 = scalar_select %p467, %s466, 63
        %s469 = smul.addr %s468, 4
        %s470 = scalar_lea.vmem %s3, %s469
      $region44: #{resnet_forward.4} parent=39 // pred_fallthru
        _
    $region40: #{resnet_forward.4} parent=5 // pred_fallthru
      _
  $region6: #{resnet_forward.4} parent=0 // loop_footer
    %s13 = sadd.s32 1, %s9
  $region7: #{resnet_forward.4} parent=0 // loop_footer_branch
    %8 = sbr.rel target = $region3
  $region8: #{resnet_forward.4} parent=0 // loop_exit
    _

// kernel: resnet_forward.7
$region0: #{resnet_forward.7}
  #allocation0 [shape = 'u32[]', space=smem, size = 0x4, offset = 0x4, fixed_abs, tag = 'smem constant byte address 0x4 - core index']
  #allocation1 [shape = 'u32[144,128]{1,0:T(1,128)}', space=vmem, size = 0x12000, scoped, tag = 'internal scratch']
  %s0 = inlined_call_operand.vmem [shape: bf16[2,16], index: 0, kind: input, shape index: {}]
  %s1 = inlined_call_operand.vmem [shape: bf16[16,128], index: 1, kind: input, shape index: {}]
  %s2 = inlined_call_operand.vmem [shape: f32[1,128], index: 2, kind: input, shape index: {}]
  %s3 = inlined_call_operand.hbm [shape: f32[2,128], index: 3, kind: output, shape index: {}]
  %s4 = sld [smem:[#allocation0]]
  $region22: #{resnet_forward.7} parent=0
    _
  %s6 = ssub.s32 1, %s4
  %s7 = scalar_select 0, %s6, %s4
  $region1: #{resnet_forward.7} parent=0
    #allocation2 [shape = 'u8[1024]{0}', space=vmem, size = 0x400, scoped, tag = 'output window, operand 0, single buffered']
    #allocation3 [shape = 's32[1]{0}', space=sflag, size = 0x4, scoped, tag = 'scoped memory for resnet_forward.7']
    %8 = vsyncpa [#allocation3], 0
    // Predicated region
    $region2: #{resnet_forward.7} parent=1 // pred_check
      _
    $region3: #{resnet_forward.7} parent=1 // pred_check_branch
      %10 = sbr.rel (0) target = $region5
    $region4: #{resnet_forward.7} parent=1 // pred_region
      _
    $region5: #{resnet_forward.7} parent=1 // pred_fallthru
      _
    // Predicated region
    $region6: #{resnet_forward.7} parent=1 // pred_check
      _
    $region7: #{resnet_forward.7} parent=1 // pred_check_branch
      %12 = sbr.rel (0) target = $region9
    $region8: #{resnet_forward.7} parent=1 // pred_region
      _
    $region9: #{resnet_forward.7} parent=1 // pred_fallthru
      _
    // Predicated region
    $region10: #{resnet_forward.7} parent=1 // pred_check
      _
    $region11: #{resnet_forward.7} parent=1 // pred_check_branch
      %14 = sbr.rel (0) target = $region13
    $region12: #{resnet_forward.7} parent=1 // pred_region
      _
    $region13: #{resnet_forward.7} parent=1 // pred_fallthru
      _
    %v16 = vld [vmem:[%s0] sm:$0x1]
    %v17 = vld [vmem:[%s1] sm:$0xf]
    %v18 = vld [vmem:[%s1 + $0x4] sm:$0xf]
    %v19 = vld [vmem:[%s2] sm:$0x1]
    %v21 = vlaneseq
    %v22 = vshrl.u32 %v21, 7
    %v23 = vsub.s32 0, %v22
    %v24 = vrot.slane %v19, %v23
    %v28 = vunpack.c.l.b16 %v17
    %v29 = vunpack.c.l.b16 %v18
    %v30 = vpack.c.b16 %v29, %v28
    %vm32 = vcmask 130048
    %v34 = vsel %vm32, %v16, 0
    %36 = vmatprep.subr.bf16.mxu0 0
    %37 = vmatpush1.bf16.msra.mxu0 %v30
    %38 = vmatprep.subr.bf16.mxu0 0
    %39 = vmatpush1.bf16.msra.mxu0 0
    %40 = vmatprep.subr.bf16.mxu0 0
    %41 = vmatpush1.bf16.msra.mxu0 0
    %42 = vmatprep.subr.bf16.mxu0 0
    %43 = vmatpush1.bf16.msra.mxu0 0
    %44 = vmatprep.subr.bf16.mxu0 0
    %45 = vmatpush1.bf16.msra.mxu0 0
    %46 = vmatprep.subr.bf16.mxu0 0
    %47 = vmatpush1.bf16.msra.mxu0 0
    %48 = vmatprep.subr.bf16.mxu0 0
    %49 = vmatpush1.bf16.msra.mxu0 0
    %50 = vmatprep.subr.bf16.mxu0 0
    %51 = vmatpush1.bf16.msra.mxu0 0
    %52 = vmatprep.subr.bf16.mxu0 0
    %53 = vmatpush1.bf16.msra.mxu0 0
    %54 = vmatprep.subr.bf16.mxu0 0
    %55 = vmatpush1.bf16.msra.mxu0 0
    %56 = vmatprep.subr.bf16.mxu0 0
    %57 = vmatpush1.bf16.msra.mxu0 0
    %58 = vmatprep.subr.bf16.mxu0 0
    %59 = vmatpush1.bf16.msra.mxu0 0
    %60 = vmatprep.subr.bf16.mxu0 0
    %61 = vmatpush1.bf16.msra.mxu0 0
    %62 = vmatprep.subr.bf16.mxu0 0
    %63 = vmatpush1.bf16.msra.mxu0 0
    %64 = vmatprep.subr.bf16.mxu0 0
    %65 = vmatpush1.bf16.msra.mxu0 0
    %66 = vmatprep.subr.bf16.mxu0 0
    %67 = vmatpush1.bf16.msra.mxu0 0
    %68 = vmatprep.mubr.bf16.mxu0 0
    %69 = vmatmul.mubr.bf16.gmra.mrb[0].mxu0 %v34
    %v70 = vpop.f32.mrb[0].mxu0
    %v71 = vadd.f32 %v24, %v70
    %v72 = vpop.f32.mrb[0].mxu0
    %v73 = vpop.f32.mrb[0].mxu0
    %v74 = vpop.f32.mrb[0].mxu0
    %75 = vdwg.mxu0
    %76 = vst [vmem:[#allocation2] sm:$0x3] %v71
    // Predicated region
    $region14: #{resnet_forward.7} parent=1 // pred_check
      _
    $region15: #{resnet_forward.7} parent=1 // pred_check_branch
      %78 = sbr.rel (0) target = $region17
    $region16: #{resnet_forward.7} parent=1 // pred_region
      %s80 = ssub.s32 32, 32
      %81 = vsyncadd [#allocation3], %s80
      %s83 = sshll.u32 [#allocation2], 4
      %s84 = int_to_ptr.vmem [resolvable:$true] %s83
      %86 = dma.vmem_to_hbm [thread:$0]  %s84, 32, %s3, [#allocation3]
    $region17: #{resnet_forward.7} parent=1 // pred_fallthru
      _
    // Predicated region
    $region18: #{resnet_forward.7} parent=1 // pred_check
      _
    $region19: #{resnet_forward.7} parent=1 // pred_check_branch
      %88 = sbr.rel (0) target = $region21
    $region20: #{resnet_forward.7} parent=1 // pred_region
      %89 = dma.done [#allocation3], 32
    $region21: #{resnet_forward.7} parent=1 // pred_fallthru
      _
    %90 = vsyncpa [#allocation3], 1

// kernel: resnet_forward.5
$region0: #{resnet_forward.5}
  #allocation0 [shape = 'u32[]', space=smem, size = 0x4, offset = 0x4, fixed_abs, tag = 'smem constant byte address 0x4 - core index']
  #allocation1 [shape = 'u32[144,128]{1,0:T(1,128)}', space=vmem, size = 0x12000, scoped, tag = 'internal scratch']
  %s0 = inlined_call_operand.vmem [shape: bf16[672,8], index: 0, kind: input, shape index: {}]
  %s1 = inlined_call_operand.vmem [shape: bf16[72,8], index: 1, kind: input, shape index: {}]
  %s2 = inlined_call_operand.vmem [shape: f32[1,8], index: 2, kind: input, shape index: {}]
  %s3 = inlined_call_operand.vmem [shape: bf16[8,8], index: 3, kind: input, shape index: {}]
  %s4 = inlined_call_operand.vmem [shape: f32[1,8], index: 4, kind: input, shape index: {}]
  %s5 = inlined_call_operand.vmem [shape: f32[288,1], index: 5, kind: input, shape index: {}]
  %s6 = inlined_call_operand.vmem [shape: bf16[672,8], index: 6, kind: output, shape index: {}]
  %s7 = sld [smem:[#allocation0]]
  $region57: #{resnet_forward.5} parent=0
    _
  %s9 = ssub.s32 1, %s7
  %s10 = scalar_select 0, %s9, %s7
  loop: start=0, step=1, limit=4
  $region2: #{resnet_forward.5} parent=0 // loop_pre_header
    _
  $region3: #{resnet_forward.5} parent=0 // loop_header
    %s12 = sphi 0, %s16
    %p13 = scmp.ge.s32.totalorder %s12, 4
    %s22 = sphi 0, %s24
    %s25 = sphi 0, %s22
    %s26 = sphi 0, %s25
    %s42 = sphi 0, %s26
    %s46 = sphi 0, %s46
    %s48 = sphi 0, %s46
    %s49 = sphi 0, %s48
    %s63 = sphi 0, %s49
    %s67 = sphi 0, %s67
    %s69 = sphi 0, %s67
    %s70 = sphi 0, %s69
    %s84 = sphi 0, %s70
    %s88 = sphi 0, %s88
    %s90 = sphi 0, %s88
    %s91 = sphi 0, %s90
    %s105 = sphi 0, %s91
    %s109 = sphi 0, %s109
    %s111 = sphi 0, %s109
    %s112 = sphi 0, %s111
    %s126 = sphi 0, %s112
    %s130 = sphi 0, %s130
    %s132 = sphi 0, %s130
    %s133 = sphi 0, %s132
    %s147 = sphi 0, %s133
    %s153 = sphi 0, %s155
    %s156 = sphi 0, %s153
    %s157 = sphi 0, %s156
    %s173 = sphi 0, %s157
  $region4: #{resnet_forward.5} parent=0 // loop_header_branch
    %15 = sbr.rel (%p13) target = $region8
  $region5: #{resnet_forward.5} parent=0 // loop_body
    %s17 = ssub.s32 %s12, 1
    %s18 = ssub.s32 %s12, 2
    %s19 = sadd.s32 %s12, 1
    %s20 = ssub.s32 %s12, %s19
    %p21 = scmp.eq.s32.totalorder %s20, 0
    %s23 = sadd.s32 %s22, 1
    %s24 = scalar_select %p21, %s22, %s23
    %p27 = pneg %p21
    %p28 = scmp.eq.s32.totalorder %s12, 1
    %p29 = por %p27, %p28
    %p30 = scmp.ne.s32.totalorder %s22, %s25
    %p31 = scmp.eq.s32.totalorder %s12, 0
    %p32 = por %p30, %p31
    %p33 = scmp.ne.s32.totalorder %s22, %s25
    %p34 = scmp.eq.s32.totalorder %s17, 1
    %p35 = por %p33, %p34
    %p36 = scmp.ne.s32.totalorder %s25, %s26
    %p37 = scmp.eq.s32.totalorder %s17, 0
    %p38 = por %p36, %p37
    %p39 = scmp.ne.s32.totalorder %s25, %s26
    %p40 = scmp.eq.s32.totalorder %s18, 1
    %p41 = por %p39, %p40
    %p43 = scmp.ne.s32.totalorder %s26, %s42
    %p44 = scmp.eq.s32.totalorder %s18, 0
    %p45 = por %p43, %p44
    %s47 = sadd.s32 %s46, 1
    %p50 = scmp.eq.s32.totalorder %s12, 1
    %p51 = scmp.ne.s32.totalorder %s46, %s48
    %p52 = scmp.eq.s32.totalorder %s12, 0
    %p53 = por %p51, %p52
    %p54 = scmp.ne.s32.totalorder %s46, %s48
    %p55 = scmp.eq.s32.totalorder %s17, 1
    %p56 = por %p54, %p55
    %p57 = scmp.ne.s32.totalorder %s48, %s49
    %p58 = scmp.eq.s32.totalorder %s17, 0
    %p59 = por %p57, %p58
    %p60 = scmp.ne.s32.totalorder %s48, %s49
    %p61 = scmp.eq.s32.totalorder %s18, 1
    %p62 = por %p60, %p61
    %p64 = scmp.ne.s32.totalorder %s49, %s63
    %p65 = scmp.eq.s32.totalorder %s18, 0
    %p66 = por %p64, %p65
    %s68 = sadd.s32 %s67, 1
    %p71 = scmp.eq.s32.totalorder %s12, 1
    %p72 = scmp.ne.s32.totalorder %s67, %s69
    %p73 = scmp.eq.s32.totalorder %s12, 0
    %p74 = por %p72, %p73
    %p75 = scmp.ne.s32.totalorder %s67, %s69
    %p76 = scmp.eq.s32.totalorder %s17, 1
    %p77 = por %p75, %p76
    %p78 = scmp.ne.s32.totalorder %s69, %s70
    %p79 = scmp.eq.s32.totalorder %s17, 0
    %p80 = por %p78, %p79
    %p81 = scmp.ne.s32.totalorder %s69, %s70
    %p82 = scmp.eq.s32.totalorder %s18, 1
    %p83 = por %p81, %p82
    %p85 = scmp.ne.s32.totalorder %s70, %s84
    %p86 = scmp.eq.s32.totalorder %s18, 0
    %p87 = por %p85, %p86
    %s89 = sadd.s32 %s88, 1
    %p92 = scmp.eq.s32.totalorder %s12, 1
    %p93 = scmp.ne.s32.totalorder %s88, %s90
    %p94 = scmp.eq.s32.totalorder %s12, 0
    %p95 = por %p93, %p94
    %p96 = scmp.ne.s32.totalorder %s88, %s90
    %p97 = scmp.eq.s32.totalorder %s17, 1
    %p98 = por %p96, %p97
    %p99 = scmp.ne.s32.totalorder %s90, %s91
    %p100 = scmp.eq.s32.totalorder %s17, 0
    %p101 = por %p99, %p100
    %p102 = scmp.ne.s32.totalorder %s90, %s91
    %p103 = scmp.eq.s32.totalorder %s18, 1
    %p104 = por %p102, %p103
    %p106 = scmp.ne.s32.totalorder %s91, %s105
    %p107 = scmp.eq.s32.totalorder %s18, 0
    %p108 = por %p106, %p107
    %s110 = sadd.s32 %s109, 1
    %p113 = scmp.eq.s32.totalorder %s12, 1
    %p114 = scmp.ne.s32.totalorder %s109, %s111
    %p115 = scmp.eq.s32.totalorder %s12, 0
    %p116 = por %p114, %p115
    %p117 = scmp.ne.s32.totalorder %s109, %s111
    %p118 = scmp.eq.s32.totalorder %s17, 1
    %p119 = por %p117, %p118
    %p120 = scmp.ne.s32.totalorder %s111, %s112
    %p121 = scmp.eq.s32.totalorder %s17, 0
    %p122 = por %p120, %p121
    %p123 = scmp.ne.s32.totalorder %s111, %s112
    %p124 = scmp.eq.s32.totalorder %s18, 1
    %p125 = por %p123, %p124
    %p127 = scmp.ne.s32.totalorder %s112, %s126
    %p128 = scmp.eq.s32.totalorder %s18, 0
    %p129 = por %p127, %p128
    %s131 = sadd.s32 %s130, 1
    %p134 = scmp.eq.s32.totalorder %s12, 1
    %p135 = scmp.ne.s32.totalorder %s130, %s132
    %p136 = scmp.eq.s32.totalorder %s12, 0
    %p137 = por %p135, %p136
    %p138 = scmp.ne.s32.totalorder %s130, %s132
    %p139 = scmp.eq.s32.totalorder %s17, 1
    %p140 = por %p138, %p139
    %p141 = scmp.ne.s32.totalorder %s132, %s133
    %p142 = scmp.eq.s32.totalorder %s17, 0
    %p143 = por %p141, %p142
    %p144 = scmp.ne.s32.totalorder %s132, %s133
    %p145 = scmp.eq.s32.totalorder %s18, 1
    %p146 = por %p144, %p145
    %p148 = scmp.ne.s32.totalorder %s133, %s147
    %p149 = scmp.eq.s32.totalorder %s18, 0
    %p150 = por %p148, %p149
    %s151 = ssub.s32 %s12, %s19
    %p152 = scmp.eq.s32.totalorder %s151, 0
    %s154 = sadd.s32 %s153, 1
    %s155 = scalar_select %p152, %s153, %s154
    %p158 = pneg %p152
    %p159 = scmp.eq.s32.totalorder %s12, 1
    %p160 = por %p158, %p159
    %p161 = scmp.ne.s32.totalorder %s153, %s156
    %p162 = scmp.eq.s32.totalorder %s12, 0
    %p163 = por %p161, %p162
    %p164 = scmp.ne.s32.totalorder %s153, %s156
    %p165 = scmp.eq.s32.totalorder %s17, 1
    %p166 = por %p164, %p165
    %p167 = scmp.ne.s32.totalorder %s156, %s157
    %p168 = scmp.eq.s32.totalorder %s17, 0
    %p169 = por %p167, %p168
    %p170 = scmp.ne.s32.totalorder %s156, %s157
    %p171 = scmp.eq.s32.totalorder %s18, 1
    %p172 = por %p170, %p171
    %p174 = scmp.ne.s32.totalorder %s157, %s173
    %p175 = scmp.eq.s32.totalorder %s18, 0
    %p176 = por %p174, %p175
    %p177 = scmp.le.s32.totalorder 1, %s12
    %p178 = scmp.lt.s32.totalorder %s12, 3
    %p179 = pnand %p177, %p178
    %p180 = pneg %p179
    // Predicated region
    $region9: #{resnet_forward.5} parent=5 // pred_check
      _
    $region10: #{resnet_forward.5} parent=5 // pred_check_branch
      %182 = sbr.rel (%p179) target = $region12
    $region11: #{resnet_forward.5} parent=5 // pred_region
      %s183 = ssub.s32 %s12, 1
      // Predicated region
      $region13: #{resnet_forward.5} parent=11 // pred_check
        %p184 = pneg %p59
      $region14: #{resnet_forward.5} parent=11 // pred_check_branch
        %186 = sbr.rel (%p184) target = $region16
      $region15: #{resnet_forward.5} parent=11 // pred_region
        _
      $region16: #{resnet_forward.5} parent=11 // pred_fallthru
        _
      // Predicated region
      $region17: #{resnet_forward.5} parent=11 // pred_check
        %p187 = pneg %p80
      $region18: #{resnet_forward.5} parent=11 // pred_check_branch
        %189 = sbr.rel (%p187) target = $region20
      $region19: #{resnet_forward.5} parent=11 // pred_region
        _
      $region20: #{resnet_forward.5} parent=11 // pred_fallthru
        _
      // Predicated region
      $region21: #{resnet_forward.5} parent=11 // pred_check
        %p190 = pneg %p101
      $region22: #{resnet_forward.5} parent=11 // pred_check_branch
        %192 = sbr.rel (%p190) target = $region24
      $region23: #{resnet_forward.5} parent=11 // pred_region
        _
      $region24: #{resnet_forward.5} parent=11 // pred_fallthru
        _
      // Predicated region
      $region25: #{resnet_forward.5} parent=11 // pred_check
        %p193 = pneg %p122
      $region26: #{resnet_forward.5} parent=11 // pred_check_branch
        %195 = sbr.rel (%p193) target = $region28
      $region27: #{resnet_forward.5} parent=11 // pred_region
        _
      $region28: #{resnet_forward.5} parent=11 // pred_fallthru
        _
      // Predicated region
      $region29: #{resnet_forward.5} parent=11 // pred_check
        %p196 = pneg %p143
      $region30: #{resnet_forward.5} parent=11 // pred_check_branch
        %198 = sbr.rel (%p196) target = $region32
      $region31: #{resnet_forward.5} parent=11 // pred_region
        _
      $region32: #{resnet_forward.5} parent=11 // pred_fallthru
        _
    $region12: #{resnet_forward.5} parent=5 // pred_fallthru
      _
    %p199 = scmp.lt.s32.totalorder %s12, 2
    // Predicated region
    $region33: #{resnet_forward.5} parent=5 // pred_check
      %p200 = pneg %p199
    $region34: #{resnet_forward.5} parent=5 // pred_check_branch
      %202 = sbr.rel (%p200) target = $region36
    $region35: #{resnet_forward.5} parent=5 // pred_region
      // Predicated region
      $region37: #{resnet_forward.5} parent=35 // pred_check
        %p203 = pneg %p32
      $region38: #{resnet_forward.5} parent=35 // pred_check_branch
        %205 = sbr.rel (%p203) target = $region40
      $region39: #{resnet_forward.5} parent=35 // pred_region
        %s206 = smul.u32 42, %s12
        %p207 = scmp.lt.s32.totalorder %s206, 83
        %s208 = scalar_select %p207, %s206, 83
        %s209 = smul.addr %s208, 4
        %s210 = scalar_lea.vmem %s0, %s209
        %s211 = smul.u32 42, %s12
      $region40: #{resnet_forward.5} parent=35 // pred_fallthru
        _
    $region36: #{resnet_forward.5} parent=5 // pred_fallthru
      _
    %p212 = scmp.le.s32.totalorder 1, %s12
    %p213 = scmp.lt.s32.totalorder %s12, 3
    %p214 = pnand %p212, %p213
    %p215 = pneg %p214
    // Predicated region
    $region41: #{resnet_forward.5} parent=5 // pred_check
      _
    $region42: #{resnet_forward.5} parent=5 // pred_check_branch
      %217 = sbr.rel (%p214) target = $region44
    $region43: #{resnet_forward.5} parent=5 // pred_region
      %s218 = ssub.s32 %s12, 1
      %s219 = smul.u32 42, %s17
      %p220 = scmp.lt.s32.totalorder %s219, 83
      %s221 = scalar_select %p220, %s219, 83
      %s222 = smul.addr %s221, 4
      %s223 = scalar_lea.vmem %s0, %s222
      %p224 = pneg %p38
      %p225 = pneg %p35
      %p226 = pneg %p59
      %p227 = pneg %p56
      %p228 = pneg %p80
      %p229 = pneg %p77
      %p230 = pneg %p101
      %p231 = pneg %p98
      %p232 = pneg %p122
      %p233 = pneg %p119
      %p234 = pneg %p143
      %p235 = pneg %p140
      %p236 = pneg %p169
      %p237 = pneg %p166
      %s238 = smul.u32 42, %s17
      %p239 = scmp.lt.s32.totalorder %s238, 83
      %s240 = scalar_select %p239, %s238, 83
      %s241 = smul.addr %s240, 4
      %s242 = scalar_lea.vmem %s6, %s241
      %s243 = smul.u32 42, %s17
      %p244 = scmp.lt.s32.totalorder %s243, 83
      %s245 = scalar_select %p244, %s243, 83
      %s246 = smul.addr %s245, 4
      %s247 = scalar_lea.vmem %s0, %s246
      %s248 = smul.u32 42, %s17
      %s249 = smul.u32 42, %s17
      %p250 = scmp.lt.s32.totalorder %s249, 83
      %s251 = scalar_select %p250, %s249, 83
      %s252 = smul.addr %s251, 4
      %s253 = scalar_lea.vmem %s6, %s252
      %s254 = smul.u32 42, %s17
      %v256 = vld [vmem:[%s247] sm:$0xf]
      %v257 = vld [vmem:[%s247 + $0x4] sm:$0xf]
      %v258 = vld [vmem:[%s247 + $0x8] sm:$0xf]
      %v259 = vld [vmem:[%s247 + $0xc] sm:$0xf]
      %v260 = vld [vmem:[%s247 + $0x10] sm:$0xf]
      %v261 = vld [vmem:[%s247 + $0x14] sm:$0xf]
      %v262 = vld [vmem:[%s247 + $0x18] sm:$0xf]
      %v263 = vld [vmem:[%s247 + $0x1c] sm:$0xf]
      %v264 = vld [vmem:[%s247 + $0x20] sm:$0xf]
      %v265 = vld [vmem:[%s247 + $0x24] sm:$0xf]
      %v266 = vld [vmem:[%s247 + $0x28] sm:$0xf]
      %v267 = vld [vmem:[%s247 + $0x2c] sm:$0xf]
      %v268 = vld [vmem:[%s247 + $0x30] sm:$0xf]
      %v269 = vld [vmem:[%s247 + $0x34] sm:$0xf]
      %v270 = vld [vmem:[%s247 + $0x38] sm:$0xf]
      %v271 = vld [vmem:[%s247 + $0x3c] sm:$0xf]
      %v272 = vld [vmem:[%s247 + $0x40] sm:$0xf]
      %v273 = vld [vmem:[%s247 + $0x44] sm:$0xf]
      %v274 = vld [vmem:[%s247 + $0x48] sm:$0xf]
      %v275 = vld [vmem:[%s247 + $0x4c] sm:$0xf]
      %v276 = vld [vmem:[%s247 + $0x50] sm:$0xf]
      %v277 = vld [vmem:[%s247 + $0x54] sm:$0xf]
      %v278 = vld [vmem:[%s247 + $0x58] sm:$0xf]
      %v279 = vld [vmem:[%s247 + $0x5c] sm:$0xf]
      %v280 = vld [vmem:[%s247 + $0x60] sm:$0xf]
      %v281 = vld [vmem:[%s247 + $0x64] sm:$0xf]
      %v282 = vld [vmem:[%s247 + $0x68] sm:$0xf]
      %v283 = vld [vmem:[%s247 + $0x6c] sm:$0xf]
      %v284 = vld [vmem:[%s247 + $0x70] sm:$0xf]
      %v285 = vld [vmem:[%s247 + $0x74] sm:$0xf]
      %v286 = vld [vmem:[%s247 + $0x78] sm:$0xf]
      %v287 = vld [vmem:[%s247 + $0x7c] sm:$0xf]
      %v288 = vld [vmem:[%s247 + $0x80] sm:$0xf]
      %v289 = vld [vmem:[%s247 + $0x84] sm:$0xf]
      %v290 = vld [vmem:[%s247 + $0x88] sm:$0xf]
      %v291 = vld [vmem:[%s247 + $0x8c] sm:$0xf]
      %v292 = vld [vmem:[%s247 + $0x90] sm:$0xf]
      %v293 = vld [vmem:[%s247 + $0x94] sm:$0xf]
      %v294 = vld [vmem:[%s247 + $0x98] sm:$0xf]
      %v295 = vld [vmem:[%s247 + $0x9c] sm:$0xf]
      %v296 = vld [vmem:[%s247 + $0xa0] sm:$0xf]
      %v297 = vld [vmem:[%s247 + $0xa4] sm:$0xf]
      %v335 = vunpack.c.l.b16 %v256
      %v336 = vunpack.c.l.b16 %v257
      %v337 = vunpack.c.l.b16 %v258
      %v338 = vunpack.c.l.b16 %v259
      %v339 = vunpack.c.l.b16 %v260
      %v340 = vunpack.c.l.b16 %v261
      %v341 = vunpack.c.l.b16 %v262
      %v342 = vunpack.c.l.b16 %v263
      %v343 = vunpack.c.l.b16 %v264
      %v344 = vunpack.c.l.b16 %v265
      %v345 = vunpack.c.l.b16 %v266
      %v346 = vunpack.c.l.b16 %v267
      %v347 = vunpack.c.l.b16 %v268
      %v348 = vunpack.c.l.b16 %v269
      %v349 = vunpack.c.l.b16 %v270
      %v350 = vunpack.c.l.b16 %v271
      %v351 = vunpack.c.l.b16 %v272
      %v352 = vunpack.c.l.b16 %v273
      %v353 = vunpack.c.l.b16 %v274
      %v354 = vunpack.c.l.b16 %v275
      %v355 = vunpack.c.l.b16 %v276
      %v356 = vunpack.c.l.b16 %v277
      %v357 = vunpack.c.l.b16 %v278
      %v358 = vunpack.c.l.b16 %v279
      %v359 = vunpack.c.l.b16 %v280
      %v360 = vunpack.c.l.b16 %v281
      %v361 = vunpack.c.l.b16 %v282
      %v362 = vunpack.c.l.b16 %v283
      %v363 = vunpack.c.l.b16 %v284
      %v364 = vunpack.c.l.b16 %v285
      %v365 = vunpack.c.l.b16 %v286
      %v366 = vunpack.c.l.b16 %v287
      %v367 = vunpack.c.l.b16 %v288
      %v368 = vunpack.c.l.b16 %v289
      %v369 = vunpack.c.l.b16 %v290
      %v370 = vunpack.c.l.b16 %v291
      %v371 = vunpack.c.l.b16 %v292
      %v372 = vpack.c.b16 %v336, %v335
      %v373 = vpack.c.b16 %v338, %v337
      %v374 = vpack.c.b16 %v340, %v339
      %v375 = vpack.c.b16 %v342, %v341
      %v376 = vpack.c.b16 %v344, %v343
      %v377 = vpack.c.b16 %v346, %v345
      %v378 = vpack.c.b16 %v348, %v347
      %v379 = vpack.c.b16 %v350, %v349
      %v380 = vpack.c.b16 %v352, %v351
      %v381 = vpack.c.b16 %v354, %v353
      %v382 = vpack.c.b16 %v356, %v355
      %v383 = vpack.c.b16 %v358, %v357
      %v384 = vpack.c.b16 %v360, %v359
      %v385 = vpack.c.b16 %v362, %v361
      %v386 = vpack.c.b16 %v364, %v363
      %v387 = vpack.c.b16 %v366, %v365
      %v388 = vpack.c.b16 %v368, %v367
      %v389 = vpack.c.b16 %v370, %v369
      %v390 = vpack.c.b16 %v371, %v371
      %vm391 = vsmask.f32 7424
      %v393 = vshrl.u32 %v372, 16
      %v395 = vshll.u32 %v372, 16
      %v397 = vrot.slane %v395, 1
      %v398 = vor.u32 %v393, %v397
      %v400 = vshll.u32 %v373, 16
      %v402 = vrot.slane %v400, 1
      %v403 = vsel %vm391, %v398, %v402
      %v404 = vshrl.u32 %v373, 16
      %v406 = vor.u32 %v404, %v402
      %v408 = vshll.u32 %v374, 16
      %v410 = vrot.slane %v408, 1
      %v411 = vsel %vm391, %v406, %v410
      %v412 = vshrl.u32 %v374, 16
      %v414 = vor.u32 %v412, %v410
      %v416 = vshll.u32 %v375, 16
      %v418 = vrot.slane %v416, 1
      %v419 = vsel %vm391, %v414, %v418
      %v420 = vshrl.u32 %v375, 16
      %v422 = vor.u32 %v420, %v418
      %v424 = vshll.u32 %v376, 16
      %v426 = vrot.slane %v424, 1
      %v427 = vsel %vm391, %v422, %v426
      %v428 = vshrl.u32 %v376, 16
      %v430 = vor.u32 %v428, %v426
      %v432 = vshll.u32 %v377, 16
      %v434 = vrot.slane %v432, 1
      %v435 = vsel %vm391, %v430, %v434
      %v436 = vshrl.u32 %v377, 16
      %v438 = vor.u32 %v436, %v434
      %v440 = vshll.u32 %v378, 16
      %v442 = vrot.slane %v440, 1
      %v443 = vsel %vm391, %v438, %v442
      %v444 = vshrl.u32 %v378, 16
      %v446 = vor.u32 %v444, %v442
      %v448 = vshll.u32 %v379, 16
      %v450 = vrot.slane %v448, 1
      %v451 = vsel %vm391, %v446, %v450
      %v452 = vshrl.u32 %v379, 16
      %v454 = vor.u32 %v452, %v450
      %v456 = vshll.u32 %v380, 16
      %v458 = vrot.slane %v456, 1
      %v459 = vsel %vm391, %v454, %v458
      %v460 = vshrl.u32 %v380, 16
      %v462 = vor.u32 %v460, %v458
      %v464 = vshll.u32 %v381, 16
      %v466 = vrot.slane %v464, 1
      %v467 = vsel %vm391, %v462, %v466
      %v468 = vshrl.u32 %v381, 16
      %v470 = vor.u32 %v468, %v466
      %v472 = vshll.u32 %v382, 16
      %v474 = vrot.slane %v472, 1
      %v475 = vsel %vm391, %v470, %v474
      %v476 = vshrl.u32 %v382, 16
      %v478 = vor.u32 %v476, %v474
      %v480 = vshll.u32 %v383, 16
      %v482 = vrot.slane %v480, 1
      %v483 = vsel %vm391, %v478, %v482
      %v484 = vshrl.u32 %v383, 16
      %v486 = vor.u32 %v484, %v482
      %v488 = vshll.u32 %v384, 16
      %v490 = vrot.slane %v488, 1
      %v491 = vsel %vm391, %v486, %v490
      %v492 = vshrl.u32 %v384, 16
      %v494 = vor.u32 %v492, %v490
      %v496 = vshll.u32 %v385, 16
      %v498 = vrot.slane %v496, 1
      %v499 = vsel %vm391, %v494, %v498
      %v500 = vshrl.u32 %v385, 16
      %v502 = vor.u32 %v500, %v498
      %v504 = vshll.u32 %v386, 16
      %v506 = vrot.slane %v504, 1
      %v507 = vsel %vm391, %v502, %v506
      %v508 = vshrl.u32 %v386, 16
      %v510 = vor.u32 %v508, %v506
      %v512 = vshll.u32 %v387, 16
      %v514 = vrot.slane %v512, 1
      %v515 = vsel %vm391, %v510, %v514
      %v516 = vshrl.u32 %v387, 16
      %v518 = vor.u32 %v516, %v514
      %v520 = vshll.u32 %v388, 16
      %v522 = vrot.slane %v520, 1
      %v523 = vsel %vm391, %v518, %v522
      %v524 = vshrl.u32 %v388, 16
      %v526 = vor.u32 %v524, %v522
      %v528 = vshll.u32 %v389, 16
      %v530 = vrot.slane %v528, 1
      %v531 = vsel %vm391, %v526, %v530
      %v532 = vshrl.u32 %v389, 16
      %v534 = vor.u32 %v532, %v530
      %v536 = vshll.u32 %v390, 16
      %v538 = vrot.slane %v536, 1
      %v539 = vsel %vm391, %v534, %v538
      %v540 = vshrl.u32 %v390, 16
      %v542 = vor.u32 %v540, %v538
      %543 = vrot.lane.b32.xlu0 %v403, 8
      %v544 = vpop.permute.xlu0 %543
      %545 = vrot.lane.b32.xlu0 %v411, 8
      %v546 = vpop.permute.xlu0 %545
      %547 = vrot.lane.b32.xlu0 %v419, 8
      %v548 = vpop.permute.xlu0 %547
      %549 = vrot.lane.b32.xlu0 %v427, 8
      %v550 = vpop.permute.xlu0 %549
      %551 = vrot.lane.b32.xlu0 %v435, 8
      %v552 = vpop.permute.xlu0 %551
      %553 = vrot.lane.b32.xlu0 %v443, 8
      %v554 = vpop.permute.xlu0 %553
      %555 = vrot.lane.b32.xlu0 %v451, 8
      %v556 = vpop.permute.xlu0 %555
      %557 = vrot.lane.b32.xlu0 %v459, 8
      %v558 = vpop.permute.xlu0 %557
      %559 = vrot.lane.b32.xlu0 %v467, 8
      %v560 = vpop.permute.xlu0 %559
      %561 = vrot.lane.b32.xlu0 %v475, 8
      %v562 = vpop.permute.xlu0 %561
      %563 = vrot.lane.b32.xlu0 %v483, 8
      %v564 = vpop.permute.xlu0 %563
      %565 = vrot.lane.b32.xlu0 %v491, 8
      %v566 = vpop.permute.xlu0 %565
      %567 = vrot.lane.b32.xlu0 %v499, 8
      %v568 = vpop.permute.xlu0 %567
      %569 = vrot.lane.b32.xlu0 %v507, 8
      %v570 = vpop.permute.xlu0 %569
      %571 = vrot.lane.b32.xlu0 %v515, 8
      %v572 = vpop.permute.xlu0 %571
      %573 = vrot.lane.b32.xlu0 %v523, 8
      %v574 = vpop.permute.xlu0 %573
      %575 = vrot.lane.b32.xlu0 %v531, 8
      %v576 = vpop.permute.xlu0 %575
      %577 = vrot.lane.b32.xlu0 %v539, 8
      %v578 = vpop.permute.xlu0 %577
      %579 = vrot.lane.b32.xlu0 %v542, 8
      %v580 = vpop.permute.xlu0 %579
      %vm581 = vcmask 1046528
      %v582 = vrot.slane %v372, 1
      %v583 = vrot.slane %v373, 1
      %v584 = vsel %vm581, %v582, %v583
      %v585 = vrot.slane %v374, 1
      %v586 = vsel %vm581, %v583, %v585
      %v587 = vrot.slane %v375, 1
      %v588 = vsel %vm581, %v585, %v587
      %v589 = vrot.slane %v376, 1
      %v590 = vsel %vm581, %v587, %v589
      %v591 = vrot.slane %v377, 1
      %v592 = vsel %vm581, %v589, %v591
      %v593 = vrot.slane %v378, 1
      %v594 = vsel %vm581, %v591, %v593
      %v595 = vrot.slane %v379, 1
      %v596 = vsel %vm581, %v593, %v595
      %v597 = vrot.slane %v380, 1
      %v598 = vsel %vm581, %v595, %v597
      %v599 = vrot.slane %v381, 1
      %v600 = vsel %vm581, %v597, %v599
      %v601 = vrot.slane %v382, 1
      %v602 = vsel %vm581, %v599, %v601
      %v603 = vrot.slane %v383, 1
      %v604 = vsel %vm581, %v601, %v603
      %v605 = vrot.slane %v384, 1
      %v606 = vsel %vm581, %v603, %v605
      %v607 = vrot.slane %v385, 1
      %v608 = vsel %vm581, %v605, %v607
      %v609 = vrot.slane %v386, 1
      %v610 = vsel %vm581, %v607, %v609
      %v611 = vrot.slane %v387, 1
      %v612 = vsel %vm581, %v609, %v611
      %v613 = vrot.slane %v388, 1
      %v614 = vsel %vm581, %v611, %v613
      %v615 = vrot.slane %v389, 1
      %v616 = vsel %vm581, %v613, %v615
      %v617 = vrot.slane %v390, 1
      %v618 = vsel %vm581, %v615, %v617
      %619 = vrot.lane.b32.xlu0 %v584, 16
      %v620 = vpop.permute.xlu0 %619
      %621 = vrot.lane.b32.xlu0 %v586, 16
      %v622 = vpop.permute.xlu0 %621
      %623 = vrot.lane.b32.xlu0 %v588, 16
      %v624 = vpop.permute.xlu0 %623
      %625 = vrot.lane.b32.xlu0 %v590, 16
      %v626 = vpop.permute.xlu0 %625
      %627 = vrot.lane.b32.xlu0 %v592, 16
      %v628 = vpop.permute.xlu0 %627
      %629 = vrot.lane.b32.xlu0 %v594, 16
      %v630 = vpop.permute.xlu0 %629
      %631 = vrot.lane.b32.xlu0 %v596, 16
      %v632 = vpop.permute.xlu0 %631
      %633 = vrot.lane.b32.xlu0 %v598, 16
      %v634 = vpop.permute.xlu0 %633
      %635 = vrot.lane.b32.xlu0 %v600, 16
      %v636 = vpop.permute.xlu0 %635
      %637 = vrot.lane.b32.xlu0 %v602, 16
      %v638 = vpop.permute.xlu0 %637
      %639 = vrot.lane.b32.xlu0 %v604, 16
      %v640 = vpop.permute.xlu0 %639
      %641 = vrot.lane.b32.xlu0 %v606, 16
      %v642 = vpop.permute.xlu0 %641
      %643 = vrot.lane.b32.xlu0 %v608, 16
      %v644 = vpop.permute.xlu0 %643
      %645 = vrot.lane.b32.xlu0 %v610, 16
      %v646 = vpop.permute.xlu0 %645
      %647 = vrot.lane.b32.xlu0 %v612, 16
      %v648 = vpop.permute.xlu0 %647
      %649 = vrot.lane.b32.xlu0 %v614, 16
      %v650 = vpop.permute.xlu0 %649
      %651 = vrot.lane.b32.xlu0 %v616, 16
      %v652 = vpop.permute.xlu0 %651
      %653 = vrot.lane.b32.xlu0 %v618, 16
      %v654 = vpop.permute.xlu0 %653
      %655 = vrot.lane.b32.xlu0 %v617, 16
      %v656 = vpop.permute.xlu0 %655
      %v659 = vunpack.c.l.b16 %v293
      %v660 = vunpack.c.l.b16 %v294
      %v661 = vpack.c.b16 %v659, %v371
      %v662 = vpack.c.b16 %v660, %v660
      %v663 = vrot.slane %v661, 1
      %v664 = vsel %vm581, %v615, %v663
      %v665 = vrot.slane %v662, 1
      %v666 = vsel %vm581, %v663, %v665
      %667 = vrot.lane.b32.xlu0 %v586, 24
      %v668 = vpop.permute.xlu0 %667
      %669 = vrot.lane.b32.xlu0 %v588, 24
      %v670 = vpop.permute.xlu0 %669
      %671 = vrot.lane.b32.xlu0 %v590, 24
      %v672 = vpop.permute.xlu0 %671
      %673 = vrot.lane.b32.xlu0 %v592, 24
      %v674 = vpop.permute.xlu0 %673
      %675 = vrot.lane.b32.xlu0 %v594, 24
      %v676 = vpop.permute.xlu0 %675
      %677 = vrot.lane.b32.xlu0 %v596, 24
      %v678 = vpop.permute.xlu0 %677
      %679 = vrot.lane.b32.xlu0 %v598, 24
      %v680 = vpop.permute.xlu0 %679
      %681 = vrot.lane.b32.xlu0 %v600, 24
      %v682 = vpop.permute.xlu0 %681
      %683 = vrot.lane.b32.xlu0 %v602, 24
      %v684 = vpop.permute.xlu0 %683
      %685 = vrot.lane.b32.xlu0 %v604, 24
      %v686 = vpop.permute.xlu0 %685
      %687 = vrot.lane.b32.xlu0 %v606, 24
      %v688 = vpop.permute.xlu0 %687
      %689 = vrot.lane.b32.xlu0 %v608, 24
      %v690 = vpop.permute.xlu0 %689
      %691 = vrot.lane.b32.xlu0 %v610, 24
      %v692 = vpop.permute.xlu0 %691
      %693 = vrot.lane.b32.xlu0 %v612, 24
      %v694 = vpop.permute.xlu0 %693
      %695 = vrot.lane.b32.xlu0 %v614, 24
      %v696 = vpop.permute.xlu0 %695
      %697 = vrot.lane.b32.xlu0 %v616, 24
      %v698 = vpop.permute.xlu0 %697
      %699 = vrot.lane.b32.xlu0 %v664, 24
      %v700 = vpop.permute.xlu0 %699
      %701 = vrot.lane.b32.xlu0 %v666, 24
      %v702 = vpop.permute.xlu0 %701
      %703 = vrot.lane.b32.xlu0 %v665, 24
      %v704 = vpop.permute.xlu0 %703
      %v705 = vpack.c.b16 %v339, %v338
      %v706 = vpack.c.b16 %v341, %v340
      %v707 = vpack.c.b16 %v343, %v342
      %v708 = vpack.c.b16 %v345, %v344
      %v709 = vpack.c.b16 %v347, %v346
      %v710 = vpack.c.b16 %v349, %v348
      %v711 = vpack.c.b16 %v351, %v350
      %v712 = vpack.c.b16 %v353, %v352
      %v713 = vpack.c.b16 %v355, %v354
      %v714 = vpack.c.b16 %v357, %v356
      %v715 = vpack.c.b16 %v359, %v358
      %v716 = vpack.c.b16 %v361, %v360
      %v717 = vpack.c.b16 %v363, %v362
      %v718 = vpack.c.b16 %v365, %v364
      %v719 = vpack.c.b16 %v367, %v366
      %v720 = vpack.c.b16 %v369, %v368
      %v721 = vpack.c.b16 %v371, %v370
      %v722 = vpack.c.b16 %v660, %v659
      %vm723 = vsmask.f32 2304
      %v725 = vshrl.u32 %v705, 16
      %v727 = vrot.slane %v725, 5
      %v728 = vshll.u32 %v705, 16
      %v730 = vrot.slane %v728, 6
      %v731 = vor.u32 %v727, %v730
      %v733 = vshrl.u32 %v706, 16
      %v735 = vrot.slane %v733, 5
      %v736 = vshll.u32 %v706, 16
      %v738 = vrot.slane %v736, 6
      %v739 = vor.u32 %v735, %v738
      %v740 = vsel %vm723, %v731, %v739
      %v742 = vshrl.u32 %v707, 16
      %v744 = vrot.slane %v742, 5
      %v745 = vshll.u32 %v707, 16
      %v747 = vrot.slane %v745, 6
      %v748 = vor.u32 %v744, %v747
      %v749 = vsel %vm723, %v739, %v748
      %v751 = vshrl.u32 %v708, 16
      %v753 = vrot.slane %v751, 5
      %v754 = vshll.u32 %v708, 16
      %v756 = vrot.slane %v754, 6
      %v757 = vor.u32 %v753, %v756
      %v758 = vsel %vm723, %v748, %v757
      %v760 = vshrl.u32 %v709, 16
      %v762 = vrot.slane %v760, 5
      %v763 = vshll.u32 %v709, 16
      %v765 = vrot.slane %v763, 6
      %v766 = vor.u32 %v762, %v765
      %v767 = vsel %vm723, %v757, %v766
      %v769 = vshrl.u32 %v710, 16
      %v771 = vrot.slane %v769, 5
      %v772 = vshll.u32 %v710, 16
      %v774 = vrot.slane %v772, 6
      %v775 = vor.u32 %v771, %v774
      %v776 = vsel %vm723, %v766, %v775
      %v778 = vshrl.u32 %v711, 16
      %v780 = vrot.slane %v778, 5
      %v781 = vshll.u32 %v711, 16
      %v783 = vrot.slane %v781, 6
      %v784 = vor.u32 %v780, %v783
      %v785 = vsel %vm723, %v775, %v784
      %v787 = vshrl.u32 %v712, 16
      %v789 = vrot.slane %v787, 5
      %v790 = vshll.u32 %v712, 16
      %v792 = vrot.slane %v790, 6
      %v793 = vor.u32 %v789, %v792
      %v794 = vsel %vm723, %v784, %v793
      %v796 = vshrl.u32 %v713, 16
      %v798 = vrot.slane %v796, 5
      %v799 = vshll.u32 %v713, 16
      %v801 = vrot.slane %v799, 6
      %v802 = vor.u32 %v798, %v801
      %v803 = vsel %vm723, %v793, %v802
      %v805 = vshrl.u32 %v714, 16
      %v807 = vrot.slane %v805, 5
      %v808 = vshll.u32 %v714, 16
      %v810 = vrot.slane %v808, 6
      %v811 = vor.u32 %v807, %v810
      %v812 = vsel %vm723, %v802, %v811
      %v814 = vshrl.u32 %v715, 16
      %v816 = vrot.slane %v814, 5
      %v817 = vshll.u32 %v715, 16
      %v819 = vrot.slane %v817, 6
      %v820 = vor.u32 %v816, %v819
      %v821 = vsel %vm723, %v811, %v820
      %v823 = vshrl.u32 %v716, 16
      %v825 = vrot.slane %v823, 5
      %v826 = vshll.u32 %v716, 16
      %v828 = vrot.slane %v826, 6
      %v829 = vor.u32 %v825, %v828
      %v830 = vsel %vm723, %v820, %v829
      %v832 = vshrl.u32 %v717, 16
      %v834 = vrot.slane %v832, 5
      %v835 = vshll.u32 %v717, 16
      %v837 = vrot.slane %v835, 6
      %v838 = vor.u32 %v834, %v837
      %v839 = vsel %vm723, %v829, %v838
      %v841 = vshrl.u32 %v718, 16
      %v843 = vrot.slane %v841, 5
      %v844 = vshll.u32 %v718, 16
      %v846 = vrot.slane %v844, 6
      %v847 = vor.u32 %v843, %v846
      %v848 = vsel %vm723, %v838, %v847
      %v850 = vshrl.u32 %v719, 16
      %v852 = vrot.slane %v850, 5
      %v853 = vshll.u32 %v719, 16
      %v855 = vrot.slane %v853, 6
      %v856 = vor.u32 %v852, %v855
      %v857 = vsel %vm723, %v847, %v856
      %v859 = vshrl.u32 %v720, 16
      %v861 = vrot.slane %v859, 5
      %v862 = vshll.u32 %v720, 16
      %v864 = vrot.slane %v862, 6
      %v865 = vor.u32 %v861, %v864
      %v866 = vsel %vm723, %v856, %v865
      %v868 = vshrl.u32 %v721, 16
      %v870 = vrot.slane %v868, 5
      %v871 = vshll.u32 %v721, 16
      %v873 = vrot.slane %v871, 6
      %v874 = vor.u32 %v870, %v873
      %v875 = vsel %vm723, %v865, %v874
      %v877 = vshrl.u32 %v722, 16
      %v879 = vrot.slane %v877, 5
      %v880 = vshll.u32 %v722, 16
      %v882 = vrot.slane %v880, 6
      %v883 = vor.u32 %v879, %v882
      %v884 = vsel %vm723, %v874, %v883
      %885 = vrot.lane.b32.xlu0 %v731, 32
      %v886 = vpop.permute.xlu0 %885
      %887 = vrot.lane.b32.xlu0 %v740, 32
      %v888 = vpop.permute.xlu0 %887
      %889 = vrot.lane.b32.xlu0 %v749, 32
      %v890 = vpop.permute.xlu0 %889
      %891 = vrot.lane.b32.xlu0 %v758, 32
      %v892 = vpop.permute.xlu0 %891
      %893 = vrot.lane.b32.xlu0 %v767, 32
      %v894 = vpop.permute.xlu0 %893
      %895 = vrot.lane.b32.xlu0 %v776, 32
      %v896 = vpop.permute.xlu0 %895
      %897 = vrot.lane.b32.xlu0 %v785, 32
      %v898 = vpop.permute.xlu0 %897
      %899 = vrot.lane.b32.xlu0 %v794, 32
      %v900 = vpop.permute.xlu0 %899
      %901 = vrot.lane.b32.xlu0 %v803, 32
      %v902 = vpop.permute.xlu0 %901
      %903 = vrot.lane.b32.xlu0 %v812, 32
      %v904 = vpop.permute.xlu0 %903
      %905 = vrot.lane.b32.xlu0 %v821, 32
      %v906 = vpop.permute.xlu0 %905
      %907 = vrot.lane.b32.xlu0 %v830, 32
      %v908 = vpop.permute.xlu0 %907
      %909 = vrot.lane.b32.xlu0 %v839, 32
      %v910 = vpop.permute.xlu0 %909
      %911 = vrot.lane.b32.xlu0 %v848, 32
      %v912 = vpop.permute.xlu0 %911
      %913 = vrot.lane.b32.xlu0 %v857, 32
      %v914 = vpop.permute.xlu0 %913
      %915 = vrot.lane.b32.xlu0 %v866, 32
      %v916 = vpop.permute.xlu0 %915
      %917 = vrot.lane.b32.xlu0 %v875, 32
      %v918 = vpop.permute.xlu0 %917
      %919 = vrot.lane.b32.xlu0 %v884, 32
      %v920 = vpop.permute.xlu0 %919
      %921 = vrot.lane.b32.xlu0 %v883, 32
      %v922 = vpop.permute.xlu0 %921
      %v924 = vunpack.c.l.b16 %v295
      %v925 = vpack.c.b16 %v924, %v924
      %vm926 = vcmask 1041408
      %v927 = vrot.slane %v705, 6
      %v928 = vrot.slane %v706, 6
      %v929 = vsel %vm926, %v927, %v928
      %v930 = vrot.slane %v707, 6
      %v931 = vsel %vm926, %v928, %v930
      %v932 = vrot.slane %v708, 6
      %v933 = vsel %vm926, %v930, %v932
      %v934 = vrot.slane %v709, 6
      %v935 = vsel %vm926, %v932, %v934
      %v936 = vrot.slane %v710, 6
      %v937 = vsel %vm926, %v934, %v936
      %v938 = vrot.slane %v711, 6
      %v939 = vsel %vm926, %v936, %v938
      %v940 = vrot.slane %v712, 6
      %v941 = vsel %vm926, %v938, %v940
      %v942 = vrot.slane %v713, 6
      %v943 = vsel %vm926, %v940, %v942
      %v944 = vrot.slane %v714, 6
      %v945 = vsel %vm926, %v942, %v944
      %v946 = vrot.slane %v715, 6
      %v947 = vsel %vm926, %v944, %v946
      %v948 = vrot.slane %v716, 6
      %v949 = vsel %vm926, %v946, %v948
      %v950 = vrot.slane %v717, 6
      %v951 = vsel %vm926, %v948, %v950
      %v952 = vrot.slane %v718, 6
      %v953 = vsel %vm926, %v950, %v952
      %v954 = vrot.slane %v719, 6
      %v955 = vsel %vm926, %v952, %v954
      %v956 = vrot.slane %v720, 6
      %v957 = vsel %vm926, %v954, %v956
      %v958 = vrot.slane %v721, 6
      %v959 = vsel %vm926, %v956, %v958
      %v960 = vrot.slane %v722, 6
      %v961 = vsel %vm926, %v958, %v960
      %v962 = vrot.slane %v925, 6
      %v963 = vsel %vm926, %v960, %v962
      %964 = vrot.lane.b32.xlu0 %v927, 40
      %v965 = vpop.permute.xlu0 %964
      %966 = vrot.lane.b32.xlu0 %v929, 40
      %v967 = vpop.permute.xlu0 %966
      %968 = vrot.lane.b32.xlu0 %v931, 40
      %v969 = vpop.permute.xlu0 %968
      %970 = vrot.lane.b32.xlu0 %v933, 40
      %v971 = vpop.permute.xlu0 %970
      %972 = vrot.lane.b32.xlu0 %v935, 40
      %v973 = vpop.permute.xlu0 %972
      %974 = vrot.lane.b32.xlu0 %v937, 40
      %v975 = vpop.permute.xlu0 %974
      %976 = vrot.lane.b32.xlu0 %v939, 40
      %v977 = vpop.permute.xlu0 %976
      %978 = vrot.lane.b32.xlu0 %v941, 40
      %v979 = vpop.permute.xlu0 %978
      %980 = vrot.lane.b32.xlu0 %v943, 40
      %v981 = vpop.permute.xlu0 %980
      %982 = vrot.lane.b32.xlu0 %v945, 40
      %v983 = vpop.permute.xlu0 %982
      %984 = vrot.lane.b32.xlu0 %v947, 40
      %v985 = vpop.permute.xlu0 %984
      %986 = vrot.lane.b32.xlu0 %v949, 40
      %v987 = vpop.permute.xlu0 %986
      %988 = vrot.lane.b32.xlu0 %v951, 40
      %v989 = vpop.permute.xlu0 %988
      %990 = vrot.lane.b32.xlu0 %v953, 40
      %v991 = vpop.permute.xlu0 %990
      %992 = vrot.lane.b32.xlu0 %v955, 40
      %v993 = vpop.permute.xlu0 %992
      %994 = vrot.lane.b32.xlu0 %v957, 40
      %v995 = vpop.permute.xlu0 %994
      %996 = vrot.lane.b32.xlu0 %v959, 40
      %v997 = vpop.permute.xlu0 %996
      %998 = vrot.lane.b32.xlu0 %v961, 40
      %v999 = vpop.permute.xlu0 %998
      %1000 = vrot.lane.b32.xlu0 %v963, 40
      %v1001 = vpop.permute.xlu0 %1000
      %v1004 = vunpack.c.l.b16 %v296
      %v1005 = vunpack.c.l.b16 %v297
      %v1006 = vpack.c.b16 %v1004, %v924
      %v1007 = vpack.c.b16 %v1005, %v1005
      %v1008 = vrot.slane %v1006, 6
      %v1009 = vsel %vm926, %v960, %v1008
      %v1010 = vrot.slane %v1007, 6
      %v1011 = vsel %vm926, %v1008, %v1010
      %1012 = vrot.lane.b32.xlu0 %v928, 48
      %v1013 = vpop.permute.xlu0 %1012
      %1014 = vrot.lane.b32.xlu0 %v931, 48
      %v1015 = vpop.permute.xlu0 %1014
      %1016 = vrot.lane.b32.xlu0 %v933, 48
      %v1017 = vpop.permute.xlu0 %1016
      %1018 = vrot.lane.b32.xlu0 %v935, 48
      %v1019 = vpop.permute.xlu0 %1018
      %1020 = vrot.lane.b32.xlu0 %v937, 48
      %v1021 = vpop.permute.xlu0 %1020
      %1022 = vrot.lane.b32.xlu0 %v939, 48
      %v1023 = vpop.permute.xlu0 %1022
      %1024 = vrot.lane.b32.xlu0 %v941, 48
      %v1025 = vpop.permute.xlu0 %1024
      %1026 = vrot.lane.b32.xlu0 %v943, 48
      %v1027 = vpop.permute.xlu0 %1026
      %1028 = vrot.lane.b32.xlu0 %v945, 48
      %v1029 = vpop.permute.xlu0 %1028
      %1030 = vrot.lane.b32.xlu0 %v947, 48
      %v1031 = vpop.permute.xlu0 %1030
      %1032 = vrot.lane.b32.xlu0 %v949, 48
      %v1033 = vpop.permute.xlu0 %1032
      %1034 = vrot.lane.b32.xlu0 %v951, 48
      %v1035 = vpop.permute.xlu0 %1034
      %1036 = vrot.lane.b32.xlu0 %v953, 48
      %v1037 = vpop.permute.xlu0 %1036
      %1038 = vrot.lane.b32.xlu0 %v955, 48
      %v1039 = vpop.permute.xlu0 %1038
      %1040 = vrot.lane.b32.xlu0 %v957, 48
      %v1041 = vpop.permute.xlu0 %1040
      %1042 = vrot.lane.b32.xlu0 %v959, 48
      %v1043 = vpop.permute.xlu0 %1042
      %1044 = vrot.lane.b32.xlu0 %v961, 48
      %v1045 = vpop.permute.xlu0 %1044
      %1046 = vrot.lane.b32.xlu0 %v1009, 48
      %v1047 = vpop.permute.xlu0 %1046
      %1048 = vrot.lane.b32.xlu0 %v1011, 48
      %v1049 = vpop.permute.xlu0 %1048
      %vm1050 = vsmask.f32 1280
      %v1051 = vrot.slane %v733, 6
      %v1052 = vrot.slane %v736, 7
      %v1053 = vor.u32 %v1051, %v1052
      %v1054 = vrot.slane %v742, 6
      %v1055 = vrot.slane %v745, 7
      %v1056 = vor.u32 %v1054, %v1055
      %v1057 = vsel %vm1050, %v1053, %v1056
      %v1058 = vrot.slane %v751, 6
      %v1059 = vrot.slane %v754, 7
      %v1060 = vor.u32 %v1058, %v1059
      %v1061 = vsel %vm1050, %v1056, %v1060
      %v1062 = vrot.slane %v760, 6
      %v1063 = vrot.slane %v763, 7
      %v1064 = vor.u32 %v1062, %v1063
      %v1065 = vsel %vm1050, %v1060, %v1064
      %v1066 = vrot.slane %v769, 6
      %v1067 = vrot.slane %v772, 7
      %v1068 = vor.u32 %v1066, %v1067
      %v1069 = vsel %vm1050, %v1064, %v1068
      %v1070 = vrot.slane %v778, 6
      %v1071 = vrot.slane %v781, 7
      %v1072 = vor.u32 %v1070, %v1071
      %v1073 = vsel %vm1050, %v1068, %v1072
      %v1074 = vrot.slane %v787, 6
      %v1075 = vrot.slane %v790, 7
      %v1076 = vor.u32 %v1074, %v1075
      %v1077 = vsel %vm1050, %v1072, %v1076
      %v1078 = vrot.slane %v796, 6
      %v1079 = vrot.slane %v799, 7
      %v1080 = vor.u32 %v1078, %v1079
      %v1081 = vsel %vm1050, %v1076, %v1080
      %v1082 = vrot.slane %v805, 6
      %v1083 = vrot.slane %v808, 7
      %v1084 = vor.u32 %v1082, %v1083
      %v1085 = vsel %vm1050, %v1080, %v1084
      %v1086 = vrot.slane %v814, 6
      %v1087 = vrot.slane %v817, 7
      %v1088 = vor.u32 %v1086, %v1087
      %v1089 = vsel %vm1050, %v1084, %v1088
      %v1090 = vrot.slane %v823, 6
      %v1091 = vrot.slane %v826, 7
      %v1092 = vor.u32 %v1090, %v1091
      %v1093 = vsel %vm1050, %v1088, %v1092
      %v1094 = vrot.slane %v832, 6
      %v1095 = vrot.slane %v835, 7
      %v1096 = vor.u32 %v1094, %v1095
      %v1097 = vsel %vm1050, %v1092, %v1096
      %v1098 = vrot.slane %v841, 6
      %v1099 = vrot.slane %v844, 7
      %v1100 = vor.u32 %v1098, %v1099
      %v1101 = vsel %vm1050, %v1096, %v1100
      %v1102 = vrot.slane %v850, 6
      %v1103 = vrot.slane %v853, 7
      %v1104 = vor.u32 %v1102, %v1103
      %v1105 = vsel %vm1050, %v1100, %v1104
      %v1106 = vrot.slane %v859, 6
      %v1107 = vrot.slane %v862, 7
      %v1108 = vor.u32 %v1106, %v1107
      %v1109 = vsel %vm1050, %v1104, %v1108
      %v1110 = vrot.slane %v868, 6
      %v1111 = vrot.slane %v871, 7
      %v1112 = vor.u32 %v1110, %v1111
      %v1113 = vsel %vm1050, %v1108, %v1112
      %v1114 = vrot.slane %v877, 6
      %v1115 = vrot.slane %v880, 7
      %v1116 = vor.u32 %v1114, %v1115
      %v1117 = vsel %vm1050, %v1112, %v1116
      %v1119 = vshrl.u32 %v1006, 16
      %v1121 = vrot.slane %v1119, 6
      %v1122 = vshll.u32 %v1006, 16
      %v1124 = vrot.slane %v1122, 7
      %v1125 = vor.u32 %v1121, %v1124
      %v1126 = vsel %vm1050, %v1116, %v1125
      %v1128 = vshrl.u32 %v1007, 16
      %v1130 = vrot.slane %v1128, 6
      %v1131 = vshll.u32 %v1007, 16
      %v1133 = vrot.slane %v1131, 7
      %v1134 = vor.u32 %v1130, %v1133
      %v1135 = vsel %vm1050, %v1125, %v1134
      %1136 = vrot.lane.b32.xlu0 %v1053, 56
      %v1137 = vpop.permute.xlu0 %1136
      %1138 = vrot.lane.b32.xlu0 %v1057, 56
      %v1139 = vpop.permute.xlu0 %1138
      %1140 = vrot.lane.b32.xlu0 %v1061, 56
      %v1141 = vpop.permute.xlu0 %1140
      %1142 = vrot.lane.b32.xlu0 %v1065, 56
      %v1143 = vpop.permute.xlu0 %1142
      %1144 = vrot.lane.b32.xlu0 %v1069, 56
      %v1145 = vpop.permute.xlu0 %1144
      %1146 = vrot.lane.b32.xlu0 %v1073, 56
      %v1147 = vpop.permute.xlu0 %1146
      %1148 = vrot.lane.b32.xlu0 %v1077, 56
      %v1149 = vpop.permute.xlu0 %1148
      %1150 = vrot.lane.b32.xlu0 %v1081, 56
      %v1151 = vpop.permute.xlu0 %1150
      %1152 = vrot.lane.b32.xlu0 %v1085, 56
      %v1153 = vpop.permute.xlu0 %1152
      %1154 = vrot.lane.b32.xlu0 %v1089, 56
      %v1155 = vpop.permute.xlu0 %1154
      %1156 = vrot.lane.b32.xlu0 %v1093, 56
      %v1157 = vpop.permute.xlu0 %1156
      %1158 = vrot.lane.b32.xlu0 %v1097, 56
      %v1159 = vpop.permute.xlu0 %1158
      %1160 = vrot.lane.b32.xlu0 %v1101, 56
      %v1161 = vpop.permute.xlu0 %1160
      %1162 = vrot.lane.b32.xlu0 %v1105, 56
      %v1163 = vpop.permute.xlu0 %1162
      %1164 = vrot.lane.b32.xlu0 %v1109, 56
      %v1165 = vpop.permute.xlu0 %1164
      %1166 = vrot.lane.b32.xlu0 %v1113, 56
      %v1167 = vpop.permute.xlu0 %1166
      %1168 = vrot.lane.b32.xlu0 %v1117, 56
      %v1169 = vpop.permute.xlu0 %1168
      %1170 = vrot.lane.b32.xlu0 %v1126, 56
      %v1171 = vpop.permute.xlu0 %1170
      %1172 = vrot.lane.b32.xlu0 %v1135, 56
      %v1173 = vpop.permute.xlu0 %1172
      %vm1174 = vcmask 1040384
      %v1175 = vrot.slane %v706, 7
      %v1176 = vrot.slane %v707, 7
      %v1177 = vsel %vm1174, %v1175, %v1176
      %v1178 = vrot.slane %v708, 7
      %v1179 = vsel %vm1174, %v1176, %v1178
      %v1180 = vrot.slane %v709, 7
      %v1181 = vsel %vm1174, %v1178, %v1180
      %v1182 = vrot.slane %v710, 7
      %v1183 = vsel %vm1174, %v1180, %v1182
      %v1184 = vrot.slane %v711, 7
      %v1185 = vsel %vm1174, %v1182, %v1184
      %v1186 = vrot.slane %v712, 7
      %v1187 = vsel %vm1174, %v1184, %v1186
      %v1188 = vrot.slane %v713, 7
      %v1189 = vsel %vm1174, %v1186, %v1188
      %v1190 = vrot.slane %v714, 7
      %v1191 = vsel %vm1174, %v1188, %v1190
      %v1192 = vrot.slane %v715, 7
      %v1193 = vsel %vm1174, %v1190, %v1192
      %v1194 = vrot.slane %v716, 7
      %v1195 = vsel %vm1174, %v1192, %v1194
      %v1196 = vrot.slane %v717, 7
      %v1197 = vsel %vm1174, %v1194, %v1196
      %v1198 = vrot.slane %v718, 7
      %v1199 = vsel %vm1174, %v1196, %v1198
      %v1200 = vrot.slane %v719, 7
      %v1201 = vsel %vm1174, %v1198, %v1200
      %v1202 = vrot.slane %v720, 7
      %v1203 = vsel %vm1174, %v1200, %v1202
      %v1204 = vrot.slane %v721, 7
      %v1205 = vsel %vm1174, %v1202, %v1204
      %v1206 = vrot.slane %v722, 7
      %v1207 = vsel %vm1174, %v1204, %v1206
      %v1208 = vrot.slane %v1006, 7
      %v1209 = vsel %vm1174, %v1206, %v1208
      %v1210 = vrot.slane %v1007, 7
      %v1211 = vsel %vm1174, %v1208, %v1210
      %1212 = vrot.lane.b32.xlu0 %v1175, 64
      %v1213 = vpop.permute.xlu0 %1212
      %1214 = vrot.lane.b32.xlu0 %v1177, 64
      %v1215 = vpop.permute.xlu0 %1214
      %1216 = vrot.lane.b32.xlu0 %v1179, 64
      %v1217 = vpop.permute.xlu0 %1216
      %1218 = vrot.lane.b32.xlu0 %v1181, 64
      %v1219 = vpop.permute.xlu0 %1218
      %1220 = vrot.lane.b32.xlu0 %v1183, 64
      %v1221 = vpop.permute.xlu0 %1220
      %1222 = vrot.lane.b32.xlu0 %v1185, 64
      %v1223 = vpop.permute.xlu0 %1222
      %1224 = vrot.lane.b32.xlu0 %v1187, 64
      %v1225 = vpop.permute.xlu0 %1224
      %1226 = vrot.lane.b32.xlu0 %v1189, 64
      %v1227 = vpop.permute.xlu0 %1226
      %1228 = vrot.lane.b32.xlu0 %v1191, 64
      %v1229 = vpop.permute.xlu0 %1228
      %1230 = vrot.lane.b32.xlu0 %v1193, 64
      %v1231 = vpop.permute.xlu0 %1230
      %1232 = vrot.lane.b32.xlu0 %v1195, 64
      %v1233 = vpop.permute.xlu0 %1232
      %1234 = vrot.lane.b32.xlu0 %v1197, 64
      %v1235 = vpop.permute.xlu0 %1234
      %1236 = vrot.lane.b32.xlu0 %v1199, 64
      %v1237 = vpop.permute.xlu0 %1236
      %1238 = vrot.lane.b32.xlu0 %v1201, 64
      %v1239 = vpop.permute.xlu0 %1238
      %1240 = vrot.lane.b32.xlu0 %v1203, 64
      %v1241 = vpop.permute.xlu0 %1240
      %1242 = vrot.lane.b32.xlu0 %v1205, 64
      %v1243 = vpop.permute.xlu0 %1242
      %1244 = vrot.lane.b32.xlu0 %v1207, 64
      %v1245 = vpop.permute.xlu0 %1244
      %1246 = vrot.lane.b32.xlu0 %v1209, 64
      %v1247 = vpop.permute.xlu0 %1246
      %1248 = vrot.lane.b32.xlu0 %v1211, 64
      %v1249 = vpop.permute.xlu0 %1248
      %vm1250 = vcmask 64512
      %v1252 = vsel %vm1250, %v372, %v544
      %v1254 = vsel %vm1250, %v373, %v546
      %v1256 = vsel %vm1250, %v374, %v548
      %v1258 = vsel %vm1250, %v375, %v550
      %v1260 = vsel %vm1250, %v376, %v552
      %v1262 = vsel %vm1250, %v377, %v554
      %v1264 = vsel %vm1250, %v378, %v556
      %v1266 = vsel %vm1250, %v379, %v558
      %v1268 = vsel %vm1250, %v380, %v560
      %v1270 = vsel %vm1250, %v381, %v562
      %v1272 = vsel %vm1250, %v382, %v564
      %v1274 = vsel %vm1250, %v383, %v566
      %v1276 = vsel %vm1250, %v384, %v568
      %v1278 = vsel %vm1250, %v385, %v570
      %v1280 = vsel %vm1250, %v386, %v572
      %v1282 = vsel %vm1250, %v387, %v574
      %v1284 = vsel %vm1250, %v388, %v576
      %v1286 = vsel %vm1250, %v389, %v578
      %v1288 = vsel %vm1250, %v390, %v580
      %vm1289 = vcmask 130048
      %v1291 = vsel %vm1289, %v1252, %v620
      %v1293 = vsel %vm1289, %v1254, %v622
      %v1295 = vsel %vm1289, %v1256, %v624
      %v1297 = vsel %vm1289, %v1258, %v626
      %v1299 = vsel %vm1289, %v1260, %v628
      %v1301 = vsel %vm1289, %v1262, %v630
      %v1303 = vsel %vm1289, %v1264, %v632
      %v1305 = vsel %vm1289, %v1266, %v634
      %v1307 = vsel %vm1289, %v1268, %v636
      %v1309 = vsel %vm1289, %v1270, %v638
      %v1311 = vsel %vm1289, %v1272, %v640
      %v1313 = vsel %vm1289, %v1274, %v642
      %v1315 = vsel %vm1289, %v1276, %v644
      %v1317 = vsel %vm1289, %v1278, %v646
      %v1319 = vsel %vm1289, %v1280, %v648
      %v1321 = vsel %vm1289, %v1282, %v650
      %v1323 = vsel %vm1289, %v1284, %v652
      %v1325 = vsel %vm1289, %v1286, %v654
      %v1327 = vsel %vm1289, %v1288, %v656
      %vm1328 = vcmask 195584
      %v1330 = vsel %vm1328, %v1291, %v668
      %v1332 = vsel %vm1328, %v1293, %v670
      %v1334 = vsel %vm1328, %v1295, %v672
      %v1336 = vsel %vm1328, %v1297, %v674
      %v1338 = vsel %vm1328, %v1299, %v676
      %v1340 = vsel %vm1328, %v1301, %v678
      %v1342 = vsel %vm1328, %v1303, %v680
      %v1344 = vsel %vm1328, %v1305, %v682
      %v1346 = vsel %vm1328, %v1307, %v684
      %v1348 = vsel %vm1328, %v1309, %v686
      %v1350 = vsel %vm1328, %v1311, %v688
      %v1352 = vsel %vm1328, %v1313, %v690
      %v1354 = vsel %vm1328, %v1315, %v692
      %v1356 = vsel %vm1328, %v1317, %v694
      %v1358 = vsel %vm1328, %v1319, %v696
      %v1360 = vsel %vm1328, %v1321, %v698
      %v1362 = vsel %vm1328, %v1323, %v700
      %v1364 = vsel %vm1328, %v1325, %v702
      %v1366 = vsel %vm1328, %v1327, %v704
      %vm1367 = vcmask 261120
      %v1369 = vsel %vm1367, %v1330, %v886
      %v1371 = vsel %vm1367, %v1332, %v888
      %v1373 = vsel %vm1367, %v1334, %v890
      %v1375 = vsel %vm1367, %v1336, %v892
      %v1377 = vsel %vm1367, %v1338, %v894
      %v1379 = vsel %vm1367, %v1340, %v896
      %v1381 = vsel %vm1367, %v1342, %v898
      %v1383 = vsel %vm1367, %v1344, %v900
      %v1385 = vsel %vm1367, %v1346, %v902
      %v1387 = vsel %vm1367, %v1348, %v904
      %v1389 = vsel %vm1367, %v1350, %v906
      %v1391 = vsel %vm1367, %v1352, %v908
      %v1393 = vsel %vm1367, %v1354, %v910
      %v1395 = vsel %vm1367, %v1356, %v912
      %v1397 = vsel %vm1367, %v1358, %v914
      %v1399 = vsel %vm1367, %v1360, %v916
      %v1401 = vsel %vm1367, %v1362, %v918
      %v1403 = vsel %vm1367, %v1364, %v920
      %v1405 = vsel %vm1367, %v1366, %v922
      %vm1406 = vcmask 326656
      %v1408 = vsel %vm1406, %v1369, %v965
      %v1410 = vsel %vm1406, %v1371, %v967
      %v1412 = vsel %vm1406, %v1373, %v969
      %v1414 = vsel %vm1406, %v1375, %v971
      %v1416 = vsel %vm1406, %v1377, %v973
      %v1418 = vsel %vm1406, %v1379, %v975
      %v1420 = vsel %vm1406, %v1381, %v977
      %v1422 = vsel %vm1406, %v1383, %v979
      %v1424 = vsel %vm1406, %v1385, %v981
      %v1426 = vsel %vm1406, %v1387, %v983
      %v1428 = vsel %vm1406, %v1389, %v985
      %v1430 = vsel %vm1406, %v1391, %v987
      %v1432 = vsel %vm1406, %v1393, %v989
      %v1434 = vsel %vm1406, %v1395, %v991
      %v1436 = vsel %vm1406, %v1397, %v993
      %v1438 = vsel %vm1406, %v1399, %v995
      %v1440 = vsel %vm1406, %v1401, %v997
      %v1442 = vsel %vm1406, %v1403, %v999
      %v1444 = vsel %vm1406, %v1405, %v1001
      %vm1445 = vcmask 392192
      %v1447 = vsel %vm1445, %v1408, %v1013
      %v1449 = vsel %vm1445, %v1410, %v1015
      %v1451 = vsel %vm1445, %v1412, %v1017
      %v1453 = vsel %vm1445, %v1414, %v1019
      %v1455 = vsel %vm1445, %v1416, %v1021
      %v1457 = vsel %vm1445, %v1418, %v1023
      %v1459 = vsel %vm1445, %v1420, %v1025
      %v1461 = vsel %vm1445, %v1422, %v1027
      %v1463 = vsel %vm1445, %v1424, %v1029
      %v1465 = vsel %vm1445, %v1426, %v1031
      %v1467 = vsel %vm1445, %v1428, %v1033
      %v1469 = vsel %vm1445, %v1430, %v1035
      %v1471 = vsel %vm1445, %v1432, %v1037
      %v1473 = vsel %vm1445, %v1434, %v1039
      %v1475 = vsel %vm1445, %v1436, %v1041
      %v1477 = vsel %vm1445, %v1438, %v1043
      %v1479 = vsel %vm1445, %v1440, %v1045
      %v1481 = vsel %vm1445, %v1442, %v1047
      %v1483 = vsel %vm1445, %v1444, %v1049
      %vm1484 = vcmask 457728
      %v1486 = vsel %vm1484, %v1447, %v1137
      %v1488 = vsel %vm1484, %v1449, %v1139
      %v1490 = vsel %vm1484, %v1451, %v1141
      %v1492 = vsel %vm1484, %v1453, %v1143
      %v1494 = vsel %vm1484, %v1455, %v1145
      %v1496 = vsel %vm1484, %v1457, %v1147
      %v1498 = vsel %vm1484, %v1459, %v1149
      %v1500 = vsel %vm1484, %v1461, %v1151
      %v1502 = vsel %vm1484, %v1463, %v1153
      %v1504 = vsel %vm1484, %v1465, %v1155
      %v1506 = vsel %vm1484, %v1467, %v1157
      %v1508 = vsel %vm1484, %v1469, %v1159
      %v1510 = vsel %vm1484, %v1471, %v1161
      %v1512 = vsel %vm1484, %v1473, %v1163
      %v1514 = vsel %vm1484, %v1475, %v1165
      %v1516 = vsel %vm1484, %v1477, %v1167
      %v1518 = vsel %vm1484, %v1479, %v1169
      %v1520 = vsel %vm1484, %v1481, %v1171
      %v1522 = vsel %vm1484, %v1483, %v1173
      %vm1523 = vcmask 523264
      %v1525 = vsel %vm1523, %v1486, %v1213
      %v1527 = vsel %vm1523, %v1488, %v1215
      %v1529 = vsel %vm1523, %v1490, %v1217
      %v1531 = vsel %vm1523, %v1492, %v1219
      %v1533 = vsel %vm1523, %v1494, %v1221
      %v1535 = vsel %vm1523, %v1496, %v1223
      %v1537 = vsel %vm1523, %v1498, %v1225
      %v1539 = vsel %vm1523, %v1500, %v1227
      %v1541 = vsel %vm1523, %v1502, %v1229
      %v1543 = vsel %vm1523, %v1504, %v1231
      %v1545 = vsel %vm1523, %v1506, %v1233
      %v1547 = vsel %vm1523, %v1508, %v1235
      %v1549 = vsel %vm1523, %v1510, %v1237
      %v1551 = vsel %vm1523, %v1512, %v1239
      %v1553 = vsel %vm1523, %v1514, %v1241
      %v1555 = vsel %vm1523, %v1516, %v1243
      %v1557 = vsel %vm1523, %v1518, %v1245
      %v1559 = vsel %vm1523, %v1520, %v1247
      %v1561 = vsel %vm1523, %v1522, %v1249
      %v1562 = vld [vmem:[%s1] sm:$0xf]
      %v1563 = vld [vmem:[%s1 + $0x4] sm:$0xf]
      %v1564 = vld [vmem:[%s1 + $0x8] sm:$0xf]
      %v1565 = vld [vmem:[%s1 + $0xc] sm:$0xf]
      %v1566 = vld [vmem:[%s1 + $0x10] sm:$0xf]
      %v1567 = vld [vmem:[%s1 + $0x14] sm:$0xf]
      %v1568 = vld [vmem:[%s1 + $0x18] sm:$0xf]
      %v1569 = vld [vmem:[%s1 + $0x1c] sm:$0xf]
      %v1570 = vld [vmem:[%s1 + $0x20] sm:$0xf]
      %v1571 = vld [vmem:[%s2] sm:$0x1]
      %v1573 = vlaneseq
      %v1574 = vshrl.u32 %v1573, 7
      %v1575 = vsub.s32 0, %v1574
      %v1576 = vrot.slane %v1571, %v1575
      %vm1578 = vsmask.f32 5376
      %v1579 = vshrl.u32 %v1525, 16
      %v1581 = vrot.slane %v1579, 2
      %v1582 = vshll.u32 %v1525, 16
      %v1584 = vrot.slane %v1582, 3
      %v1585 = vor.u32 %v1581, %v1584
      %v1586 = vshrl.u32 %v1527, 16
      %v1588 = vrot.slane %v1586, 2
      %v1589 = vshll.u32 %v1527, 16
      %v1591 = vrot.slane %v1589, 3
      %v1592 = vor.u32 %v1588, %v1591
      %v1593 = vsel %vm1578, %v1585, %v1592
      %v1594 = vshrl.u32 %v1529, 16
      %v1596 = vrot.slane %v1594, 2
      %v1597 = vshll.u32 %v1529, 16
      %v1599 = vrot.slane %v1597, 3
      %v1600 = vor.u32 %v1596, %v1599
      %v1601 = vsel %vm1578, %v1592, %v1600
      %v1602 = vshrl.u32 %v1531, 16
      %v1604 = vrot.slane %v1602, 2
      %v1605 = vshll.u32 %v1531, 16
      %v1607 = vrot.slane %v1605, 3
      %v1608 = vor.u32 %v1604, %v1607
      %v1609 = vsel %vm1578, %v1600, %v1608
      %v1610 = vshrl.u32 %v1533, 16
      %v1612 = vrot.slane %v1610, 2
      %v1613 = vshll.u32 %v1533, 16
      %v1615 = vrot.slane %v1613, 3
      %v1616 = vor.u32 %v1612, %v1615
      %v1617 = vsel %vm1578, %v1608, %v1616
      %v1618 = vshrl.u32 %v1535, 16
      %v1620 = vrot.slane %v1618, 2
      %v1621 = vshll.u32 %v1535, 16
      %v1623 = vrot.slane %v1621, 3
      %v1624 = vor.u32 %v1620, %v1623
      %v1625 = vsel %vm1578, %v1616, %v1624
      %v1626 = vshrl.u32 %v1537, 16
      %v1628 = vrot.slane %v1626, 2
      %v1629 = vshll.u32 %v1537, 16
      %v1631 = vrot.slane %v1629, 3
      %v1632 = vor.u32 %v1628, %v1631
      %v1633 = vsel %vm1578, %v1624, %v1632
      %v1634 = vshrl.u32 %v1539, 16
      %v1636 = vrot.slane %v1634, 2
      %v1637 = vshll.u32 %v1539, 16
      %v1639 = vrot.slane %v1637, 3
      %v1640 = vor.u32 %v1636, %v1639
      %v1641 = vsel %vm1578, %v1632, %v1640
      %v1642 = vshrl.u32 %v1541, 16
      %v1644 = vrot.slane %v1642, 2
      %v1645 = vshll.u32 %v1541, 16
      %v1647 = vrot.slane %v1645, 3
      %v1648 = vor.u32 %v1644, %v1647
      %v1649 = vsel %vm1578, %v1640, %v1648
      %v1650 = vshrl.u32 %v1543, 16
      %v1652 = vrot.slane %v1650, 2
      %v1653 = vshll.u32 %v1543, 16
      %v1655 = vrot.slane %v1653, 3
      %v1656 = vor.u32 %v1652, %v1655
      %v1657 = vsel %vm1578, %v1648, %v1656
      %v1658 = vshrl.u32 %v1545, 16
      %v1660 = vrot.slane %v1658, 2
      %v1661 = vshll.u32 %v1545, 16
      %v1663 = vrot.slane %v1661, 3
      %v1664 = vor.u32 %v1660, %v1663
      %v1665 = vsel %vm1578, %v1656, %v1664
      %v1666 = vshrl.u32 %v1547, 16
      %v1668 = vrot.slane %v1666, 2
      %v1669 = vshll.u32 %v1547, 16
      %v1671 = vrot.slane %v1669, 3
      %v1672 = vor.u32 %v1668, %v1671
      %v1673 = vsel %vm1578, %v1664, %v1672
      %v1674 = vshrl.u32 %v1549, 16
      %v1676 = vrot.slane %v1674, 2
      %v1677 = vshll.u32 %v1549, 16
      %v1679 = vrot.slane %v1677, 3
      %v1680 = vor.u32 %v1676, %v1679
      %v1681 = vsel %vm1578, %v1672, %v1680
      %v1682 = vshrl.u32 %v1551, 16
      %v1684 = vrot.slane %v1682, 2
      %v1685 = vshll.u32 %v1551, 16
      %v1687 = vrot.slane %v1685, 3
      %v1688 = vor.u32 %v1684, %v1687
      %v1689 = vsel %vm1578, %v1680, %v1688
      %v1690 = vshrl.u32 %v1553, 16
      %v1692 = vrot.slane %v1690, 2
      %v1693 = vshll.u32 %v1553, 16
      %v1695 = vrot.slane %v1693, 3
      %v1696 = vor.u32 %v1692, %v1695
      %v1697 = vsel %vm1578, %v1688, %v1696
      %v1698 = vshrl.u32 %v1555, 16
      %v1700 = vrot.slane %v1698, 2
      %v1701 = vshll.u32 %v1555, 16
      %v1703 = vrot.slane %v1701, 3
      %v1704 = vor.u32 %v1700, %v1703
      %v1705 = vsel %vm1578, %v1696, %v1704
      %v1706 = vshrl.u32 %v1557, 16
      %v1708 = vrot.slane %v1706, 2
      %v1709 = vshll.u32 %v1557, 16
      %v1711 = vrot.slane %v1709, 3
      %v1712 = vor.u32 %v1708, %v1711
      %v1713 = vsel %vm1578, %v1704, %v1712
      %v1714 = vshrl.u32 %v1559, 16
      %v1716 = vrot.slane %v1714, 2
      %v1717 = vshll.u32 %v1559, 16
      %v1719 = vrot.slane %v1717, 3
      %v1720 = vor.u32 %v1716, %v1719
      %v1721 = vsel %vm1578, %v1712, %v1720
      %v1722 = vshrl.u32 %v1561, 16
      %v1724 = vrot.slane %v1722, 2
      %v1725 = vshll.u32 %v1561, 16
      %v1727 = vrot.slane %v1725, 3
      %v1728 = vor.u32 %v1724, %v1727
      %v1729 = vsel %vm1578, %v1720, %v1728
      %v1739 = vunpack.c.l.b16 %v1562
      %v1740 = vunpack.c.l.b16 %v1563
      %v1741 = vunpack.c.l.b16 %v1564
      %v1742 = vunpack.c.l.b16 %v1565
      %v1743 = vunpack.c.l.b16 %v1566
      %v1744 = vunpack.c.l.b16 %v1567
      %v1745 = vunpack.c.l.b16 %v1568
      %v1746 = vunpack.c.l.b16 %v1569
      %v1747 = vunpack.c.l.b16 %v1570
      %v1748 = vpack.c.b16 %v1740, %v1739
      %v1749 = vpack.c.b16 %v1742, %v1741
      %v1750 = vpack.c.b16 %v1744, %v1743
      %v1751 = vpack.c.b16 %v1746, %v1745
      %v1752 = vpack.c.b16 %v1747, %v1747
      %vm1757 = vcmask 588800
      %v1759 = vsel %vm1757, %v1593, 0
      %v1762 = vsel %vm1757, %v1601, 0
      %v1765 = vsel %vm1757, %v1609, 0
      %v1768 = vsel %vm1757, %v1617, 0
      %v1771 = vsel %vm1757, %v1625, 0
      %v1774 = vsel %vm1757, %v1633, 0
      %v1777 = vsel %vm1757, %v1641, 0
      %v1780 = vsel %vm1757, %v1649, 0
      %v1783 = vsel %vm1757, %v1657, 0
      %v1786 = vsel %vm1757, %v1665, 0
      %v1789 = vsel %vm1757, %v1673, 0
      %v1792 = vsel %vm1757, %v1681, 0
      %v1795 = vsel %vm1757, %v1689, 0
      %v1798 = vsel %vm1757, %v1697, 0
      %v1801 = vsel %vm1757, %v1705, 0
      %v1804 = vsel %vm1757, %v1713, 0
      %v1807 = vsel %vm1757, %v1721, 0
      %v1810 = vsel %vm1757, %v1729, 0
      %vm1812 = vcmask 1043456
      %v1814 = vsel %vm1812, %v1752, 0
      %1816 = vmatprep.subr.bf16.mxu0 0
      %1817 = vmatpush1.bf16.msra.mxu0 %v1748
      %1818 = vmatprep.subr.bf16.mxu0 0
      %1819 = vmatpush1.bf16.msra.mxu0 %v1749
      %1820 = vmatprep.subr.bf16.mxu0 0
      %1821 = vmatpush1.bf16.msra.mxu0 %v1750
      %1822 = vmatprep.subr.bf16.mxu0 0
      %1823 = vmatpush1.bf16.msra.mxu0 %v1751
      %1824 = vmatprep.subr.bf16.mxu0 0
      %1825 = vmatpush1.bf16.msra.mxu0 %v1814
      %1826 = vmatprep.subr.bf16.mxu0 0
      %1827 = vmatpush1.bf16.msra.mxu0 0
      %1828 = vmatprep.subr.bf16.mxu0 0
      %1829 = vmatpush1.bf16.msra.mxu0 0
      %1830 = vmatprep.subr.bf16.mxu0 0
      %1831 = vmatpush1.bf16.msra.mxu0 0
      %1832 = vmatprep.subr.bf16.mxu0 0
      %1833 = vmatpush1.bf16.msra.mxu0 0
      %1834 = vmatprep.subr.bf16.mxu0 0
      %1835 = vmatpush1.bf16.msra.mxu0 0
      %1836 = vmatprep.subr.bf16.mxu0 0
      %1837 = vmatpush1.bf16.msra.mxu0 0
      %1838 = vmatprep.subr.bf16.mxu0 0
      %1839 = vmatpush1.bf16.msra.mxu0 0
      %1840 = vmatprep.subr.bf16.mxu0 0
      %1841 = vmatpush1.bf16.msra.mxu0 0
      %1842 = vmatprep.subr.bf16.mxu0 0
      %1843 = vmatpush1.bf16.msra.mxu0 0
      %1844 = vmatprep.subr.bf16.mxu0 0
      %1845 = vmatpush1.bf16.msra.mxu0 0
      %1846 = vmatprep.subr.bf16.mxu0 0
      %1847 = vmatpush1.bf16.msra.mxu0 0
      %1848 = vmatprep.mubr.bf16.mxu0 0
      %1849 = vmatmul.mubr.bf16.gmra.mrb[0].mxu0 %v1759
      %v1850 = vpop.f32.mrb[0].mxu0
      %v1851 = vadd.f32 %v1576, %v1850
      %v1852 = vpop.f32.mrb[0].mxu0
      %v1853 = vpop.f32.mrb[0].mxu0
      %v1854 = vadd.f32 %v1576, %v1853
      %v1855 = vpop.f32.mrb[0].mxu0
      %1856 = vmatprep.mubr.bf16.mxu0 0
      %1857 = vmatmul.mubr.bf16.gmra.mrb[0].mxu0 %v1762
      %v1858 = vpop.f32.mrb[0].mxu0
      %v1859 = vadd.f32 %v1576, %v1858
      %v1860 = vpop.f32.mrb[0].mxu0
      %v1861 = vpop.f32.mrb[0].mxu0
      %v1862 = vadd.f32 %v1576, %v1861
      %v1863 = vpop.f32.mrb[0].mxu0
      %1864 = vmatprep.mubr.bf16.mxu0 0
      %1865 = vmatmul.mubr.bf16.gmra.mrb[0].mxu0 %v1765
      %v1866 = vpop.f32.mrb[0].mxu0
      %v1867 = vadd.f32 %v1576, %v1866
      %v1868 = vpop.f32.mrb[0].mxu0
      %v1869 = vpop.f32.mrb[0].mxu0
      %v1870 = vadd.f32 %v1576, %v1869
      %v1871 = vpop.f32.mrb[0].mxu0
      %1872 = vmatprep.mubr.bf16.mxu0 0
      %1873 = vmatmul.mubr.bf16.gmra.mrb[0].mxu0 %v1768
      %v1874 = vpop.f32.mrb[0].mxu0
      %v1875 = vadd.f32 %v1576, %v1874
      %v1876 = vpop.f32.mrb[0].mxu0
      %v1877 = vpop.f32.mrb[0].mxu0
      %v1878 = vadd.f32 %v1576, %v1877
      %v1879 = vpop.f32.mrb[0].mxu0
      %1880 = vmatprep.mubr.bf16.mxu0 0
      %1881 = vmatmul.mubr.bf16.gmra.mrb[0].mxu0 %v1771
      %v1882 = vpop.f32.mrb[0].mxu0
      %v1883 = vadd.f32 %v1576, %v1882
      %v1884 = vpop.f32.mrb[0].mxu0
      %v1885 = vpop.f32.mrb[0].mxu0
      %v1886 = vadd.f32 %v1576, %v1885
      %v1887 = vpop.f32.mrb[0].mxu0
      %1888 = vmatprep.mubr.bf16.mxu0 0
      %1889 = vmatmul.mubr.bf16.gmra.mrb[0].mxu0 %v1774
      %v1890 = vpop.f32.mrb[0].mxu0
      %v1891 = vadd.f32 %v1576, %v1890
      %v1892 = vpop.f32.mrb[0].mxu0
      %v1893 = vpop.f32.mrb[0].mxu0
      %v1894 = vadd.f32 %v1576, %v1893
      %v1895 = vpop.f32.mrb[0].mxu0
      %1896 = vmatprep.mubr.bf16.mxu0 0
      %1897 = vmatmul.mubr.bf16.gmra.mrb[0].mxu0 %v1777
      %v1898 = vpop.f32.mrb[0].mxu0
      %v1899 = vadd.f32 %v1576, %v1898
      %v1900 = vpop.f32.mrb[0].mxu0
      %v1901 = vpop.f32.mrb[0].mxu0
      %v1902 = vadd.f32 %v1576, %v1901
      %v1903 = vpop.f32.mrb[0].mxu0
      %1904 = vmatprep.mubr.bf16.mxu0 0
      %1905 = vmatmul.mubr.bf16.gmra.mrb[0].mxu0 %v1780
      %v1906 = vpop.f32.mrb[0].mxu0
      %v1907 = vadd.f32 %v1576, %v1906
      %v1908 = vpop.f32.mrb[0].mxu0
      %v1909 = vpop.f32.mrb[0].mxu0
      %v1910 = vadd.f32 %v1576, %v1909
      %v1911 = vpop.f32.mrb[0].mxu0
      %1912 = vmatprep.mubr.bf16.mxu0 0
      %1913 = vmatmul.mubr.bf16.gmra.mrb[0].mxu0 %v1783
      %v1914 = vpop.f32.mrb[0].mxu0
      %v1915 = vadd.f32 %v1576, %v1914
      %v1916 = vpop.f32.mrb[0].mxu0
      %v1917 = vpop.f32.mrb[0].mxu0
      %v1918 = vadd.f32 %v1576, %v1917
      %v1919 = vpop.f32.mrb[0].mxu0
      %1920 = vmatprep.mubr.bf16.mxu0 0
      %1921 = vmatmul.mubr.bf16.gmra.mrb[0].mxu0 %v1786
      %v1922 = vpop.f32.mrb[0].mxu0
      %v1923 = vadd.f32 %v1576, %v1922
      %v1924 = vpop.f32.mrb[0].mxu0
      %v1925 = vpop.f32.mrb[0].mxu0
      %v1926 = vadd.f32 %v1576, %v1925
      %v1927 = vpop.f32.mrb[0].mxu0
      %1928 = vmatprep.mubr.bf16.mxu0 0
      %1929 = vmatmul.mubr.bf16.gmra.mrb[0].mxu0 %v1789
      %v1930 = vpop.f32.mrb[0].mxu0
      %v1931 = vadd.f32 %v1576, %v1930
      %v1932 = vpop.f32.mrb[0].mxu0
      %v1933 = vpop.f32.mrb[0].mxu0
      %v1934 = vadd.f32 %v1576, %v1933
      %v1935 = vpop.f32.mrb[0].mxu0
      %1936 = vmatprep.mubr.bf16.mxu0 0
      %1937 = vmatmul.mubr.bf16.gmra.mrb[0].mxu0 %v1792
      %v1938 = vpop.f32.mrb[0].mxu0
      %v1939 = vadd.f32 %v1576, %v1938
      %v1940 = vpop.f32.mrb[0].mxu0
      %v1941 = vpop.f32.mrb[0].mxu0
      %v1942 = vadd.f32 %v1576, %v1941
      %v1943 = vpop.f32.mrb[0].mxu0
      %1944 = vmatprep.mubr.bf16.mxu0 0
      %1945 = vmatmul.mubr.bf16.gmra.mrb[0].mxu0 %v1795
      %v1946 = vpop.f32.mrb[0].mxu0
      %v1947 = vadd.f32 %v1576, %v1946
      %v1948 = vpop.f32.mrb[0].mxu0
      %v1949 = vpop.f32.mrb[0].mxu0
      %v1950 = vadd.f32 %v1576, %v1949
      %v1951 = vpop.f32.mrb[0].mxu0
      %1952 = vmatprep.mubr.bf16.mxu0 0
      %1953 = vmatmul.mubr.bf16.gmra.mrb[0].mxu0 %v1798
      %v1954 = vpop.f32.mrb[0].mxu0
      %v1955 = vadd.f32 %v1576, %v1954
      %v1956 = vpop.f32.mrb[0].mxu0
      %v1957 = vpop.f32.mrb[0].mxu0
      %v1958 = vadd.f32 %v1576, %v1957
      %v1959 = vpop.f32.mrb[0].mxu0
      %1960 = vmatprep.mubr.bf16.mxu0 0
      %1961 = vmatmul.mubr.bf16.gmra.mrb[0].mxu0 %v1801
      %v1962 = vpop.f32.mrb[0].mxu0
      %v1963 = vadd.f32 %v1576, %v1962
      %v1964 = vpop.f32.mrb[0].mxu0
      %v1965 = vpop.f32.mrb[0].mxu0
      %v1966 = vadd.f32 %v1576, %v1965
      %v1967 = vpop.f32.mrb[0].mxu0
      %1968 = vmatprep.mubr.bf16.mxu0 0
      %1969 = vmatmul.mubr.bf16.gmra.mrb[0].mxu0 %v1804
      %v1970 = vpop.f32.mrb[0].mxu0
      %v1971 = vadd.f32 %v1576, %v1970
      %v1972 = vpop.f32.mrb[0].mxu0
      %v1973 = vpop.f32.mrb[0].mxu0
      %v1974 = vadd.f32 %v1576, %v1973
      %v1975 = vpop.f32.mrb[0].mxu0
      %1976 = vmatprep.mubr.bf16.mxu0 0
      %1977 = vmatmul.mubr.bf16.gmra.mrb[0].mxu0 %v1807
      %v1978 = vpop.f32.mrb[0].mxu0
      %v1979 = vadd.f32 %v1576, %v1978
      %v1980 = vpop.f32.mrb[0].mxu0
      %v1981 = vpop.f32.mrb[0].mxu0
      %v1982 = vadd.f32 %v1576, %v1981
      %v1983 = vpop.f32.mrb[0].mxu0
      %1984 = vmatprep.mubr.bf16.mxu0 0
      %1985 = vmatmul.mubr.bf16.gmra.mrb[0].mxu0 %v1810
      %v1986 = vpop.f32.mrb[0].mxu0
      %v1987 = vadd.f32 %v1576, %v1986
      %v1988 = vpop.f32.mrb[0].mxu0
      %v1989 = vpop.f32.mrb[0].mxu0
      %v1990 = vadd.f32 %v1576, %v1989
      %v1991 = vpop.f32.mrb[0].mxu0
      %1992 = vdwg.mxu0
      %v1993 = vmax.f32 %v1851, 0.0
      %v1994 = vmax.f32 %v1854, 0.0
      %v1995 = vmax.f32 %v1859, 0.0
      %v1996 = vmax.f32 %v1862, 0.0
      %v1997 = vmax.f32 %v1867, 0.0
      %v1998 = vmax.f32 %v1870, 0.0
      %v1999 = vmax.f32 %v1875, 0.0
      %v2000 = vmax.f32 %v1878, 0.0
      %v2001 = vmax.f32 %v1883, 0.0
      %v2002 = vmax.f32 %v1886, 0.0
      %v2003 = vmax.f32 %v1891, 0.0
      %v2004 = vmax.f32 %v1894, 0.0
      %v2005 = vmax.f32 %v1899, 0.0
      %v2006 = vmax.f32 %v1902, 0.0
      %v2007 = vmax.f32 %v1907, 0.0
      %v2008 = vmax.f32 %v1910, 0.0
      %v2009 = vmax.f32 %v1915, 0.0
      %v2010 = vmax.f32 %v1918, 0.0
      %v2011 = vmax.f32 %v1923, 0.0
      %v2012 = vmax.f32 %v1926, 0.0
      %v2013 = vmax.f32 %v1931, 0.0
      %v2014 = vmax.f32 %v1934, 0.0
      %v2015 = vmax.f32 %v1939, 0.0
      %v2016 = vmax.f32 %v1942, 0.0
      %v2017 = vmax.f32 %v1947, 0.0
      %v2018 = vmax.f32 %v1950, 0.0
      %v2019 = vmax.f32 %v1955, 0.0
      %v2020 = vmax.f32 %v1958, 0.0
      %v2021 = vmax.f32 %v1963, 0.0
      %v2022 = vmax.f32 %v1966, 0.0
      %v2023 = vmax.f32 %v1971, 0.0
      %v2024 = vmax.f32 %v1974, 0.0
      %v2025 = vmax.f32 %v1979, 0.0
      %v2026 = vmax.f32 %v1982, 0.0
      %v2027 = vmax.f32 %v1987, 0.0
      %v2028 = vmax.f32 %v1990, 0.0
      %v2029 = vpack.c.bf16 %v1994, %v1993
      %v2030 = vpack.c.bf16 %v1996, %v1995
      %v2031 = vpack.c.bf16 %v1998, %v1997
      %v2032 = vpack.c.bf16 %v2000, %v1999
      %v2033 = vpack.c.bf16 %v2002, %v2001
      %v2034 = vpack.c.bf16 %v2004, %v2003
      %v2035 = vpack.c.bf16 %v2006, %v2005
      %v2036 = vpack.c.bf16 %v2008, %v2007
      %v2037 = vpack.c.bf16 %v2010, %v2009
      %v2038 = vpack.c.bf16 %v2012, %v2011
      %v2039 = vpack.c.bf16 %v2014, %v2013
      %v2040 = vpack.c.bf16 %v2016, %v2015
      %v2041 = vpack.c.bf16 %v2018, %v2017
      %v2042 = vpack.c.bf16 %v2020, %v2019
      %v2043 = vpack.c.bf16 %v2022, %v2021
      %v2044 = vpack.c.bf16 %v2024, %v2023
      %v2045 = vpack.c.bf16 %v2026, %v2025
      %v2046 = vpack.c.bf16 %v2028, %v2027
      %v2047 = vld [vmem:[%s3] sm:$0xf]
      %v2048 = vunpack.c.l.bf16 %v259
      %v2049 = vunpack.c.l.bf16 %v260
      %v2050 = vunpack.c.l.bf16 %v261
      %v2051 = vunpack.c.l.bf16 %v262
      %v2052 = vunpack.c.l.bf16 %v263
      %v2053 = vunpack.c.l.bf16 %v264
      %v2054 = vunpack.c.l.bf16 %v265
      %v2055 = vunpack.c.l.bf16 %v266
      %v2056 = vunpack.c.l.bf16 %v267
      %v2057 = vunpack.c.l.bf16 %v268
      %v2058 = vunpack.c.l.bf16 %v269
      %v2059 = vunpack.c.l.bf16 %v270
      %v2060 = vunpack.c.l.bf16 %v271
      %v2061 = vunpack.c.l.bf16 %v272
      %v2062 = vunpack.c.l.bf16 %v273
      %v2063 = vunpack.c.l.bf16 %v274
      %v2064 = vunpack.c.l.bf16 %v275
      %v2065 = vunpack.c.l.bf16 %v276
      %v2066 = vunpack.c.l.bf16 %v277
      %v2067 = vunpack.c.l.bf16 %v278
      %v2068 = vunpack.c.l.bf16 %v279
      %v2069 = vunpack.c.l.bf16 %v280
      %v2070 = vunpack.c.l.bf16 %v281
      %v2071 = vunpack.c.l.bf16 %v282
      %v2072 = vunpack.c.l.bf16 %v283
      %v2073 = vunpack.c.l.bf16 %v284
      %v2074 = vunpack.c.l.bf16 %v285
      %v2075 = vunpack.c.l.bf16 %v286
      %v2076 = vunpack.c.l.bf16 %v287
      %v2077 = vunpack.c.l.bf16 %v288
      %v2078 = vunpack.c.l.bf16 %v289
      %v2079 = vunpack.c.l.bf16 %v290
      %v2080 = vunpack.c.l.bf16 %v291
      %v2081 = vunpack.c.l.bf16 %v292
      %v2082 = vunpack.c.l.bf16 %v293
      %v2083 = vunpack.c.l.bf16 %v294
      %v2085 = vsel %vm1250, %v2029, 0
      %v2088 = vsel %vm1250, %v2030, 0
      %v2091 = vsel %vm1250, %v2031, 0
      %v2094 = vsel %vm1250, %v2032, 0
      %v2097 = vsel %vm1250, %v2033, 0
      %v2100 = vsel %vm1250, %v2034, 0
      %v2103 = vsel %vm1250, %v2035, 0
      %v2106 = vsel %vm1250, %v2036, 0
      %v2109 = vsel %vm1250, %v2037, 0
      %v2112 = vsel %vm1250, %v2038, 0
      %v2115 = vsel %vm1250, %v2039, 0
      %v2118 = vsel %vm1250, %v2040, 0
      %v2121 = vsel %vm1250, %v2041, 0
      %v2124 = vsel %vm1250, %v2042, 0
      %v2127 = vsel %vm1250, %v2043, 0
      %v2130 = vsel %vm1250, %v2044, 0
      %v2133 = vsel %vm1250, %v2045, 0
      %v2136 = vsel %vm1250, %v2046, 0
      %v2139 = vsel %vm1812, %v2047, 0
      %2141 = vmatprep.subr.bf16.mxu0 0
      %2142 = vmatpush1.bf16.msra.mxu0 %v2139
      %2143 = vmatprep.subr.bf16.mxu0 0
      %2144 = vmatpush1.bf16.msra.mxu0 0
      %2145 = vmatprep.subr.bf16.mxu0 0
      %2146 = vmatpush1.bf16.msra.mxu0 0
      %2147 = vmatprep.subr.bf16.mxu0 0
      %2148 = vmatpush1.bf16.msra.mxu0 0
      %2149 = vmatprep.subr.bf16.mxu0 0
      %2150 = vmatpush1.bf16.msra.mxu0 0
      %2151 = vmatprep.subr.bf16.mxu0 0
      %2152 = vmatpush1.bf16.msra.mxu0 0
      %2153 = vmatprep.subr.bf16.mxu0 0
      %2154 = vmatpush1.bf16.msra.mxu0 0
      %2155 = vmatprep.subr.bf16.mxu0 0
      %2156 = vmatpush1.bf16.msra.mxu0 0
      %2157 = vmatprep.subr.bf16.mxu0 0
      %2158 = vmatpush1.bf16.msra.mxu0 0
      %2159 = vmatprep.subr.bf16.mxu0 0
      %2160 = vmatpush1.bf16.msra.mxu0 0
      %2161 = vmatprep.subr.bf16.mxu0 0
      %2162 = vmatpush1.bf16.msra.mxu0 0
      %2163 = vmatprep.subr.bf16.mxu0 0
      %2164 = vmatpush1.bf16.msra.mxu0 0
      %2165 = vmatprep.subr.bf16.mxu0 0
      %2166 = vmatpush1.bf16.msra.mxu0 0
      %2167 = vmatprep.subr.bf16.mxu0 0
      %2168 = vmatpush1.bf16.msra.mxu0 0
      %2169 = vmatprep.subr.bf16.mxu0 0
      %2170 = vmatpush1.bf16.msra.mxu0 0
      %2171 = vmatprep.subr.bf16.mxu0 0
      %2172 = vmatpush1.bf16.msra.mxu0 0
      %2173 = vmatprep.mubr.bf16.mxu0 0
      %2174 = vmatmul.mubr.bf16.gmra.mrb[0].mxu0 %v2085
      %v2175 = vpop.f32.mrb[0].mxu0
      %v2176 = vadd.f32 %v2048, %v2175
      %v2177 = vpop.f32.mrb[0].mxu0
      %v2178 = vpop.f32.mrb[0].mxu0
      %v2179 = vadd.f32 %v2049, %v2178
      %v2180 = vpop.f32.mrb[0].mxu0
      %2181 = vmatprep.mubr.bf16.mxu0 0
      %2182 = vmatmul.mubr.bf16.gmra.mrb[0].mxu0 %v2088
      %v2183 = vpop.f32.mrb[0].mxu0
      %v2184 = vadd.f32 %v2050, %v2183
      %v2185 = vpop.f32.mrb[0].mxu0
      %v2186 = vpop.f32.mrb[0].mxu0
      %v2187 = vadd.f32 %v2051, %v2186
      %v2188 = vpop.f32.mrb[0].mxu0
      %2189 = vmatprep.mubr.bf16.mxu0 0
      %2190 = vmatmul.mubr.bf16.gmra.mrb[0].mxu0 %v2091
      %v2191 = vpop.f32.mrb[0].mxu0
      %v2192 = vadd.f32 %v2052, %v2191
      %v2193 = vpop.f32.mrb[0].mxu0
      %v2194 = vpop.f32.mrb[0].mxu0
      %v2195 = vadd.f32 %v2053, %v2194
      %v2196 = vpop.f32.mrb[0].mxu0
      %2197 = vmatprep.mubr.bf16.mxu0 0
      %2198 = vmatmul.mubr.bf16.gmra.mrb[0].mxu0 %v2094
      %v2199 = vpop.f32.mrb[0].mxu0
      %v2200 = vadd.f32 %v2054, %v2199
      %v2201 = vpop.f32.mrb[0].mxu0
      %v2202 = vpop.f32.mrb[0].mxu0
      %v2203 = vadd.f32 %v2055, %v2202
      %v2204 = vpop.f32.mrb[0].mxu0
      %2205 = vmatprep.mubr.bf16.mxu0 0
      %2206 = vmatmul.mubr.bf16.gmra.mrb[0].mxu0 %v2097
      %v2207 = vpop.f32.mrb[0].mxu0
      %v2208 = vadd.f32 %v2056, %v2207
      %v2209 = vpop.f32.mrb[0].mxu0
      %v2210 = vpop.f32.mrb[0].mxu0
      %v2211 = vadd.f32 %v2057, %v2210
      %v2212 = vpop.f32.mrb[0].mxu0
      %2213 = vmatprep.mubr.bf16.mxu0 0
      %2214 = vmatmul.mubr.bf16.gmra.mrb[0].mxu0 %v2100
      %v2215 = vpop.f32.mrb[0].mxu0
      %v2216 = vadd.f32 %v2058, %v2215
      %v2217 = vpop.f32.mrb[0].mxu0
      %v2218 = vpop.f32.mrb[0].mxu0
      %v2219 = vadd.f32 %v2059, %v2218
      %v2220 = vpop.f32.mrb[0].mxu0
      %2221 = vmatprep.mubr.bf16.mxu0 0
      %2222 = vmatmul.mubr.bf16.gmra.mrb[0].mxu0 %v2103
      %v2223 = vpop.f32.mrb[0].mxu0
      %v2224 = vadd.f32 %v2060, %v2223
      %v2225 = vpop.f32.mrb[0].mxu0
      %v2226 = vpop.f32.mrb[0].mxu0
      %v2227 = vadd.f32 %v2061, %v2226
      %v2228 = vpop.f32.mrb[0].mxu0
      %2229 = vmatprep.mubr.bf16.mxu0 0
      %2230 = vmatmul.mubr.bf16.gmra.mrb[0].mxu0 %v2106
      %v2231 = vpop.f32.mrb[0].mxu0
      %v2232 = vadd.f32 %v2062, %v2231
      %v2233 = vpop.f32.mrb[0].mxu0
      %v2234 = vpop.f32.mrb[0].mxu0
      %v2235 = vadd.f32 %v2063, %v2234
      %v2236 = vpop.f32.mrb[0].mxu0
      %2237 = vmatprep.mubr.bf16.mxu0 0
      %2238 = vmatmul.mubr.bf16.gmra.mrb[0].mxu0 %v2109
      %v2239 = vpop.f32.mrb[0].mxu0
      %v2240 = vadd.f32 %v2064, %v2239
      %v2241 = vpop.f32.mrb[0].mxu0
      %v2242 = vpop.f32.mrb[0].mxu0
      %v2243 = vadd.f32 %v2065, %v2242
      %v2244 = vpop.f32.mrb[0].mxu0
      %2245 = vmatprep.mubr.bf16.mxu0 0
      %2246 = vmatmul.mubr.bf16.gmra.mrb[0].mxu0 %v2112
      %v2247 = vpop.f32.mrb[0].mxu0
      %v2248 = vadd.f32 %v2066, %v2247
      %v2249 = vpop.f32.mrb[0].mxu0
      %v2250 = vpop.f32.mrb[0].mxu0
      %v2251 = vadd.f32 %v2067, %v2250
      %v2252 = vpop.f32.mrb[0].mxu0
      %2253 = vmatprep.mubr.bf16.mxu0 0
      %2254 = vmatmul.mubr.bf16.gmra.mrb[0].mxu0 %v2115
      %v2255 = vpop.f32.mrb[0].mxu0
      %v2256 = vadd.f32 %v2068, %v2255
      %v2257 = vpop.f32.mrb[0].mxu0
      %v2258 = vpop.f32.mrb[0].mxu0
      %v2259 = vadd.f32 %v2069, %v2258
      %v2260 = vpop.f32.mrb[0].mxu0
      %2261 = vmatprep.mubr.bf16.mxu0 0
      %2262 = vmatmul.mubr.bf16.gmra.mrb[0].mxu0 %v2118
      %v2263 = vpop.f32.mrb[0].mxu0
      %v2264 = vadd.f32 %v2070, %v2263
      %v2265 = vpop.f32.mrb[0].mxu0
      %v2266 = vpop.f32.mrb[0].mxu0
      %v2267 = vadd.f32 %v2071, %v2266
      %v2268 = vpop.f32.mrb[0].mxu0
      %2269 = vmatprep.mubr.bf16.mxu0 0
      %2270 = vmatmul.mubr.bf16.gmra.mrb[0].mxu0 %v2121
      %v2271 = vpop.f32.mrb[0].mxu0
      %v2272 = vadd.f32 %v2072, %v2271
      %v2273 = vpop.f32.mrb[0].mxu0
      %v2274 = vpop.f32.mrb[0].mxu0
      %v2275 = vadd.f32 %v2073, %v2274
      %v2276 = vpop.f32.mrb[0].mxu0
      %2277 = vmatprep.mubr.bf16.mxu0 0
      %2278 = vmatmul.mubr.bf16.gmra.mrb[0].mxu0 %v2124
      %v2279 = vpop.f32.mrb[0].mxu0
      %v2280 = vadd.f32 %v2074, %v2279
      %v2281 = vpop.f32.mrb[0].mxu0
      %v2282 = vpop.f32.mrb[0].mxu0
      %v2283 = vadd.f32 %v2075, %v2282
      %v2284 = vpop.f32.mrb[0].mxu0
      %2285 = vmatprep.mubr.bf16.mxu0 0
      %2286 = vmatmul.mubr.bf16.gmra.mrb[0].mxu0 %v2127
      %v2287 = vpop.f32.mrb[0].mxu0
      %v2288 = vadd.f32 %v2076, %v2287
      %v2289 = vpop.f32.mrb[0].mxu0
      %v2290 = vpop.f32.mrb[0].mxu0
      %v2291 = vadd.f32 %v2077, %v2290
      %v2292 = vpop.f32.mrb[0].mxu0
      %2293 = vmatprep.mubr.bf16.mxu0 0
      %2294 = vmatmul.mubr.bf16.gmra.mrb[0].mxu0 %v2130
      %v2295 = vpop.f32.mrb[0].mxu0
      %v2296 = vadd.f32 %v2078, %v2295
      %v2297 = vpop.f32.mrb[0].mxu0
      %v2298 = vpop.f32.mrb[0].mxu0
      %v2299 = vadd.f32 %v2079, %v2298
      %v2300 = vpop.f32.mrb[0].mxu0
      %2301 = vmatprep.mubr.bf16.mxu0 0
      %2302 = vmatmul.mubr.bf16.gmra.mrb[0].mxu0 %v2133
      %v2303 = vpop.f32.mrb[0].mxu0
      %v2304 = vadd.f32 %v2080, %v2303
      %v2305 = vpop.f32.mrb[0].mxu0
      %v2306 = vpop.f32.mrb[0].mxu0
      %v2307 = vadd.f32 %v2081, %v2306
      %v2308 = vpop.f32.mrb[0].mxu0
      %2309 = vmatprep.mubr.bf16.mxu0 0
      %2310 = vmatmul.mubr.bf16.gmra.mrb[0].mxu0 %v2136
      %v2311 = vpop.f32.mrb[0].mxu0
      %v2312 = vadd.f32 %v2082, %v2311
      %v2313 = vpop.f32.mrb[0].mxu0
      %v2314 = vpop.f32.mrb[0].mxu0
      %v2315 = vadd.f32 %v2083, %v2314
      %v2316 = vpop.f32.mrb[0].mxu0
      %2317 = vdwg.mxu0
      %v2318 = vld [vmem:[%s4] sm:$0x1]
      %v2320 = vlaneseq
      %v2321 = vshrl.u32 %v2320, 7
      %v2322 = vsub.s32 0, %v2321
      %v2323 = vrot.slane %v2318, %v2322
      %v2325 = vadd.f32 %v2176, %v2323
      %v2326 = vadd.f32 %v2179, %v2323
      %v2327 = vadd.f32 %v2184, %v2323
      %v2328 = vadd.f32 %v2187, %v2323
      %v2329 = vadd.f32 %v2192, %v2323
      %v2330 = vadd.f32 %v2195, %v2323
      %v2331 = vadd.f32 %v2200, %v2323
      %v2332 = vadd.f32 %v2203, %v2323
      %v2333 = vadd.f32 %v2208, %v2323
      %v2334 = vadd.f32 %v2211, %v2323
      %v2335 = vadd.f32 %v2216, %v2323
      %v2336 = vadd.f32 %v2219, %v2323
      %v2337 = vadd.f32 %v2224, %v2323
      %v2338 = vadd.f32 %v2227, %v2323
      %v2339 = vadd.f32 %v2232, %v2323
      %v2340 = vadd.f32 %v2235, %v2323
      %v2341 = vadd.f32 %v2240, %v2323
      %v2342 = vadd.f32 %v2243, %v2323
      %v2343 = vadd.f32 %v2248, %v2323
      %v2344 = vadd.f32 %v2251, %v2323
      %v2345 = vadd.f32 %v2256, %v2323
      %v2346 = vadd.f32 %v2259, %v2323
      %v2347 = vadd.f32 %v2264, %v2323
      %v2348 = vadd.f32 %v2267, %v2323
      %v2349 = vadd.f32 %v2272, %v2323
      %v2350 = vadd.f32 %v2275, %v2323
      %v2351 = vadd.f32 %v2280, %v2323
      %v2352 = vadd.f32 %v2283, %v2323
      %v2353 = vadd.f32 %v2288, %v2323
      %v2354 = vadd.f32 %v2291, %v2323
      %v2355 = vadd.f32 %v2296, %v2323
      %v2356 = vadd.f32 %v2299, %v2323
      %v2357 = vadd.f32 %v2304, %v2323
      %v2358 = vadd.f32 %v2307, %v2323
      %v2359 = vadd.f32 %v2312, %v2323
      %v2360 = vadd.f32 %v2315, %v2323
      %v2361 = vmax.f32 %v2325, 0.0
      %v2362 = vmax.f32 %v2326, 0.0
      %v2363 = vmax.f32 %v2327, 0.0
      %v2364 = vmax.f32 %v2328, 0.0
      %v2365 = vmax.f32 %v2329, 0.0
      %v2366 = vmax.f32 %v2330, 0.0
      %v2367 = vmax.f32 %v2331, 0.0
      %v2368 = vmax.f32 %v2332, 0.0
      %v2369 = vmax.f32 %v2333, 0.0
      %v2370 = vmax.f32 %v2334, 0.0
      %v2371 = vmax.f32 %v2335, 0.0
      %v2372 = vmax.f32 %v2336, 0.0
      %v2373 = vmax.f32 %v2337, 0.0
      %v2374 = vmax.f32 %v2338, 0.0
      %v2375 = vmax.f32 %v2339, 0.0
      %v2376 = vmax.f32 %v2340, 0.0
      %v2377 = vmax.f32 %v2341, 0.0
      %v2378 = vmax.f32 %v2342, 0.0
      %v2379 = vmax.f32 %v2343, 0.0
      %v2380 = vmax.f32 %v2344, 0.0
      %v2381 = vmax.f32 %v2345, 0.0
      %v2382 = vmax.f32 %v2346, 0.0
      %v2383 = vmax.f32 %v2347, 0.0
      %v2384 = vmax.f32 %v2348, 0.0
      %v2385 = vmax.f32 %v2349, 0.0
      %v2386 = vmax.f32 %v2350, 0.0
      %v2387 = vmax.f32 %v2351, 0.0
      %v2388 = vmax.f32 %v2352, 0.0
      %v2389 = vmax.f32 %v2353, 0.0
      %v2390 = vmax.f32 %v2354, 0.0
      %v2391 = vmax.f32 %v2355, 0.0
      %v2392 = vmax.f32 %v2356, 0.0
      %v2393 = vmax.f32 %v2357, 0.0
      %v2394 = vmax.f32 %v2358, 0.0
      %v2395 = vmax.f32 %v2359, 0.0
      %v2396 = vmax.f32 %v2360, 0.0
      %v2397 = vld [vmem:[%s5] sm:$0xff]
      %v2398 = vld [vmem:[%s5 + $0x8] sm:$0xff]
      %v2399 = vld [vmem:[%s5 + $0x10] sm:$0xff]
      %v2400 = vld [vmem:[%s5 + $0x18] sm:$0xff]
      %v2401 = vld [vmem:[%s5 + $0x20] sm:$0xff]
      %v2402 = vld [vmem:[%s5 + $0x28] sm:$0xff]
      %v2403 = vld [vmem:[%s5 + $0x30] sm:$0xff]
      %v2404 = vld [vmem:[%s5 + $0x38] sm:$0xff]
      %v2405 = vld [vmem:[%s5 + $0x40] sm:$0xff]
      %v2406 = vld [vmem:[%s5 + $0x48] sm:$0xff]
      %v2407 = vld [vmem:[%s5 + $0x50] sm:$0xff]
      %v2408 = vld [vmem:[%s5 + $0x58] sm:$0xff]
      %v2409 = vld [vmem:[%s5 + $0x60] sm:$0xff]
      %v2410 = vld [vmem:[%s5 + $0x68] sm:$0xff]
      %v2411 = vld [vmem:[%s5 + $0x70] sm:$0xff]
      %v2412 = vld [vmem:[%s5 + $0x78] sm:$0xff]
      %v2413 = vld [vmem:[%s5 + $0x80] sm:$0xff]
      %v2414 = vld [vmem:[%s5 + $0x88] sm:$0xff]
      %v2415 = vld [vmem:[%s5 + $0x90] sm:$0xff]
      %v2416 = vld [vmem:[%s5 + $0x98] sm:$0xff]
      %v2417 = vld [vmem:[%s5 + $0xa0] sm:$0xff]
      %v2418 = vld [vmem:[%s5 + $0xa8] sm:$0xff]
      %v2419 = vld [vmem:[%s5 + $0xb0] sm:$0xff]
      %v2420 = vld [vmem:[%s5 + $0xb8] sm:$0xff]
      %v2421 = vld [vmem:[%s5 + $0xc0] sm:$0xff]
      %v2422 = vld [vmem:[%s5 + $0xc8] sm:$0xff]
      %v2423 = vld [vmem:[%s5 + $0xd0] sm:$0xff]
      %v2424 = vld [vmem:[%s5 + $0xd8] sm:$0xff]
      %v2425 = vld [vmem:[%s5 + $0xe0] sm:$0xff]
      %v2426 = vld [vmem:[%s5 + $0xe8] sm:$0xff]
      %v2427 = vld [vmem:[%s5 + $0xf0] sm:$0xff]
      %v2428 = vld [vmem:[%s5 + $0xf8] sm:$0xff]
      %v2429 = vld [vmem:[%s5 + $0x100] sm:$0xff]
      %v2430 = vld [vmem:[%s5 + $0x108] sm:$0xff]
      %v2431 = vld [vmem:[%s5 + $0x110] sm:$0xff]
      %v2432 = vld [vmem:[%s5 + $0x118] sm:$0xff]
      %2434 = vset.pattern.permute.xlu0 0
      %2435 = vperm.xlu0 %2434, %v2397
      %v2436 = vpop.permute.xlu0 %2435
      %2439 = vset.pattern.permute.xlu0 0
      %2440 = vperm.xlu0 %2439, %v2398
      %v2441 = vpop.permute.xlu0 %2440
      %2444 = vset.pattern.permute.xlu0 0
      %2445 = vperm.xlu0 %2444, %v2399
      %v2446 = vpop.permute.xlu0 %2445
      %2449 = vset.pattern.permute.xlu0 0
      %2450 = vperm.xlu0 %2449, %v2400
      %v2451 = vpop.permute.xlu0 %2450
      %2454 = vset.pattern.permute.xlu0 0
      %2455 = vperm.xlu0 %2454, %v2401
      %v2456 = vpop.permute.xlu0 %2455
      %2459 = vset.pattern.permute.xlu0 0
      %2460 = vperm.xlu0 %2459, %v2402
      %v2461 = vpop.permute.xlu0 %2460
      %2464 = vset.pattern.permute.xlu0 0
      %2465 = vperm.xlu0 %2464, %v2403
      %v2466 = vpop.permute.xlu0 %2465
      %2469 = vset.pattern.permute.xlu0 0
      %2470 = vperm.xlu0 %2469, %v2404
      %v2471 = vpop.permute.xlu0 %2470
      %2474 = vset.pattern.permute.xlu0 0
      %2475 = vperm.xlu0 %2474, %v2405
      %v2476 = vpop.permute.xlu0 %2475
      %2479 = vset.pattern.permute.xlu0 0
      %2480 = vperm.xlu0 %2479, %v2406
      %v2481 = vpop.permute.xlu0 %2480
      %2484 = vset.pattern.permute.xlu0 0
      %2485 = vperm.xlu0 %2484, %v2407
      %v2486 = vpop.permute.xlu0 %2485
      %2489 = vset.pattern.permute.xlu0 0
      %2490 = vperm.xlu0 %2489, %v2408
      %v2491 = vpop.permute.xlu0 %2490
      %2494 = vset.pattern.permute.xlu0 0
      %2495 = vperm.xlu0 %2494, %v2409
      %v2496 = vpop.permute.xlu0 %2495
      %2499 = vset.pattern.permute.xlu0 0
      %2500 = vperm.xlu0 %2499, %v2410
      %v2501 = vpop.permute.xlu0 %2500
      %2504 = vset.pattern.permute.xlu0 0
      %2505 = vperm.xlu0 %2504, %v2411
      %v2506 = vpop.permute.xlu0 %2505
      %2509 = vset.pattern.permute.xlu0 0
      %2510 = vperm.xlu0 %2509, %v2412
      %v2511 = vpop.permute.xlu0 %2510
      %2514 = vset.pattern.permute.xlu0 0
      %2515 = vperm.xlu0 %2514, %v2413
      %v2516 = vpop.permute.xlu0 %2515
      %2519 = vset.pattern.permute.xlu0 0
      %2520 = vperm.xlu0 %2519, %v2414
      %v2521 = vpop.permute.xlu0 %2520
      %2524 = vset.pattern.permute.xlu0 0
      %2525 = vperm.xlu0 %2524, %v2415
      %v2526 = vpop.permute.xlu0 %2525
      %2529 = vset.pattern.permute.xlu0 0
      %2530 = vperm.xlu0 %2529, %v2416
      %v2531 = vpop.permute.xlu0 %2530
      %2534 = vset.pattern.permute.xlu0 0
      %2535 = vperm.xlu0 %2534, %v2417
      %v2536 = vpop.permute.xlu0 %2535
      %2539 = vset.pattern.permute.xlu0 0
      %2540 = vperm.xlu0 %2539, %v2418
      %v2541 = vpop.permute.xlu0 %2540
      %2544 = vset.pattern.permute.xlu0 0
      %2545 = vperm.xlu0 %2544, %v2419
      %v2546 = vpop.permute.xlu0 %2545
      %2549 = vset.pattern.permute.xlu0 0
      %2550 = vperm.xlu0 %2549, %v2420
      %v2551 = vpop.permute.xlu0 %2550
      %2554 = vset.pattern.permute.xlu0 0
      %2555 = vperm.xlu0 %2554, %v2421
      %v2556 = vpop.permute.xlu0 %2555
      %2559 = vset.pattern.permute.xlu0 0
      %2560 = vperm.xlu0 %2559, %v2422
      %v2561 = vpop.permute.xlu0 %2560
      %2564 = vset.pattern.permute.xlu0 0
      %2565 = vperm.xlu0 %2564, %v2423
      %v2566 = vpop.permute.xlu0 %2565
      %2569 = vset.pattern.permute.xlu0 0
      %2570 = vperm.xlu0 %2569, %v2424
      %v2571 = vpop.permute.xlu0 %2570
      %2574 = vset.pattern.permute.xlu0 0
      %2575 = vperm.xlu0 %2574, %v2425
      %v2576 = vpop.permute.xlu0 %2575
      %2579 = vset.pattern.permute.xlu0 0
      %2580 = vperm.xlu0 %2579, %v2426
      %v2581 = vpop.permute.xlu0 %2580
      %2584 = vset.pattern.permute.xlu0 0
      %2585 = vperm.xlu0 %2584, %v2427
      %v2586 = vpop.permute.xlu0 %2585
      %2589 = vset.pattern.permute.xlu0 0
      %2590 = vperm.xlu0 %2589, %v2428
      %v2591 = vpop.permute.xlu0 %2590
      %2594 = vset.pattern.permute.xlu0 0
      %2595 = vperm.xlu0 %2594, %v2429
      %v2596 = vpop.permute.xlu0 %2595
      %2599 = vset.pattern.permute.xlu0 0
      %2600 = vperm.xlu0 %2599, %v2430
      %v2601 = vpop.permute.xlu0 %2600
      %2604 = vset.pattern.permute.xlu0 0
      %2605 = vperm.xlu0 %2604, %v2431
      %v2606 = vpop.permute.xlu0 %2605
      %2609 = vset.pattern.permute.xlu0 0
      %2610 = vperm.xlu0 %2609, %v2432
      %v2611 = vpop.permute.xlu0 %2610
      %v2613 = vmul.f32 %v2361, %v2436
      %v2614 = vmul.f32 %v2362, %v2441
      %v2615 = vmul.f32 %v2363, %v2446
      %v2616 = vmul.f32 %v2364, %v2451
      %v2617 = vmul.f32 %v2365, %v2456
      %v2618 = vmul.f32 %v2366, %v2461
      %v2619 = vmul.f32 %v2367, %v2466
      %v2620 = vmul.f32 %v2368, %v2471
      %v2621 = vmul.f32 %v2369, %v2476
      %v2622 = vmul.f32 %v2370, %v2481
      %v2623 = vmul.f32 %v2371, %v2486
      %v2624 = vmul.f32 %v2372, %v2491
      %v2625 = vmul.f32 %v2373, %v2496
      %v2626 = vmul.f32 %v2374, %v2501
      %v2627 = vmul.f32 %v2375, %v2506
      %v2628 = vmul.f32 %v2376, %v2511
      %v2629 = vmul.f32 %v2377, %v2516
      %v2630 = vmul.f32 %v2378, %v2521
      %v2631 = vmul.f32 %v2379, %v2526
      %v2632 = vmul.f32 %v2380, %v2531
      %v2633 = vmul.f32 %v2381, %v2536
      %v2634 = vmul.f32 %v2382, %v2541
      %v2635 = vmul.f32 %v2383, %v2546
      %v2636 = vmul.f32 %v2384, %v2551
      %v2637 = vmul.f32 %v2385, %v2556
      %v2638 = vmul.f32 %v2386, %v2561
      %v2639 = vmul.f32 %v2387, %v2566
      %v2640 = vmul.f32 %v2388, %v2571
      %v2641 = vmul.f32 %v2389, %v2576
      %v2642 = vmul.f32 %v2390, %v2581
      %v2643 = vmul.f32 %v2391, %v2586
      %v2644 = vmul.f32 %v2392, %v2591
      %v2645 = vmul.f32 %v2393, %v2596
      %v2646 = vmul.f32 %v2394, %v2601
      %v2647 = vmul.f32 %v2395, %v2606
      %v2648 = vmul.f32 %v2396, %v2611
      %v2649 = vpack.c.bf16 %v2614, %v2613
      %v2650 = vpack.c.bf16 %v2616, %v2615
      %v2651 = vpack.c.bf16 %v2618, %v2617
      %v2652 = vpack.c.bf16 %v2620, %v2619
      %v2653 = vpack.c.bf16 %v2622, %v2621
      %v2654 = vpack.c.bf16 %v2624, %v2623
      %v2655 = vpack.c.bf16 %v2626, %v2625
      %v2656 = vpack.c.bf16 %v2628, %v2627
      %v2657 = vpack.c.bf16 %v2630, %v2629
      %v2658 = vpack.c.bf16 %v2632, %v2631
      %v2659 = vpack.c.bf16 %v2634, %v2633
      %v2660 = vpack.c.bf16 %v2636, %v2635
      %v2661 = vpack.c.bf16 %v2638, %v2637
      %v2662 = vpack.c.bf16 %v2640, %v2639
      %v2663 = vpack.c.bf16 %v2642, %v2641
      %v2664 = vpack.c.bf16 %v2644, %v2643
      %v2665 = vpack.c.bf16 %v2646, %v2645
      %v2666 = vpack.c.bf16 %v2648, %v2647
      %vm2667 = vcmask 60416
      %2668 = vst.msk [vmem:[%s253] sm:$0xf] %vm2667, 0
      %2669 = vst.msk [vmem:[%s253 + $0x4] sm:$0xf] %vm2667, 0
      %2670 = vst.msk [vmem:[%s253 + $0x8] sm:$0xf] %vm2667, 0
      %2671 = vst.msk [vmem:[%s253 + $0xc] sm:$0xf] %vm2667, 0
      %2672 = vst.msk [vmem:[%s253 + $0x10] sm:$0xf] %vm2667, 0
      %2673 = vst.msk [vmem:[%s253 + $0x14] sm:$0xf] %vm2667, 0
      %2674 = vst.msk [vmem:[%s253 + $0x18] sm:$0xf] %vm2667, 0
      %2675 = vst.msk [vmem:[%s253 + $0x1c] sm:$0xf] %vm2667, 0
      %2676 = vst.msk [vmem:[%s253 + $0x20] sm:$0xf] %vm2667, 0
      %2677 = vst.msk [vmem:[%s253 + $0x24] sm:$0xf] %vm2667, 0
      %2678 = vst.msk [vmem:[%s253 + $0x28] sm:$0xf] %vm2667, 0
      %2679 = vst.msk [vmem:[%s253 + $0x2c] sm:$0xf] %vm2667, 0
      %2680 = vst.msk [vmem:[%s253 + $0x30] sm:$0xf] %vm2667, 0
      %2681 = vst.msk [vmem:[%s253 + $0x34] sm:$0xf] %vm2667, 0
      %2682 = vst.msk [vmem:[%s253 + $0x38] sm:$0xf] %vm2667, 0
      %2683 = vst.msk [vmem:[%s253 + $0x3c] sm:$0xf] %vm2667, 0
      %2684 = vst.msk [vmem:[%s253 + $0x40] sm:$0xf] %vm2667, 0
      %2685 = vst.msk [vmem:[%s253 + $0x44] sm:$0xf] %vm2667, 0
      %2686 = vst.msk [vmem:[%s253 + $0x48] sm:$0xf] %vm2667, 0
      %2687 = vst.msk [vmem:[%s253 + $0x4c] sm:$0xf] %vm2667, 0
      %2688 = vst.msk [vmem:[%s253 + $0x50] sm:$0xf] %vm2667, 0
      %2689 = vst.msk [vmem:[%s253 + $0x54] sm:$0xf] %vm2667, 0
      %2690 = vst.msk [vmem:[%s253 + $0x58] sm:$0xf] %vm2667, 0
      %2691 = vst.msk [vmem:[%s253 + $0x5c] sm:$0xf] %vm2667, 0
      %2692 = vst.msk [vmem:[%s253 + $0x60] sm:$0xf] %vm2667, 0
      %2693 = vst.msk [vmem:[%s253 + $0x64] sm:$0xf] %vm2667, 0
      %2694 = vst.msk [vmem:[%s253 + $0x68] sm:$0xf] %vm2667, 0
      %2695 = vst.msk [vmem:[%s253 + $0x6c] sm:$0xf] %vm2667, 0
      %2696 = vst.msk [vmem:[%s253 + $0x70] sm:$0xf] %vm2667, 0
      %2697 = vst.msk [vmem:[%s253 + $0x74] sm:$0xf] %vm2667, 0
      %2698 = vst.msk [vmem:[%s253 + $0x78] sm:$0xf] %vm2667, 0
      %2699 = vst.msk [vmem:[%s253 + $0x7c] sm:$0xf] %vm2667, 0
      %2700 = vst.msk [vmem:[%s253 + $0x80] sm:$0xf] %vm2667, 0
      %2701 = vst.msk [vmem:[%s253 + $0x84] sm:$0xf] %vm2667, 0
      %2702 = vst.msk [vmem:[%s253 + $0x88] sm:$0xf] %vm2667, 0
      %2703 = vst.msk [vmem:[%s253 + $0x8c] sm:$0xf] %vm2667, 0
      %2704 = vst.msk [vmem:[%s253 + $0x90] sm:$0xf] %vm2667, 0
      %2705 = vst.msk [vmem:[%s253 + $0x94] sm:$0xf] %vm2667, 0
      %2706 = vst.msk [vmem:[%s253 + $0x98] sm:$0xf] %vm2667, 0
      %2707 = vst.msk [vmem:[%s253 + $0x9c] sm:$0xf] %vm2667, 0
      %2708 = vst.msk [vmem:[%s253 + $0xa0] sm:$0xf] %vm2667, 0
      %2709 = vst.msk [vmem:[%s253 + $0xa4] sm:$0xf] %vm2667, 0
      %v2728 = vunpack.c.l.b16 %v2649
      %v2729 = vunpack.c.h.b16 %v2649
      %v2730 = vunpack.c.l.b16 %v2650
      %v2731 = vunpack.c.h.b16 %v2650
      %v2732 = vunpack.c.l.b16 %v2651
      %v2733 = vunpack.c.h.b16 %v2651
      %v2734 = vunpack.c.l.b16 %v2652
      %v2735 = vunpack.c.h.b16 %v2652
      %v2736 = vunpack.c.l.b16 %v2653
      %v2737 = vunpack.c.h.b16 %v2653
      %v2738 = vunpack.c.l.b16 %v2654
      %v2739 = vunpack.c.h.b16 %v2654
      %v2740 = vunpack.c.l.b16 %v2655
      %v2741 = vunpack.c.h.b16 %v2655
      %v2742 = vunpack.c.l.b16 %v2656
      %v2743 = vunpack.c.h.b16 %v2656
      %v2744 = vunpack.c.l.b16 %v2657
      %v2745 = vunpack.c.h.b16 %v2657
      %v2746 = vunpack.c.l.b16 %v2658
      %v2747 = vunpack.c.h.b16 %v2658
      %v2748 = vunpack.c.l.b16 %v2659
      %v2749 = vunpack.c.h.b16 %v2659
      %v2750 = vunpack.c.l.b16 %v2660
      %v2751 = vunpack.c.h.b16 %v2660
      %v2752 = vunpack.c.l.b16 %v2661
      %v2753 = vunpack.c.h.b16 %v2661
      %v2754 = vunpack.c.l.b16 %v2662
      %v2755 = vunpack.c.h.b16 %v2662
      %v2756 = vunpack.c.l.b16 %v2663
      %v2757 = vunpack.c.h.b16 %v2663
      %v2758 = vunpack.c.l.b16 %v2664
      %v2759 = vunpack.c.h.b16 %v2664
      %v2760 = vunpack.c.l.b16 %v2665
      %v2761 = vunpack.c.h.b16 %v2665
      %v2762 = vunpack.c.l.b16 %v2666
      %v2763 = vunpack.c.h.b16 %v2666
      %v2764 = vpack.c.b16 %v2728, %v2728
      %v2765 = vpack.c.b16 %v2729, %v2729
      %v2766 = vpack.c.b16 %v2730, %v2730
      %v2767 = vpack.c.b16 %v2731, %v2731
      %v2768 = vpack.c.b16 %v2732, %v2732
      %v2769 = vpack.c.b16 %v2733, %v2733
      %v2770 = vpack.c.b16 %v2734, %v2734
      %v2771 = vpack.c.b16 %v2735, %v2735
      %v2772 = vpack.c.b16 %v2736, %v2736
      %v2773 = vpack.c.b16 %v2737, %v2737
      %v2774 = vpack.c.b16 %v2738, %v2738
      %v2775 = vpack.c.b16 %v2739, %v2739
      %v2776 = vpack.c.b16 %v2740, %v2740
      %v2777 = vpack.c.b16 %v2741, %v2741
      %v2778 = vpack.c.b16 %v2742, %v2742
      %v2779 = vpack.c.b16 %v2743, %v2743
      %v2780 = vpack.c.b16 %v2744, %v2744
      %v2781 = vpack.c.b16 %v2745, %v2745
      %v2782 = vpack.c.b16 %v2746, %v2746
      %v2783 = vpack.c.b16 %v2747, %v2747
      %v2784 = vpack.c.b16 %v2748, %v2748
      %v2785 = vpack.c.b16 %v2749, %v2749
      %v2786 = vpack.c.b16 %v2750, %v2750
      %v2787 = vpack.c.b16 %v2751, %v2751
      %v2788 = vpack.c.b16 %v2752, %v2752
      %v2789 = vpack.c.b16 %v2753, %v2753
      %v2790 = vpack.c.b16 %v2754, %v2754
      %v2791 = vpack.c.b16 %v2755, %v2755
      %v2792 = vpack.c.b16 %v2756, %v2756
      %v2793 = vpack.c.b16 %v2757, %v2757
      %v2794 = vpack.c.b16 %v2758, %v2758
      %v2795 = vpack.c.b16 %v2759, %v2759
      %v2796 = vpack.c.b16 %v2760, %v2760
      %v2797 = vpack.c.b16 %v2761, %v2761
      %v2798 = vpack.c.b16 %v2762, %v2762
      %v2799 = vpack.c.b16 %v2763, %v2763
      %2836 = vst.msk [vmem:[%s253 + $0xc] sm:$0xf] %vm2667, %v2764
      %2837 = vst.msk [vmem:[%s253 + $0x10] sm:$0xf] %vm2667, %v2765
      %2838 = vst.msk [vmem:[%s253 + $0x14] sm:$0xf] %vm2667, %v2766
      %2839 = vst.msk [vmem:[%s253 + $0x18] sm:$0xf] %vm2667, %v2767
      %2840 = vst.msk [vmem:[%s253 + $0x1c] sm:$0xf] %vm2667, %v2768
      %2841 = vst.msk [vmem:[%s253 + $0x20] sm:$0xf] %vm2667, %v2769
      %2842 = vst.msk [vmem:[%s253 + $0x24] sm:$0xf] %vm2667, %v2770
      %2843 = vst.msk [vmem:[%s253 + $0x28] sm:$0xf] %vm2667, %v2771
      %2844 = vst.msk [vmem:[%s253 + $0x2c] sm:$0xf] %vm2667, %v2772
      %2845 = vst.msk [vmem:[%s253 + $0x30] sm:$0xf] %vm2667, %v2773
      %2846 = vst.msk [vmem:[%s253 + $0x34] sm:$0xf] %vm2667, %v2774
      %2847 = vst.msk [vmem:[%s253 + $0x38] sm:$0xf] %vm2667, %v2775
      %2848 = vst.msk [vmem:[%s253 + $0x3c] sm:$0xf] %vm2667, %v2776
      %2849 = vst.msk [vmem:[%s253 + $0x40] sm:$0xf] %vm2667, %v2777
      %2850 = vst.msk [vmem:[%s253 + $0x44] sm:$0xf] %vm2667, %v2778
      %2851 = vst.msk [vmem:[%s253 + $0x48] sm:$0xf] %vm2667, %v2779
      %2852 = vst.msk [vmem:[%s253 + $0x4c] sm:$0xf] %vm2667, %v2780
      %2853 = vst.msk [vmem:[%s253 + $0x50] sm:$0xf] %vm2667, %v2781
      %2854 = vst.msk [vmem:[%s253 + $0x54] sm:$0xf] %vm2667, %v2782
      %2855 = vst.msk [vmem:[%s253 + $0x58] sm:$0xf] %vm2667, %v2783
      %2856 = vst.msk [vmem:[%s253 + $0x5c] sm:$0xf] %vm2667, %v2784
      %2857 = vst.msk [vmem:[%s253 + $0x60] sm:$0xf] %vm2667, %v2785
      %2858 = vst.msk [vmem:[%s253 + $0x64] sm:$0xf] %vm2667, %v2786
      %2859 = vst.msk [vmem:[%s253 + $0x68] sm:$0xf] %vm2667, %v2787
      %2860 = vst.msk [vmem:[%s253 + $0x6c] sm:$0xf] %vm2667, %v2788
      %2861 = vst.msk [vmem:[%s253 + $0x70] sm:$0xf] %vm2667, %v2789
      %2862 = vst.msk [vmem:[%s253 + $0x74] sm:$0xf] %vm2667, %v2790
      %2863 = vst.msk [vmem:[%s253 + $0x78] sm:$0xf] %vm2667, %v2791
      %2864 = vst.msk [vmem:[%s253 + $0x7c] sm:$0xf] %vm2667, %v2792
      %2865 = vst.msk [vmem:[%s253 + $0x80] sm:$0xf] %vm2667, %v2793
      %2866 = vst.msk [vmem:[%s253 + $0x84] sm:$0xf] %vm2667, %v2794
      %2867 = vst.msk [vmem:[%s253 + $0x88] sm:$0xf] %vm2667, %v2795
      %2868 = vst.msk [vmem:[%s253 + $0x8c] sm:$0xf] %vm2667, %v2796
      %2869 = vst.msk [vmem:[%s253 + $0x90] sm:$0xf] %vm2667, %v2797
      %2870 = vst.msk [vmem:[%s253 + $0x94] sm:$0xf] %vm2667, %v2798
      %2871 = vst.msk [vmem:[%s253 + $0x98] sm:$0xf] %vm2667, %v2799
      %s2872 = smul.u32 42, %s17
      %p2873 = scmp.lt.s32.totalorder %s2872, 83
      %s2874 = scalar_select %p2873, %s2872, 83
      %s2875 = smul.addr %s2874, 4
      %s2876 = scalar_lea.vmem %s6, %s2875
      // Predicated region
      $region45: #{resnet_forward.5} parent=43 // pred_check
        %p2877 = pneg %p166
      $region46: #{resnet_forward.5} parent=43 // pred_check_branch
        %2879 = sbr.rel (%p2877) target = $region48
      $region47: #{resnet_forward.5} parent=43 // pred_region
        %s2880 = smul.u32 42, %s17
      $region48: #{resnet_forward.5} parent=43 // pred_fallthru
        _
    $region44: #{resnet_forward.5} parent=5 // pred_fallthru
      _
    %p2881 = scmp.le.s32.totalorder 2, %s12
    // Predicated region
    $region49: #{resnet_forward.5} parent=5 // pred_check
      %p2882 = pneg %p2881
    $region50: #{resnet_forward.5} parent=5 // pred_check_branch
      %2884 = sbr.rel (%p2882) target = $region52
    $region51: #{resnet_forward.5} parent=5 // pred_region
      %s2885 = ssub.s32 %s12, 2
      // Predicated region
      $region53: #{resnet_forward.5} parent=51 // pred_check
        %p2886 = pneg %p172
      $region54: #{resnet_forward.5} parent=51 // pred_check_branch
        %2888 = sbr.rel (%p2886) target = $region56
      $region55: #{resnet_forward.5} parent=51 // pred_region
        %s2889 = smul.u32 42, %s18
        %p2890 = scmp.lt.s32.totalorder %s2889, 83
        %s2891 = scalar_select %p2890, %s2889, 83
        %s2892 = smul.addr %s2891, 4
        %s2893 = scalar_lea.vmem %s6, %s2892
      $region56: #{resnet_forward.5} parent=51 // pred_fallthru
        _
    $region52: #{resnet_forward.5} parent=5 // pred_fallthru
      _
  $region6: #{resnet_forward.5} parent=0 // loop_footer
    %s16 = sadd.s32 1, %s12
  $region7: #{resnet_forward.5} parent=0 // loop_footer_branch
    %11 = sbr.rel target = $region3
  $region8: #{resnet_forward.5} parent=0 // loop_exit
    _

// kernel: resnet_forward.6
$region0: #{resnet_forward.6}
  #allocation0 [shape = 'u32[]', space=smem, size = 0x4, offset = 0x4, fixed_abs, tag = 'smem constant byte address 0x4 - core index']
  #allocation1 [shape = 'u32[144,128]{1,0:T(1,128)}', space=vmem, size = 0x12000, scoped, tag = 'internal scratch']
  %s0 = inlined_call_operand.vmem [shape: bf16[672,8], index: 0, kind: input, shape index: {}]
  %s1 = inlined_call_operand.vmem [shape: bf16[72,16], index: 1, kind: input, shape index: {}]
  %s2 = inlined_call_operand.vmem [shape: f32[1,16], index: 2, kind: input, shape index: {}]
  %s3 = inlined_call_operand.vmem [shape: bf16[16,16], index: 3, kind: input, shape index: {}]
  %s4 = inlined_call_operand.vmem [shape: bf16[8,16], index: 4, kind: input, shape index: {}]
  %s5 = inlined_call_operand.vmem [shape: f32[1,16], index: 5, kind: input, shape index: {}]
  %s6 = inlined_call_operand.vmem [shape: f32[288,1], index: 6, kind: input, shape index: {}]
  %s7 = inlined_call_operand.vmem [shape: bf16[576,16], index: 7, kind: output, shape index: {}]
  %s8 = sld [smem:[#allocation0]]
  $region61: #{resnet_forward.6} parent=0
    _
  %s10 = ssub.s32 1, %s8
  %s11 = scalar_select 0, %s10, %s8
  loop: start=0, step=1, limit=4
  $region2: #{resnet_forward.6} parent=0 // loop_pre_header
    _
  $region3: #{resnet_forward.6} parent=0 // loop_header
    %s13 = sphi 0, %s17
    %p14 = scmp.ge.s32.totalorder %s13, 4
    %s23 = sphi 0, %s25
    %s26 = sphi 0, %s23
    %s27 = sphi 0, %s26
    %s43 = sphi 0, %s27
    %s47 = sphi 0, %s47
    %s49 = sphi 0, %s47
    %s50 = sphi 0, %s49
    %s64 = sphi 0, %s50
    %s68 = sphi 0, %s68
    %s70 = sphi 0, %s68
    %s71 = sphi 0, %s70
    %s85 = sphi 0, %s71
    %s89 = sphi 0, %s89
    %s91 = sphi 0, %s89
    %s92 = sphi 0, %s91
    %s106 = sphi 0, %s92
    %s110 = sphi 0, %s110
    %s112 = sphi 0, %s110
    %s113 = sphi 0, %s112
    %s127 = sphi 0, %s113
    %s131 = sphi 0, %s131
    %s133 = sphi 0, %s131
    %s134 = sphi 0, %s133
    %s148 = sphi 0, %s134
    %s152 = sphi 0, %s152
    %s154 = sphi 0, %s152
    %s155 = sphi 0, %s154
    %s169 = sphi 0, %s155
    %s175 = sphi 0, %s177
    %s178 = sphi 0, %s175
    %s179 = sphi 0, %s178
    %s195 = sphi 0, %s179
  $region4: #{resnet_forward.6} parent=0 // loop_header_branch
    %16 = sbr.rel (%p14) target = $region8
  $region5: #{resnet_forward.6} parent=0 // loop_body
    %s18 = ssub.s32 %s13, 1
    %s19 = ssub.s32 %s13, 2
    %s20 = sadd.s32 %s13, 1
    %s21 = ssub.s32 %s13, %s20
    %p22 = scmp.eq.s32.totalorder %s21, 0
    %s24 = sadd.s32 %s23, 1
    %s25 = scalar_select %p22, %s23, %s24
    %p28 = pneg %p22
    %p29 = scmp.eq.s32.totalorder %s13, 1
    %p30 = por %p28, %p29
    %p31 = scmp.ne.s32.totalorder %s23, %s26
    %p32 = scmp.eq.s32.totalorder %s13, 0
    %p33 = por %p31, %p32
    %p34 = scmp.ne.s32.totalorder %s23, %s26
    %p35 = scmp.eq.s32.totalorder %s18, 1
    %p36 = por %p34, %p35
    %p37 = scmp.ne.s32.totalorder %s26, %s27
    %p38 = scmp.eq.s32.totalorder %s18, 0
    %p39 = por %p37, %p38
    %p40 = scmp.ne.s32.totalorder %s26, %s27
    %p41 = scmp.eq.s32.totalorder %s19, 1
    %p42 = por %p40, %p41
    %p44 = scmp.ne.s32.totalorder %s27, %s43
    %p45 = scmp.eq.s32.totalorder %s19, 0
    %p46 = por %p44, %p45
    %s48 = sadd.s32 %s47, 1
    %p51 = scmp.eq.s32.totalorder %s13, 1
    %p52 = scmp.ne.s32.totalorder %s47, %s49
    %p53 = scmp.eq.s32.totalorder %s13, 0
    %p54 = por %p52, %p53
    %p55 = scmp.ne.s32.totalorder %s47, %s49
    %p56 = scmp.eq.s32.totalorder %s18, 1
    %p57 = por %p55, %p56
    %p58 = scmp.ne.s32.totalorder %s49, %s50
    %p59 = scmp.eq.s32.totalorder %s18, 0
    %p60 = por %p58, %p59
    %p61 = scmp.ne.s32.totalorder %s49, %s50
    %p62 = scmp.eq.s32.totalorder %s19, 1
    %p63 = por %p61, %p62
    %p65 = scmp.ne.s32.totalorder %s50, %s64
    %p66 = scmp.eq.s32.totalorder %s19, 0
    %p67 = por %p65, %p66
    %s69 = sadd.s32 %s68, 1
    %p72 = scmp.eq.s32.totalorder %s13, 1
    %p73 = scmp.ne.s32.totalorder %s68, %s70
    %p74 = scmp.eq.s32.totalorder %s13, 0
    %p75 = por %p73, %p74
    %p76 = scmp.ne.s32.totalorder %s68, %s70
    %p77 = scmp.eq.s32.totalorder %s18, 1
    %p78 = por %p76, %p77
    %p79 = scmp.ne.s32.totalorder %s70, %s71
    %p80 = scmp.eq.s32.totalorder %s18, 0
    %p81 = por %p79, %p80
    %p82 = scmp.ne.s32.totalorder %s70, %s71
    %p83 = scmp.eq.s32.totalorder %s19, 1
    %p84 = por %p82, %p83
    %p86 = scmp.ne.s32.totalorder %s71, %s85
    %p87 = scmp.eq.s32.totalorder %s19, 0
    %p88 = por %p86, %p87
    %s90 = sadd.s32 %s89, 1
    %p93 = scmp.eq.s32.totalorder %s13, 1
    %p94 = scmp.ne.s32.totalorder %s89, %s91
    %p95 = scmp.eq.s32.totalorder %s13, 0
    %p96 = por %p94, %p95
    %p97 = scmp.ne.s32.totalorder %s89, %s91
    %p98 = scmp.eq.s32.totalorder %s18, 1
    %p99 = por %p97, %p98
    %p100 = scmp.ne.s32.totalorder %s91, %s92
    %p101 = scmp.eq.s32.totalorder %s18, 0
    %p102 = por %p100, %p101
    %p103 = scmp.ne.s32.totalorder %s91, %s92
    %p104 = scmp.eq.s32.totalorder %s19, 1
    %p105 = por %p103, %p104
    %p107 = scmp.ne.s32.totalorder %s92, %s106
    %p108 = scmp.eq.s32.totalorder %s19, 0
    %p109 = por %p107, %p108
    %s111 = sadd.s32 %s110, 1
    %p114 = scmp.eq.s32.totalorder %s13, 1
    %p115 = scmp.ne.s32.totalorder %s110, %s112
    %p116 = scmp.eq.s32.totalorder %s13, 0
    %p117 = por %p115, %p116
    %p118 = scmp.ne.s32.totalorder %s110, %s112
    %p119 = scmp.eq.s32.totalorder %s18, 1
    %p120 = por %p118, %p119
    %p121 = scmp.ne.s32.totalorder %s112, %s113
    %p122 = scmp.eq.s32.totalorder %s18, 0
    %p123 = por %p121, %p122
    %p124 = scmp.ne.s32.totalorder %s112, %s113
    %p125 = scmp.eq.s32.totalorder %s19, 1
    %p126 = por %p124, %p125
    %p128 = scmp.ne.s32.totalorder %s113, %s127
    %p129 = scmp.eq.s32.totalorder %s19, 0
    %p130 = por %p128, %p129
    %s132 = sadd.s32 %s131, 1
    %p135 = scmp.eq.s32.totalorder %s13, 1
    %p136 = scmp.ne.s32.totalorder %s131, %s133
    %p137 = scmp.eq.s32.totalorder %s13, 0
    %p138 = por %p136, %p137
    %p139 = scmp.ne.s32.totalorder %s131, %s133
    %p140 = scmp.eq.s32.totalorder %s18, 1
    %p141 = por %p139, %p140
    %p142 = scmp.ne.s32.totalorder %s133, %s134
    %p143 = scmp.eq.s32.totalorder %s18, 0
    %p144 = por %p142, %p143
    %p145 = scmp.ne.s32.totalorder %s133, %s134
    %p146 = scmp.eq.s32.totalorder %s19, 1
    %p147 = por %p145, %p146
    %p149 = scmp.ne.s32.totalorder %s134, %s148
    %p150 = scmp.eq.s32.totalorder %s19, 0
    %p151 = por %p149, %p150
    %s153 = sadd.s32 %s152, 1
    %p156 = scmp.eq.s32.totalorder %s13, 1
    %p157 = scmp.ne.s32.totalorder %s152, %s154
    %p158 = scmp.eq.s32.totalorder %s13, 0
    %p159 = por %p157, %p158
    %p160 = scmp.ne.s32.totalorder %s152, %s154
    %p161 = scmp.eq.s32.totalorder %s18, 1
    %p162 = por %p160, %p161
    %p163 = scmp.ne.s32.totalorder %s154, %s155
    %p164 = scmp.eq.s32.totalorder %s18, 0
    %p165 = por %p163, %p164
    %p166 = scmp.ne.s32.totalorder %s154, %s155
    %p167 = scmp.eq.s32.totalorder %s19, 1
    %p168 = por %p166, %p167
    %p170 = scmp.ne.s32.totalorder %s155, %s169
    %p171 = scmp.eq.s32.totalorder %s19, 0
    %p172 = por %p170, %p171
    %s173 = ssub.s32 %s13, %s20
    %p174 = scmp.eq.s32.totalorder %s173, 0
    %s176 = sadd.s32 %s175, 1
    %s177 = scalar_select %p174, %s175, %s176
    %p180 = pneg %p174
    %p181 = scmp.eq.s32.totalorder %s13, 1
    %p182 = por %p180, %p181
    %p183 = scmp.ne.s32.totalorder %s175, %s178
    %p184 = scmp.eq.s32.totalorder %s13, 0
    %p185 = por %p183, %p184
    %p186 = scmp.ne.s32.totalorder %s175, %s178
    %p187 = scmp.eq.s32.totalorder %s18, 1
    %p188 = por %p186, %p187
    %p189 = scmp.ne.s32.totalorder %s178, %s179
    %p190 = scmp.eq.s32.totalorder %s18, 0
    %p191 = por %p189, %p190
    %p192 = scmp.ne.s32.totalorder %s178, %s179
    %p193 = scmp.eq.s32.totalorder %s19, 1
    %p194 = por %p192, %p193
    %p196 = scmp.ne.s32.totalorder %s179, %s195
    %p197 = scmp.eq.s32.totalorder %s19, 0
    %p198 = por %p196, %p197
    %p199 = scmp.le.s32.totalorder 1, %s13
    %p200 = scmp.lt.s32.totalorder %s13, 3
    %p201 = pnand %p199, %p200
    %p202 = pneg %p201
    // Predicated region
    $region9: #{resnet_forward.6} parent=5 // pred_check
      _
    $region10: #{resnet_forward.6} parent=5 // pred_check_branch
      %204 = sbr.rel (%p201) target = $region12
    $region11: #{resnet_forward.6} parent=5 // pred_region
      %s205 = ssub.s32 %s13, 1
      // Predicated region
      $region13: #{resnet_forward.6} parent=11 // pred_check
        %p206 = pneg %p60
      $region14: #{resnet_forward.6} parent=11 // pred_check_branch
        %208 = sbr.rel (%p206) target = $region16
      $region15: #{resnet_forward.6} parent=11 // pred_region
        _
      $region16: #{resnet_forward.6} parent=11 // pred_fallthru
        _
      // Predicated region
      $region17: #{resnet_forward.6} parent=11 // pred_check
        %p209 = pneg %p81
      $region18: #{resnet_forward.6} parent=11 // pred_check_branch
        %211 = sbr.rel (%p209) target = $region20
      $region19: #{resnet_forward.6} parent=11 // pred_region
        _
      $region20: #{resnet_forward.6} parent=11 // pred_fallthru
        _
      // Predicated region
      $region21: #{resnet_forward.6} parent=11 // pred_check
        %p212 = pneg %p102
      $region22: #{resnet_forward.6} parent=11 // pred_check_branch
        %214 = sbr.rel (%p212) target = $region24
      $region23: #{resnet_forward.6} parent=11 // pred_region
        _
      $region24: #{resnet_forward.6} parent=11 // pred_fallthru
        _
      // Predicated region
      $region25: #{resnet_forward.6} parent=11 // pred_check
        %p215 = pneg %p123
      $region26: #{resnet_forward.6} parent=11 // pred_check_branch
        %217 = sbr.rel (%p215) target = $region28
      $region27: #{resnet_forward.6} parent=11 // pred_region
        _
      $region28: #{resnet_forward.6} parent=11 // pred_fallthru
        _
      // Predicated region
      $region29: #{resnet_forward.6} parent=11 // pred_check
        %p218 = pneg %p144
      $region30: #{resnet_forward.6} parent=11 // pred_check_branch
        %220 = sbr.rel (%p218) target = $region32
      $region31: #{resnet_forward.6} parent=11 // pred_region
        _
      $region32: #{resnet_forward.6} parent=11 // pred_fallthru
        _
      // Predicated region
      $region33: #{resnet_forward.6} parent=11 // pred_check
        %p221 = pneg %p165
      $region34: #{resnet_forward.6} parent=11 // pred_check_branch
        %223 = sbr.rel (%p221) target = $region36
      $region35: #{resnet_forward.6} parent=11 // pred_region
        _
      $region36: #{resnet_forward.6} parent=11 // pred_fallthru
        _
    $region12: #{resnet_forward.6} parent=5 // pred_fallthru
      _
    %p224 = scmp.lt.s32.totalorder %s13, 2
    // Predicated region
    $region37: #{resnet_forward.6} parent=5 // pred_check
      %p225 = pneg %p224
    $region38: #{resnet_forward.6} parent=5 // pred_check_branch
      %227 = sbr.rel (%p225) target = $region40
    $region39: #{resnet_forward.6} parent=5 // pred_region
      // Predicated region
      $region41: #{resnet_forward.6} parent=39 // pred_check
        %p228 = pneg %p33
      $region42: #{resnet_forward.6} parent=39 // pred_check_branch
        %230 = sbr.rel (%p228) target = $region44
      $region43: #{resnet_forward.6} parent=39 // pred_region
        %s231 = smul.u32 42, %s13
        %p232 = scmp.lt.s32.totalorder %s231, 83
        %s233 = scalar_select %p232, %s231, 83
        %s234 = smul.addr %s233, 4
        %s235 = scalar_lea.vmem %s0, %s234
        %s236 = smul.u32 42, %s13
      $region44: #{resnet_forward.6} parent=39 // pred_fallthru
        _
    $region40: #{resnet_forward.6} parent=5 // pred_fallthru
      _
    %p237 = scmp.le.s32.totalorder 1, %s13
    %p238 = scmp.lt.s32.totalorder %s13, 3
    %p239 = pnand %p237, %p238
    %p240 = pneg %p239
    // Predicated region
    $region45: #{resnet_forward.6} parent=5 // pred_check
      _
    $region46: #{resnet_forward.6} parent=5 // pred_check_branch
      %242 = sbr.rel (%p239) target = $region48
    $region47: #{resnet_forward.6} parent=5 // pred_region
      %s243 = ssub.s32 %s13, 1
      %s244 = smul.u32 42, %s18
      %p245 = scmp.lt.s32.totalorder %s244, 83
      %s246 = scalar_select %p245, %s244, 83
      %s247 = smul.addr %s246, 4
      %s248 = scalar_lea.vmem %s0, %s247
      %p249 = pneg %p39
      %p250 = pneg %p36
      %p251 = pneg %p60
      %p252 = pneg %p57
      %p253 = pneg %p81
      %p254 = pneg %p78
      %p255 = pneg %p102
      %p256 = pneg %p99
      %p257 = pneg %p123
      %p258 = pneg %p120
      %p259 = pneg %p144
      %p260 = pneg %p141
      %p261 = pneg %p165
      %p262 = pneg %p162
      %p263 = pneg %p191
      %p264 = pneg %p188
      %s265 = smul.u32 36, %s18
      %p266 = scmp.lt.s32.totalorder %s265, 71
      %s267 = scalar_select %p266, %s265, 71
      %s268 = smul.addr %s267, 4
      %s269 = scalar_lea.vmem %s7, %s268
      %s270 = smul.u32 42, %s18
      %p271 = scmp.lt.s32.totalorder %s270, 83
      %s272 = scalar_select %p271, %s270, 83
      %s273 = smul.addr %s272, 4
      %s274 = scalar_lea.vmem %s0, %s273
      %s275 = smul.u32 42, %s18
      %s276 = smul.u32 36, %s18
      %p277 = scmp.lt.s32.totalorder %s276, 71
      %s278 = scalar_select %p277, %s276, 71
      %s279 = smul.addr %s278, 4
      %s280 = scalar_lea.vmem %s7, %s279
      %s281 = smul.u32 36, %s18
      %v283 = vld [vmem:[%s274] sm:$0xf]
      %v284 = vld [vmem:[%s274 + $0x4] sm:$0xf]
      %v285 = vld [vmem:[%s274 + $0x8] sm:$0xf]
      %v286 = vld [vmem:[%s274 + $0xc] sm:$0xf]
      %v287 = vld [vmem:[%s274 + $0x10] sm:$0xf]
      %v288 = vld [vmem:[%s274 + $0x14] sm:$0xf]
      %v289 = vld [vmem:[%s274 + $0x18] sm:$0xf]
      %v290 = vld [vmem:[%s274 + $0x1c] sm:$0xf]
      %v291 = vld [vmem:[%s274 + $0x20] sm:$0xf]
      %v292 = vld [vmem:[%s274 + $0x24] sm:$0xf]
      %v293 = vld [vmem:[%s274 + $0x28] sm:$0xf]
      %v294 = vld [vmem:[%s274 + $0x2c] sm:$0xf]
      %v295 = vld [vmem:[%s274 + $0x30] sm:$0xf]
      %v296 = vld [vmem:[%s274 + $0x34] sm:$0xf]
      %v297 = vld [vmem:[%s274 + $0x38] sm:$0xf]
      %v298 = vld [vmem:[%s274 + $0x3c] sm:$0xf]
      %v299 = vld [vmem:[%s274 + $0x40] sm:$0xf]
      %v300 = vld [vmem:[%s274 + $0x44] sm:$0xf]
      %v301 = vld [vmem:[%s274 + $0x48] sm:$0xf]
      %v302 = vld [vmem:[%s274 + $0x4c] sm:$0xf]
      %v303 = vld [vmem:[%s274 + $0x50] sm:$0xf]
      %v304 = vld [vmem:[%s274 + $0x54] sm:$0xf]
      %v305 = vld [vmem:[%s274 + $0x58] sm:$0xf]
      %v306 = vld [vmem:[%s274 + $0x5c] sm:$0xf]
      %v307 = vld [vmem:[%s274 + $0x60] sm:$0xf]
      %v308 = vld [vmem:[%s274 + $0x64] sm:$0xf]
      %v309 = vld [vmem:[%s274 + $0x68] sm:$0xf]
      %v310 = vld [vmem:[%s274 + $0x6c] sm:$0xf]
      %v311 = vld [vmem:[%s274 + $0x70] sm:$0xf]
      %v312 = vld [vmem:[%s274 + $0x74] sm:$0xf]
      %v313 = vld [vmem:[%s274 + $0x78] sm:$0xf]
      %v314 = vld [vmem:[%s274 + $0x7c] sm:$0xf]
      %v315 = vld [vmem:[%s274 + $0x80] sm:$0xf]
      %v316 = vld [vmem:[%s274 + $0x84] sm:$0xf]
      %v317 = vld [vmem:[%s274 + $0x88] sm:$0xf]
      %v318 = vld [vmem:[%s274 + $0x8c] sm:$0xf]
      %v319 = vld [vmem:[%s274 + $0x90] sm:$0xf]
      %v320 = vld [vmem:[%s274 + $0x94] sm:$0xf]
      %v321 = vld [vmem:[%s274 + $0x98] sm:$0xf]
      %v322 = vld [vmem:[%s274 + $0x9c] sm:$0xf]
      %v323 = vld [vmem:[%s274 + $0xa0] sm:$0xf]
      %v324 = vld [vmem:[%s274 + $0xa4] sm:$0xf]
      %v362 = vunpack.c.l.b16 %v283
      %v363 = vunpack.c.l.b16 %v284
      %v364 = vunpack.c.l.b16 %v285
      %v365 = vunpack.c.l.b16 %v286
      %v366 = vunpack.c.l.b16 %v287
      %v367 = vunpack.c.l.b16 %v288
      %v368 = vunpack.c.l.b16 %v289
      %v369 = vunpack.c.l.b16 %v290
      %v370 = vunpack.c.l.b16 %v291
      %v371 = vunpack.c.l.b16 %v292
      %v372 = vunpack.c.l.b16 %v293
      %v373 = vunpack.c.l.b16 %v294
      %v374 = vunpack.c.l.b16 %v295
      %v375 = vunpack.c.l.b16 %v296
      %v376 = vunpack.c.l.b16 %v297
      %v377 = vunpack.c.l.b16 %v298
      %v378 = vunpack.c.l.b16 %v299
      %v379 = vunpack.c.l.b16 %v300
      %v380 = vunpack.c.l.b16 %v301
      %v381 = vunpack.c.l.b16 %v302
      %v382 = vunpack.c.l.b16 %v303
      %v383 = vunpack.c.l.b16 %v304
      %v384 = vunpack.c.l.b16 %v305
      %v385 = vunpack.c.l.b16 %v306
      %v386 = vunpack.c.l.b16 %v307
      %v387 = vunpack.c.l.b16 %v308
      %v388 = vunpack.c.l.b16 %v309
      %v389 = vunpack.c.l.b16 %v310
      %v390 = vunpack.c.l.b16 %v311
      %v391 = vunpack.c.l.b16 %v312
      %v392 = vunpack.c.l.b16 %v313
      %v393 = vunpack.c.l.b16 %v314
      %v394 = vunpack.c.l.b16 %v315
      %v395 = vunpack.c.l.b16 %v316
      %v396 = vunpack.c.l.b16 %v317
      %v397 = vunpack.c.l.b16 %v318
      %v398 = vunpack.c.l.b16 %v319
      %v399 = vpack.c.b16 %v363, %v362
      %v400 = vpack.c.b16 %v365, %v364
      %v401 = vpack.c.b16 %v367, %v366
      %v402 = vpack.c.b16 %v369, %v368
      %v403 = vpack.c.b16 %v371, %v370
      %v404 = vpack.c.b16 %v373, %v372
      %v405 = vpack.c.b16 %v375, %v374
      %v406 = vpack.c.b16 %v377, %v376
      %v407 = vpack.c.b16 %v379, %v378
      %v408 = vpack.c.b16 %v381, %v380
      %v409 = vpack.c.b16 %v383, %v382
      %v410 = vpack.c.b16 %v385, %v384
      %v411 = vpack.c.b16 %v387, %v386
      %v412 = vpack.c.b16 %v389, %v388
      %v413 = vpack.c.b16 %v391, %v390
      %v414 = vpack.c.b16 %v393, %v392
      %v415 = vpack.c.b16 %v395, %v394
      %v416 = vpack.c.b16 %v397, %v396
      %v417 = vpack.c.b16 %v398, %v398
      %vm418 = vsmask.f32 7424
      %v420 = vshrl.u32 %v399, 16
      %v422 = vshll.u32 %v399, 16
      %v424 = vrot.slane %v422, 1
      %v425 = vor.u32 %v420, %v424
      %v427 = vshll.u32 %v400, 16
      %v429 = vrot.slane %v427, 1
      %v430 = vsel %vm418, %v425, %v429
      %v431 = vshrl.u32 %v400, 16
      %v433 = vor.u32 %v431, %v429
      %v435 = vshll.u32 %v401, 16
      %v437 = vrot.slane %v435, 1
      %v438 = vsel %vm418, %v433, %v437
      %v439 = vshrl.u32 %v401, 16
      %v441 = vor.u32 %v439, %v437
      %v443 = vshll.u32 %v402, 16
      %v445 = vrot.slane %v443, 1
      %v446 = vsel %vm418, %v441, %v445
      %v447 = vshrl.u32 %v402, 16
      %v449 = vor.u32 %v447, %v445
      %v451 = vshll.u32 %v403, 16
      %v453 = vrot.slane %v451, 1
      %v454 = vsel %vm418, %v449, %v453
      %v455 = vshrl.u32 %v403, 16
      %v457 = vor.u32 %v455, %v453
      %v459 = vshll.u32 %v404, 16
      %v461 = vrot.slane %v459, 1
      %v462 = vsel %vm418, %v457, %v461
      %v463 = vshrl.u32 %v404, 16
      %v465 = vor.u32 %v463, %v461
      %v467 = vshll.u32 %v405, 16
      %v469 = vrot.slane %v467, 1
      %v470 = vsel %vm418, %v465, %v469
      %v471 = vshrl.u32 %v405, 16
      %v473 = vor.u32 %v471, %v469
      %v475 = vshll.u32 %v406, 16
      %v477 = vrot.slane %v475, 1
      %v478 = vsel %vm418, %v473, %v477
      %v479 = vshrl.u32 %v406, 16
      %v481 = vor.u32 %v479, %v477
      %v483 = vshll.u32 %v407, 16
      %v485 = vrot.slane %v483, 1
      %v486 = vsel %vm418, %v481, %v485
      %v487 = vshrl.u32 %v407, 16
      %v489 = vor.u32 %v487, %v485
      %v491 = vshll.u32 %v408, 16
      %v493 = vrot.slane %v491, 1
      %v494 = vsel %vm418, %v489, %v493
      %v495 = vshrl.u32 %v408, 16
      %v497 = vor.u32 %v495, %v493
      %v499 = vshll.u32 %v409, 16
      %v501 = vrot.slane %v499, 1
      %v502 = vsel %vm418, %v497, %v501
      %v503 = vshrl.u32 %v409, 16
      %v505 = vor.u32 %v503, %v501
      %v507 = vshll.u32 %v410, 16
      %v509 = vrot.slane %v507, 1
      %v510 = vsel %vm418, %v505, %v509
      %v511 = vshrl.u32 %v410, 16
      %v513 = vor.u32 %v511, %v509
      %v515 = vshll.u32 %v411, 16
      %v517 = vrot.slane %v515, 1
      %v518 = vsel %vm418, %v513, %v517
      %v519 = vshrl.u32 %v411, 16
      %v521 = vor.u32 %v519, %v517
      %v523 = vshll.u32 %v412, 16
      %v525 = vrot.slane %v523, 1
      %v526 = vsel %vm418, %v521, %v525
      %v527 = vshrl.u32 %v412, 16
      %v529 = vor.u32 %v527, %v525
      %v531 = vshll.u32 %v413, 16
      %v533 = vrot.slane %v531, 1
      %v534 = vsel %vm418, %v529, %v533
      %v535 = vshrl.u32 %v413, 16
      %v537 = vor.u32 %v535, %v533
      %v539 = vshll.u32 %v414, 16
      %v541 = vrot.slane %v539, 1
      %v542 = vsel %vm418, %v537, %v541
      %v543 = vshrl.u32 %v414, 16
      %v545 = vor.u32 %v543, %v541
      %v547 = vshll.u32 %v415, 16
      %v549 = vrot.slane %v547, 1
      %v550 = vsel %vm418, %v545, %v549
      %v551 = vshrl.u32 %v415, 16
      %v553 = vor.u32 %v551, %v549
      %v555 = vshll.u32 %v416, 16
      %v557 = vrot.slane %v555, 1
      %v558 = vsel %vm418, %v553, %v557
      %v559 = vshrl.u32 %v416, 16
      %v561 = vor.u32 %v559, %v557
      %v563 = vshll.u32 %v417, 16
      %v565 = vrot.slane %v563, 1
      %v566 = vsel %vm418, %v561, %v565
      %v567 = vshrl.u32 %v417, 16
      %v569 = vor.u32 %v567, %v565
      %570 = vrot.lane.b32.xlu0 %v430, 8
      %v571 = vpop.permute.xlu0 %570
      %572 = vrot.lane.b32.xlu0 %v438, 8
      %v573 = vpop.permute.xlu0 %572
      %574 = vrot.lane.b32.xlu0 %v446, 8
      %v575 = vpop.permute.xlu0 %574
      %576 = vrot.lane.b32.xlu0 %v454, 8
      %v577 = vpop.permute.xlu0 %576
      %578 = vrot.lane.b32.xlu0 %v462, 8
      %v579 = vpop.permute.xlu0 %578
      %580 = vrot.lane.b32.xlu0 %v470, 8
      %v581 = vpop.permute.xlu0 %580
      %582 = vrot.lane.b32.xlu0 %v478, 8
      %v583 = vpop.permute.xlu0 %582
      %584 = vrot.lane.b32.xlu0 %v486, 8
      %v585 = vpop.permute.xlu0 %584
      %586 = vrot.lane.b32.xlu0 %v494, 8
      %v587 = vpop.permute.xlu0 %586
      %588 = vrot.lane.b32.xlu0 %v502, 8
      %v589 = vpop.permute.xlu0 %588
      %590 = vrot.lane.b32.xlu0 %v510, 8
      %v591 = vpop.permute.xlu0 %590
      %592 = vrot.lane.b32.xlu0 %v518, 8
      %v593 = vpop.permute.xlu0 %592
      %594 = vrot.lane.b32.xlu0 %v526, 8
      %v595 = vpop.permute.xlu0 %594
      %596 = vrot.lane.b32.xlu0 %v534, 8
      %v597 = vpop.permute.xlu0 %596
      %598 = vrot.lane.b32.xlu0 %v542, 8
      %v599 = vpop.permute.xlu0 %598
      %600 = vrot.lane.b32.xlu0 %v550, 8
      %v601 = vpop.permute.xlu0 %600
      %602 = vrot.lane.b32.xlu0 %v558, 8
      %v603 = vpop.permute.xlu0 %602
      %604 = vrot.lane.b32.xlu0 %v566, 8
      %v605 = vpop.permute.xlu0 %604
      %606 = vrot.lane.b32.xlu0 %v569, 8
      %v607 = vpop.permute.xlu0 %606
      %vm608 = vcmask 1046528
      %v609 = vrot.slane %v399, 1
      %v610 = vrot.slane %v400, 1
      %v611 = vsel %vm608, %v609, %v610
      %v612 = vrot.slane %v401, 1
      %v613 = vsel %vm608, %v610, %v612
      %v614 = vrot.slane %v402, 1
      %v615 = vsel %vm608, %v612, %v614
      %v616 = vrot.slane %v403, 1
      %v617 = vsel %vm608, %v614, %v616
      %v618 = vrot.slane %v404, 1
      %v619 = vsel %vm608, %v616, %v618
      %v620 = vrot.slane %v405, 1
      %v621 = vsel %vm608, %v618, %v620
      %v622 = vrot.slane %v406, 1
      %v623 = vsel %vm608, %v620, %v622
      %v624 = vrot.slane %v407, 1
      %v625 = vsel %vm608, %v622, %v624
      %v626 = vrot.slane %v408, 1
      %v627 = vsel %vm608, %v624, %v626
      %v628 = vrot.slane %v409, 1
      %v629 = vsel %vm608, %v626, %v628
      %v630 = vrot.slane %v410, 1
      %v631 = vsel %vm608, %v628, %v630
      %v632 = vrot.slane %v411, 1
      %v633 = vsel %vm608, %v630, %v632
      %v634 = vrot.slane %v412, 1
      %v635 = vsel %vm608, %v632, %v634
      %v636 = vrot.slane %v413, 1
      %v637 = vsel %vm608, %v634, %v636
      %v638 = vrot.slane %v414, 1
      %v639 = vsel %vm608, %v636, %v638
      %v640 = vrot.slane %v415, 1
      %v641 = vsel %vm608, %v638, %v640
      %v642 = vrot.slane %v416, 1
      %v643 = vsel %vm608, %v640, %v642
      %v644 = vrot.slane %v417, 1
      %v645 = vsel %vm608, %v642, %v644
      %646 = vrot.lane.b32.xlu0 %v611, 16
      %v647 = vpop.permute.xlu0 %646
      %648 = vrot.lane.b32.xlu0 %v613, 16
      %v649 = vpop.permute.xlu0 %648
      %650 = vrot.lane.b32.xlu0 %v615, 16
      %v651 = vpop.permute.xlu0 %650
      %652 = vrot.lane.b32.xlu0 %v617, 16
      %v653 = vpop.permute.xlu0 %652
      %654 = vrot.lane.b32.xlu0 %v619, 16
      %v655 = vpop.permute.xlu0 %654
      %656 = vrot.lane.b32.xlu0 %v621, 16
      %v657 = vpop.permute.xlu0 %656
      %658 = vrot.lane.b32.xlu0 %v623, 16
      %v659 = vpop.permute.xlu0 %658
      %660 = vrot.lane.b32.xlu0 %v625, 16
      %v661 = vpop.permute.xlu0 %660
      %662 = vrot.lane.b32.xlu0 %v627, 16
      %v663 = vpop.permute.xlu0 %662
      %664 = vrot.lane.b32.xlu0 %v629, 16
      %v665 = vpop.permute.xlu0 %664
      %666 = vrot.lane.b32.xlu0 %v631, 16
      %v667 = vpop.permute.xlu0 %666
      %668 = vrot.lane.b32.xlu0 %v633, 16
      %v669 = vpop.permute.xlu0 %668
      %670 = vrot.lane.b32.xlu0 %v635, 16
      %v671 = vpop.permute.xlu0 %670
      %672 = vrot.lane.b32.xlu0 %v637, 16
      %v673 = vpop.permute.xlu0 %672
      %674 = vrot.lane.b32.xlu0 %v639, 16
      %v675 = vpop.permute.xlu0 %674
      %676 = vrot.lane.b32.xlu0 %v641, 16
      %v677 = vpop.permute.xlu0 %676
      %678 = vrot.lane.b32.xlu0 %v643, 16
      %v679 = vpop.permute.xlu0 %678
      %680 = vrot.lane.b32.xlu0 %v645, 16
      %v681 = vpop.permute.xlu0 %680
      %682 = vrot.lane.b32.xlu0 %v644, 16
      %v683 = vpop.permute.xlu0 %682
      %v686 = vunpack.c.l.b16 %v320
      %v687 = vunpack.c.l.b16 %v321
      %v688 = vpack.c.b16 %v686, %v398
      %v689 = vpack.c.b16 %v687, %v687
      %v690 = vrot.slane %v688, 1
      %v691 = vsel %vm608, %v642, %v690
      %v692 = vrot.slane %v689, 1
      %v693 = vsel %vm608, %v690, %v692
      %694 = vrot.lane.b32.xlu0 %v613, 24
      %v695 = vpop.permute.xlu0 %694
      %696 = vrot.lane.b32.xlu0 %v615, 24
      %v697 = vpop.permute.xlu0 %696
      %698 = vrot.lane.b32.xlu0 %v617, 24
      %v699 = vpop.permute.xlu0 %698
      %700 = vrot.lane.b32.xlu0 %v619, 24
      %v701 = vpop.permute.xlu0 %700
      %702 = vrot.lane.b32.xlu0 %v621, 24
      %v703 = vpop.permute.xlu0 %702
      %704 = vrot.lane.b32.xlu0 %v623, 24
      %v705 = vpop.permute.xlu0 %704
      %706 = vrot.lane.b32.xlu0 %v625, 24
      %v707 = vpop.permute.xlu0 %706
      %708 = vrot.lane.b32.xlu0 %v627, 24
      %v709 = vpop.permute.xlu0 %708
      %710 = vrot.lane.b32.xlu0 %v629, 24
      %v711 = vpop.permute.xlu0 %710
      %712 = vrot.lane.b32.xlu0 %v631, 24
      %v713 = vpop.permute.xlu0 %712
      %714 = vrot.lane.b32.xlu0 %v633, 24
      %v715 = vpop.permute.xlu0 %714
      %716 = vrot.lane.b32.xlu0 %v635, 24
      %v717 = vpop.permute.xlu0 %716
      %718 = vrot.lane.b32.xlu0 %v637, 24
      %v719 = vpop.permute.xlu0 %718
      %720 = vrot.lane.b32.xlu0 %v639, 24
      %v721 = vpop.permute.xlu0 %720
      %722 = vrot.lane.b32.xlu0 %v641, 24
      %v723 = vpop.permute.xlu0 %722
      %724 = vrot.lane.b32.xlu0 %v643, 24
      %v725 = vpop.permute.xlu0 %724
      %726 = vrot.lane.b32.xlu0 %v691, 24
      %v727 = vpop.permute.xlu0 %726
      %728 = vrot.lane.b32.xlu0 %v693, 24
      %v729 = vpop.permute.xlu0 %728
      %730 = vrot.lane.b32.xlu0 %v692, 24
      %v731 = vpop.permute.xlu0 %730
      %v732 = vpack.c.b16 %v366, %v365
      %v733 = vpack.c.b16 %v368, %v367
      %v734 = vpack.c.b16 %v370, %v369
      %v735 = vpack.c.b16 %v372, %v371
      %v736 = vpack.c.b16 %v374, %v373
      %v737 = vpack.c.b16 %v376, %v375
      %v738 = vpack.c.b16 %v378, %v377
      %v739 = vpack.c.b16 %v380, %v379
      %v740 = vpack.c.b16 %v382, %v381
      %v741 = vpack.c.b16 %v384, %v383
      %v742 = vpack.c.b16 %v386, %v385
      %v743 = vpack.c.b16 %v388, %v387
      %v744 = vpack.c.b16 %v390, %v389
      %v745 = vpack.c.b16 %v392, %v391
      %v746 = vpack.c.b16 %v394, %v393
      %v747 = vpack.c.b16 %v396, %v395
      %v748 = vpack.c.b16 %v398, %v397
      %v749 = vpack.c.b16 %v687, %v686
      %vm750 = vsmask.f32 2304
      %v752 = vshrl.u32 %v732, 16
      %v754 = vrot.slane %v752, 5
      %v755 = vshll.u32 %v732, 16
      %v757 = vrot.slane %v755, 6
      %v758 = vor.u32 %v754, %v757
      %v760 = vshrl.u32 %v733, 16
      %v762 = vrot.slane %v760, 5
      %v763 = vshll.u32 %v733, 16
      %v765 = vrot.slane %v763, 6
      %v766 = vor.u32 %v762, %v765
      %v767 = vsel %vm750, %v758, %v766
      %v769 = vshrl.u32 %v734, 16
      %v771 = vrot.slane %v769, 5
      %v772 = vshll.u32 %v734, 16
      %v774 = vrot.slane %v772, 6
      %v775 = vor.u32 %v771, %v774
      %v776 = vsel %vm750, %v766, %v775
      %v778 = vshrl.u32 %v735, 16
      %v780 = vrot.slane %v778, 5
      %v781 = vshll.u32 %v735, 16
      %v783 = vrot.slane %v781, 6
      %v784 = vor.u32 %v780, %v783
      %v785 = vsel %vm750, %v775, %v784
      %v787 = vshrl.u32 %v736, 16
      %v789 = vrot.slane %v787, 5
      %v790 = vshll.u32 %v736, 16
      %v792 = vrot.slane %v790, 6
      %v793 = vor.u32 %v789, %v792
      %v794 = vsel %vm750, %v784, %v793
      %v796 = vshrl.u32 %v737, 16
      %v798 = vrot.slane %v796, 5
      %v799 = vshll.u32 %v737, 16
      %v801 = vrot.slane %v799, 6
      %v802 = vor.u32 %v798, %v801
      %v803 = vsel %vm750, %v793, %v802
      %v805 = vshrl.u32 %v738, 16
      %v807 = vrot.slane %v805, 5
      %v808 = vshll.u32 %v738, 16
      %v810 = vrot.slane %v808, 6
      %v811 = vor.u32 %v807, %v810
      %v812 = vsel %vm750, %v802, %v811
      %v814 = vshrl.u32 %v739, 16
      %v816 = vrot.slane %v814, 5
      %v817 = vshll.u32 %v739, 16
      %v819 = vrot.slane %v817, 6
      %v820 = vor.u32 %v816, %v819
      %v821 = vsel %vm750, %v811, %v820
      %v823 = vshrl.u32 %v740, 16
      %v825 = vrot.slane %v823, 5
      %v826 = vshll.u32 %v740, 16
      %v828 = vrot.slane %v826, 6
      %v829 = vor.u32 %v825, %v828
      %v830 = vsel %vm750, %v820, %v829
      %v832 = vshrl.u32 %v741, 16
      %v834 = vrot.slane %v832, 5
      %v835 = vshll.u32 %v741, 16
      %v837 = vrot.slane %v835, 6
      %v838 = vor.u32 %v834, %v837
      %v839 = vsel %vm750, %v829, %v838
      %v841 = vshrl.u32 %v742, 16
      %v843 = vrot.slane %v841, 5
      %v844 = vshll.u32 %v742, 16
      %v846 = vrot.slane %v844, 6
      %v847 = vor.u32 %v843, %v846
      %v848 = vsel %vm750, %v838, %v847
      %v850 = vshrl.u32 %v743, 16
      %v852 = vrot.slane %v850, 5
      %v853 = vshll.u32 %v743, 16
      %v855 = vrot.slane %v853, 6
      %v856 = vor.u32 %v852, %v855
      %v857 = vsel %vm750, %v847, %v856
      %v859 = vshrl.u32 %v744, 16
      %v861 = vrot.slane %v859, 5
      %v862 = vshll.u32 %v744, 16
      %v864 = vrot.slane %v862, 6
      %v865 = vor.u32 %v861, %v864
      %v866 = vsel %vm750, %v856, %v865
      %v868 = vshrl.u32 %v745, 16
      %v870 = vrot.slane %v868, 5
      %v871 = vshll.u32 %v745, 16
      %v873 = vrot.slane %v871, 6
      %v874 = vor.u32 %v870, %v873
      %v875 = vsel %vm750, %v865, %v874
      %v877 = vshrl.u32 %v746, 16
      %v879 = vrot.slane %v877, 5
      %v880 = vshll.u32 %v746, 16
      %v882 = vrot.slane %v880, 6
      %v883 = vor.u32 %v879, %v882
      %v884 = vsel %vm750, %v874, %v883
      %v886 = vshrl.u32 %v747, 16
      %v888 = vrot.slane %v886, 5
      %v889 = vshll.u32 %v747, 16
      %v891 = vrot.slane %v889, 6
      %v892 = vor.u32 %v888, %v891
      %v893 = vsel %vm750, %v883, %v892
      %v895 = vshrl.u32 %v748, 16
      %v897 = vrot.slane %v895, 5
      %v898 = vshll.u32 %v748, 16
      %v900 = vrot.slane %v898, 6
      %v901 = vor.u32 %v897, %v900
      %v902 = vsel %vm750, %v892, %v901
      %v904 = vshrl.u32 %v749, 16
      %v906 = vrot.slane %v904, 5
      %v907 = vshll.u32 %v749, 16
      %v909 = vrot.slane %v907, 6
      %v910 = vor.u32 %v906, %v909
      %v911 = vsel %vm750, %v901, %v910
      %912 = vrot.lane.b32.xlu0 %v758, 32
      %v913 = vpop.permute.xlu0 %912
      %914 = vrot.lane.b32.xlu0 %v767, 32
      %v915 = vpop.permute.xlu0 %914
      %916 = vrot.lane.b32.xlu0 %v776, 32
      %v917 = vpop.permute.xlu0 %916
      %918 = vrot.lane.b32.xlu0 %v785, 32
      %v919 = vpop.permute.xlu0 %918
      %920 = vrot.lane.b32.xlu0 %v794, 32
      %v921 = vpop.permute.xlu0 %920
      %922 = vrot.lane.b32.xlu0 %v803, 32
      %v923 = vpop.permute.xlu0 %922
      %924 = vrot.lane.b32.xlu0 %v812, 32
      %v925 = vpop.permute.xlu0 %924
      %926 = vrot.lane.b32.xlu0 %v821, 32
      %v927 = vpop.permute.xlu0 %926
      %928 = vrot.lane.b32.xlu0 %v830, 32
      %v929 = vpop.permute.xlu0 %928
      %930 = vrot.lane.b32.xlu0 %v839, 32
      %v931 = vpop.permute.xlu0 %930
      %932 = vrot.lane.b32.xlu0 %v848, 32
      %v933 = vpop.permute.xlu0 %932
      %934 = vrot.lane.b32.xlu0 %v857, 32
      %v935 = vpop.permute.xlu0 %934
      %936 = vrot.lane.b32.xlu0 %v866, 32
      %v937 = vpop.permute.xlu0 %936
      %938 = vrot.lane.b32.xlu0 %v875, 32
      %v939 = vpop.permute.xlu0 %938
      %940 = vrot.lane.b32.xlu0 %v884, 32
      %v941 = vpop.permute.xlu0 %940
      %942 = vrot.lane.b32.xlu0 %v893, 32
      %v943 = vpop.permute.xlu0 %942
      %944 = vrot.lane.b32.xlu0 %v902, 32
      %v945 = vpop.permute.xlu0 %944
      %946 = vrot.lane.b32.xlu0 %v911, 32
      %v947 = vpop.permute.xlu0 %946
      %948 = vrot.lane.b32.xlu0 %v910, 32
      %v949 = vpop.permute.xlu0 %948
      %v951 = vunpack.c.l.b16 %v322
      %v952 = vpack.c.b16 %v951, %v951
      %vm953 = vcmask 1041408
      %v954 = vrot.slane %v732, 6
      %v955 = vrot.slane %v733, 6
      %v956 = vsel %vm953, %v954, %v955
      %v957 = vrot.slane %v734, 6
      %v958 = vsel %vm953, %v955, %v957
      %v959 = vrot.slane %v735, 6
      %v960 = vsel %vm953, %v957, %v959
      %v961 = vrot.slane %v736, 6
      %v962 = vsel %vm953, %v959, %v961
      %v963 = vrot.slane %v737, 6
      %v964 = vsel %vm953, %v961, %v963
      %v965 = vrot.slane %v738, 6
      %v966 = vsel %vm953, %v963, %v965
      %v967 = vrot.slane %v739, 6
      %v968 = vsel %vm953, %v965, %v967
      %v969 = vrot.slane %v740, 6
      %v970 = vsel %vm953, %v967, %v969
      %v971 = vrot.slane %v741, 6
      %v972 = vsel %vm953, %v969, %v971
      %v973 = vrot.slane %v742, 6
      %v974 = vsel %vm953, %v971, %v973
      %v975 = vrot.slane %v743, 6
      %v976 = vsel %vm953, %v973, %v975
      %v977 = vrot.slane %v744, 6
      %v978 = vsel %vm953, %v975, %v977
      %v979 = vrot.slane %v745, 6
      %v980 = vsel %vm953, %v977, %v979
      %v981 = vrot.slane %v746, 6
      %v982 = vsel %vm953, %v979, %v981
      %v983 = vrot.slane %v747, 6
      %v984 = vsel %vm953, %v981, %v983
      %v985 = vrot.slane %v748, 6
      %v986 = vsel %vm953, %v983, %v985
      %v987 = vrot.slane %v749, 6
      %v988 = vsel %vm953, %v985, %v987
      %v989 = vrot.slane %v952, 6
      %v990 = vsel %vm953, %v987, %v989
      %991 = vrot.lane.b32.xlu0 %v954, 40
      %v992 = vpop.permute.xlu0 %991
      %993 = vrot.lane.b32.xlu0 %v956, 40
      %v994 = vpop.permute.xlu0 %993
      %995 = vrot.lane.b32.xlu0 %v958, 40
      %v996 = vpop.permute.xlu0 %995
      %997 = vrot.lane.b32.xlu0 %v960, 40
      %v998 = vpop.permute.xlu0 %997
      %999 = vrot.lane.b32.xlu0 %v962, 40
      %v1000 = vpop.permute.xlu0 %999
      %1001 = vrot.lane.b32.xlu0 %v964, 40
      %v1002 = vpop.permute.xlu0 %1001
      %1003 = vrot.lane.b32.xlu0 %v966, 40
      %v1004 = vpop.permute.xlu0 %1003
      %1005 = vrot.lane.b32.xlu0 %v968, 40
      %v1006 = vpop.permute.xlu0 %1005
      %1007 = vrot.lane.b32.xlu0 %v970, 40
      %v1008 = vpop.permute.xlu0 %1007
      %1009 = vrot.lane.b32.xlu0 %v972, 40
      %v1010 = vpop.permute.xlu0 %1009
      %1011 = vrot.lane.b32.xlu0 %v974, 40
      %v1012 = vpop.permute.xlu0 %1011
      %1013 = vrot.lane.b32.xlu0 %v976, 40
      %v1014 = vpop.permute.xlu0 %1013
      %1015 = vrot.lane.b32.xlu0 %v978, 40
      %v1016 = vpop.permute.xlu0 %1015
      %1017 = vrot.lane.b32.xlu0 %v980, 40
      %v1018 = vpop.permute.xlu0 %1017
      %1019 = vrot.lane.b32.xlu0 %v982, 40
      %v1020 = vpop.permute.xlu0 %1019
      %1021 = vrot.lane.b32.xlu0 %v984, 40
      %v1022 = vpop.permute.xlu0 %1021
      %1023 = vrot.lane.b32.xlu0 %v986, 40
      %v1024 = vpop.permute.xlu0 %1023
      %1025 = vrot.lane.b32.xlu0 %v988, 40
      %v1026 = vpop.permute.xlu0 %1025
      %1027 = vrot.lane.b32.xlu0 %v990, 40
      %v1028 = vpop.permute.xlu0 %1027
      %v1031 = vunpack.c.l.b16 %v323
      %v1032 = vunpack.c.l.b16 %v324
      %v1033 = vpack.c.b16 %v1031, %v951
      %v1034 = vpack.c.b16 %v1032, %v1032
      %v1035 = vrot.slane %v1033, 6
      %v1036 = vsel %vm953, %v987, %v1035
      %v1037 = vrot.slane %v1034, 6
      %v1038 = vsel %vm953, %v1035, %v1037
      %1039 = vrot.lane.b32.xlu0 %v955, 48
      %v1040 = vpop.permute.xlu0 %1039
      %1041 = vrot.lane.b32.xlu0 %v958, 48
      %v1042 = vpop.permute.xlu0 %1041
      %1043 = vrot.lane.b32.xlu0 %v960, 48
      %v1044 = vpop.permute.xlu0 %1043
      %1045 = vrot.lane.b32.xlu0 %v962, 48
      %v1046 = vpop.permute.xlu0 %1045
      %1047 = vrot.lane.b32.xlu0 %v964, 48
      %v1048 = vpop.permute.xlu0 %1047
      %1049 = vrot.lane.b32.xlu0 %v966, 48
      %v1050 = vpop.permute.xlu0 %1049
      %1051 = vrot.lane.b32.xlu0 %v968, 48
      %v1052 = vpop.permute.xlu0 %1051
      %1053 = vrot.lane.b32.xlu0 %v970, 48
      %v1054 = vpop.permute.xlu0 %1053
      %1055 = vrot.lane.b32.xlu0 %v972, 48
      %v1056 = vpop.permute.xlu0 %1055
      %1057 = vrot.lane.b32.xlu0 %v974, 48
      %v1058 = vpop.permute.xlu0 %1057
      %1059 = vrot.lane.b32.xlu0 %v976, 48
      %v1060 = vpop.permute.xlu0 %1059
      %1061 = vrot.lane.b32.xlu0 %v978, 48
      %v1062 = vpop.permute.xlu0 %1061
      %1063 = vrot.lane.b32.xlu0 %v980, 48
      %v1064 = vpop.permute.xlu0 %1063
      %1065 = vrot.lane.b32.xlu0 %v982, 48
      %v1066 = vpop.permute.xlu0 %1065
      %1067 = vrot.lane.b32.xlu0 %v984, 48
      %v1068 = vpop.permute.xlu0 %1067
      %1069 = vrot.lane.b32.xlu0 %v986, 48
      %v1070 = vpop.permute.xlu0 %1069
      %1071 = vrot.lane.b32.xlu0 %v988, 48
      %v1072 = vpop.permute.xlu0 %1071
      %1073 = vrot.lane.b32.xlu0 %v1036, 48
      %v1074 = vpop.permute.xlu0 %1073
      %1075 = vrot.lane.b32.xlu0 %v1038, 48
      %v1076 = vpop.permute.xlu0 %1075
      %vm1077 = vsmask.f32 1280
      %v1078 = vrot.slane %v760, 6
      %v1079 = vrot.slane %v763, 7
      %v1080 = vor.u32 %v1078, %v1079
      %v1081 = vrot.slane %v769, 6
      %v1082 = vrot.slane %v772, 7
      %v1083 = vor.u32 %v1081, %v1082
      %v1084 = vsel %vm1077, %v1080, %v1083
      %v1085 = vrot.slane %v778, 6
      %v1086 = vrot.slane %v781, 7
      %v1087 = vor.u32 %v1085, %v1086
      %v1088 = vsel %vm1077, %v1083, %v1087
      %v1089 = vrot.slane %v787, 6
      %v1090 = vrot.slane %v790, 7
      %v1091 = vor.u32 %v1089, %v1090
      %v1092 = vsel %vm1077, %v1087, %v1091
      %v1093 = vrot.slane %v796, 6
      %v1094 = vrot.slane %v799, 7
      %v1095 = vor.u32 %v1093, %v1094
      %v1096 = vsel %vm1077, %v1091, %v1095
      %v1097 = vrot.slane %v805, 6
      %v1098 = vrot.slane %v808, 7
      %v1099 = vor.u32 %v1097, %v1098
      %v1100 = vsel %vm1077, %v1095, %v1099
      %v1101 = vrot.slane %v814, 6
      %v1102 = vrot.slane %v817, 7
      %v1103 = vor.u32 %v1101, %v1102
      %v1104 = vsel %vm1077, %v1099, %v1103
      %v1105 = vrot.slane %v823, 6
      %v1106 = vrot.slane %v826, 7
      %v1107 = vor.u32 %v1105, %v1106
      %v1108 = vsel %vm1077, %v1103, %v1107
      %v1109 = vrot.slane %v832, 6
      %v1110 = vrot.slane %v835, 7
      %v1111 = vor.u32 %v1109, %v1110
      %v1112 = vsel %vm1077, %v1107, %v1111
      %v1113 = vrot.slane %v841, 6
      %v1114 = vrot.slane %v844, 7
      %v1115 = vor.u32 %v1113, %v1114
      %v1116 = vsel %vm1077, %v1111, %v1115
      %v1117 = vrot.slane %v850, 6
      %v1118 = vrot.slane %v853, 7
      %v1119 = vor.u32 %v1117, %v1118
      %v1120 = vsel %vm1077, %v1115, %v1119
      %v1121 = vrot.slane %v859, 6
      %v1122 = vrot.slane %v862, 7
      %v1123 = vor.u32 %v1121, %v1122
      %v1124 = vsel %vm1077, %v1119, %v1123
      %v1125 = vrot.slane %v868, 6
      %v1126 = vrot.slane %v871, 7
      %v1127 = vor.u32 %v1125, %v1126
      %v1128 = vsel %vm1077, %v1123, %v1127
      %v1129 = vrot.slane %v877, 6
      %v1130 = vrot.slane %v880, 7
      %v1131 = vor.u32 %v1129, %v1130
      %v1132 = vsel %vm1077, %v1127, %v1131
      %v1133 = vrot.slane %v886, 6
      %v1134 = vrot.slane %v889, 7
      %v1135 = vor.u32 %v1133, %v1134
      %v1136 = vsel %vm1077, %v1131, %v1135
      %v1137 = vrot.slane %v895, 6
      %v1138 = vrot.slane %v898, 7
      %v1139 = vor.u32 %v1137, %v1138
      %v1140 = vsel %vm1077, %v1135, %v1139
      %v1141 = vrot.slane %v904, 6
      %v1142 = vrot.slane %v907, 7
      %v1143 = vor.u32 %v1141, %v1142
      %v1144 = vsel %vm1077, %v1139, %v1143
      %v1146 = vshrl.u32 %v1033, 16
      %v1148 = vrot.slane %v1146, 6
      %v1149 = vshll.u32 %v1033, 16
      %v1151 = vrot.slane %v1149, 7
      %v1152 = vor.u32 %v1148, %v1151
      %v1153 = vsel %vm1077, %v1143, %v1152
      %v1155 = vshrl.u32 %v1034, 16
      %v1157 = vrot.slane %v1155, 6
      %v1158 = vshll.u32 %v1034, 16
      %v1160 = vrot.slane %v1158, 7
      %v1161 = vor.u32 %v1157, %v1160
      %v1162 = vsel %vm1077, %v1152, %v1161
      %1163 = vrot.lane.b32.xlu0 %v1080, 56
      %v1164 = vpop.permute.xlu0 %1163
      %1165 = vrot.lane.b32.xlu0 %v1084, 56
      %v1166 = vpop.permute.xlu0 %1165
      %1167 = vrot.lane.b32.xlu0 %v1088, 56
      %v1168 = vpop.permute.xlu0 %1167
      %1169 = vrot.lane.b32.xlu0 %v1092, 56
      %v1170 = vpop.permute.xlu0 %1169
      %1171 = vrot.lane.b32.xlu0 %v1096, 56
      %v1172 = vpop.permute.xlu0 %1171
      %1173 = vrot.lane.b32.xlu0 %v1100, 56
      %v1174 = vpop.permute.xlu0 %1173
      %1175 = vrot.lane.b32.xlu0 %v1104, 56
      %v1176 = vpop.permute.xlu0 %1175
      %1177 = vrot.lane.b32.xlu0 %v1108, 56
      %v1178 = vpop.permute.xlu0 %1177
      %1179 = vrot.lane.b32.xlu0 %v1112, 56
      %v1180 = vpop.permute.xlu0 %1179
      %1181 = vrot.lane.b32.xlu0 %v1116, 56
      %v1182 = vpop.permute.xlu0 %1181
      %1183 = vrot.lane.b32.xlu0 %v1120, 56
      %v1184 = vpop.permute.xlu0 %1183
      %1185 = vrot.lane.b32.xlu0 %v1124, 56
      %v1186 = vpop.permute.xlu0 %1185
      %1187 = vrot.lane.b32.xlu0 %v1128, 56
      %v1188 = vpop.permute.xlu0 %1187
      %1189 = vrot.lane.b32.xlu0 %v1132, 56
      %v1190 = vpop.permute.xlu0 %1189
      %1191 = vrot.lane.b32.xlu0 %v1136, 56
      %v1192 = vpop.permute.xlu0 %1191
      %1193 = vrot.lane.b32.xlu0 %v1140, 56
      %v1194 = vpop.permute.xlu0 %1193
      %1195 = vrot.lane.b32.xlu0 %v1144, 56
      %v1196 = vpop.permute.xlu0 %1195
      %1197 = vrot.lane.b32.xlu0 %v1153, 56
      %v1198 = vpop.permute.xlu0 %1197
      %1199 = vrot.lane.b32.xlu0 %v1162, 56
      %v1200 = vpop.permute.xlu0 %1199
      %vm1201 = vcmask 1040384
      %v1202 = vrot.slane %v733, 7
      %v1203 = vrot.slane %v734, 7
      %v1204 = vsel %vm1201, %v1202, %v1203
      %v1205 = vrot.slane %v735, 7
      %v1206 = vsel %vm1201, %v1203, %v1205
      %v1207 = vrot.slane %v736, 7
      %v1208 = vsel %vm1201, %v1205, %v1207
      %v1209 = vrot.slane %v737, 7
      %v1210 = vsel %vm1201, %v1207, %v1209
      %v1211 = vrot.slane %v738, 7
      %v1212 = vsel %vm1201, %v1209, %v1211
      %v1213 = vrot.slane %v739, 7
      %v1214 = vsel %vm1201, %v1211, %v1213
      %v1215 = vrot.slane %v740, 7
      %v1216 = vsel %vm1201, %v1213, %v1215
      %v1217 = vrot.slane %v741, 7
      %v1218 = vsel %vm1201, %v1215, %v1217
      %v1219 = vrot.slane %v742, 7
      %v1220 = vsel %vm1201, %v1217, %v1219
      %v1221 = vrot.slane %v743, 7
      %v1222 = vsel %vm1201, %v1219, %v1221
      %v1223 = vrot.slane %v744, 7
      %v1224 = vsel %vm1201, %v1221, %v1223
      %v1225 = vrot.slane %v745, 7
      %v1226 = vsel %vm1201, %v1223, %v1225
      %v1227 = vrot.slane %v746, 7
      %v1228 = vsel %vm1201, %v1225, %v1227
      %v1229 = vrot.slane %v747, 7
      %v1230 = vsel %vm1201, %v1227, %v1229
      %v1231 = vrot.slane %v748, 7
      %v1232 = vsel %vm1201, %v1229, %v1231
      %v1233 = vrot.slane %v749, 7
      %v1234 = vsel %vm1201, %v1231, %v1233
      %v1235 = vrot.slane %v1033, 7
      %v1236 = vsel %vm1201, %v1233, %v1235
      %v1237 = vrot.slane %v1034, 7
      %v1238 = vsel %vm1201, %v1235, %v1237
      %1239 = vrot.lane.b32.xlu0 %v1202, 64
      %v1240 = vpop.permute.xlu0 %1239
      %1241 = vrot.lane.b32.xlu0 %v1204, 64
      %v1242 = vpop.permute.xlu0 %1241
      %1243 = vrot.lane.b32.xlu0 %v1206, 64
      %v1244 = vpop.permute.xlu0 %1243
      %1245 = vrot.lane.b32.xlu0 %v1208, 64
      %v1246 = vpop.permute.xlu0 %1245
      %1247 = vrot.lane.b32.xlu0 %v1210, 64
      %v1248 = vpop.permute.xlu0 %1247
      %1249 = vrot.lane.b32.xlu0 %v1212, 64
      %v1250 = vpop.permute.xlu0 %1249
      %1251 = vrot.lane.b32.xlu0 %v1214, 64
      %v1252 = vpop.permute.xlu0 %1251
      %1253 = vrot.lane.b32.xlu0 %v1216, 64
      %v1254 = vpop.permute.xlu0 %1253
      %1255 = vrot.lane.b32.xlu0 %v1218, 64
      %v1256 = vpop.permute.xlu0 %1255
      %1257 = vrot.lane.b32.xlu0 %v1220, 64
      %v1258 = vpop.permute.xlu0 %1257
      %1259 = vrot.lane.b32.xlu0 %v1222, 64
      %v1260 = vpop.permute.xlu0 %1259
      %1261 = vrot.lane.b32.xlu0 %v1224, 64
      %v1262 = vpop.permute.xlu0 %1261
      %1263 = vrot.lane.b32.xlu0 %v1226, 64
      %v1264 = vpop.permute.xlu0 %1263
      %1265 = vrot.lane.b32.xlu0 %v1228, 64
      %v1266 = vpop.permute.xlu0 %1265
      %1267 = vrot.lane.b32.xlu0 %v1230, 64
      %v1268 = vpop.permute.xlu0 %1267
      %1269 = vrot.lane.b32.xlu0 %v1232, 64
      %v1270 = vpop.permute.xlu0 %1269
      %1271 = vrot.lane.b32.xlu0 %v1234, 64
      %v1272 = vpop.permute.xlu0 %1271
      %1273 = vrot.lane.b32.xlu0 %v1236, 64
      %v1274 = vpop.permute.xlu0 %1273
      %1275 = vrot.lane.b32.xlu0 %v1238, 64
      %v1276 = vpop.permute.xlu0 %1275
      %vm1277 = vcmask 64512
      %v1279 = vsel %vm1277, %v399, %v571
      %v1281 = vsel %vm1277, %v400, %v573
      %v1283 = vsel %vm1277, %v401, %v575
      %v1285 = vsel %vm1277, %v402, %v577
      %v1287 = vsel %vm1277, %v403, %v579
      %v1289 = vsel %vm1277, %v404, %v581
      %v1291 = vsel %vm1277, %v405, %v583
      %v1293 = vsel %vm1277, %v406, %v585
      %v1295 = vsel %vm1277, %v407, %v587
      %v1297 = vsel %vm1277, %v408, %v589
      %v1299 = vsel %vm1277, %v409, %v591
      %v1301 = vsel %vm1277, %v410, %v593
      %v1303 = vsel %vm1277, %v411, %v595
      %v1305 = vsel %vm1277, %v412, %v597
      %v1307 = vsel %vm1277, %v413, %v599
      %v1309 = vsel %vm1277, %v414, %v601
      %v1311 = vsel %vm1277, %v415, %v603
      %v1313 = vsel %vm1277, %v416, %v605
      %v1315 = vsel %vm1277, %v417, %v607
      %vm1316 = vcmask 130048
      %v1318 = vsel %vm1316, %v1279, %v647
      %v1320 = vsel %vm1316, %v1281, %v649
      %v1322 = vsel %vm1316, %v1283, %v651
      %v1324 = vsel %vm1316, %v1285, %v653
      %v1326 = vsel %vm1316, %v1287, %v655
      %v1328 = vsel %vm1316, %v1289, %v657
      %v1330 = vsel %vm1316, %v1291, %v659
      %v1332 = vsel %vm1316, %v1293, %v661
      %v1334 = vsel %vm1316, %v1295, %v663
      %v1336 = vsel %vm1316, %v1297, %v665
      %v1338 = vsel %vm1316, %v1299, %v667
      %v1340 = vsel %vm1316, %v1301, %v669
      %v1342 = vsel %vm1316, %v1303, %v671
      %v1344 = vsel %vm1316, %v1305, %v673
      %v1346 = vsel %vm1316, %v1307, %v675
      %v1348 = vsel %vm1316, %v1309, %v677
      %v1350 = vsel %vm1316, %v1311, %v679
      %v1352 = vsel %vm1316, %v1313, %v681
      %v1354 = vsel %vm1316, %v1315, %v683
      %vm1355 = vcmask 195584
      %v1357 = vsel %vm1355, %v1318, %v695
      %v1359 = vsel %vm1355, %v1320, %v697
      %v1361 = vsel %vm1355, %v1322, %v699
      %v1363 = vsel %vm1355, %v1324, %v701
      %v1365 = vsel %vm1355, %v1326, %v703
      %v1367 = vsel %vm1355, %v1328, %v705
      %v1369 = vsel %vm1355, %v1330, %v707
      %v1371 = vsel %vm1355, %v1332, %v709
      %v1373 = vsel %vm1355, %v1334, %v711
      %v1375 = vsel %vm1355, %v1336, %v713
      %v1377 = vsel %vm1355, %v1338, %v715
      %v1379 = vsel %vm1355, %v1340, %v717
      %v1381 = vsel %vm1355, %v1342, %v719
      %v1383 = vsel %vm1355, %v1344, %v721
      %v1385 = vsel %vm1355, %v1346, %v723
      %v1387 = vsel %vm1355, %v1348, %v725
      %v1389 = vsel %vm1355, %v1350, %v727
      %v1391 = vsel %vm1355, %v1352, %v729
      %v1393 = vsel %vm1355, %v1354, %v731
      %vm1394 = vcmask 261120
      %v1396 = vsel %vm1394, %v1357, %v913
      %v1398 = vsel %vm1394, %v1359, %v915
      %v1400 = vsel %vm1394, %v1361, %v917
      %v1402 = vsel %vm1394, %v1363, %v919
      %v1404 = vsel %vm1394, %v1365, %v921
      %v1406 = vsel %vm1394, %v1367, %v923
      %v1408 = vsel %vm1394, %v1369, %v925
      %v1410 = vsel %vm1394, %v1371, %v927
      %v1412 = vsel %vm1394, %v1373, %v929
      %v1414 = vsel %vm1394, %v1375, %v931
      %v1416 = vsel %vm1394, %v1377, %v933
      %v1418 = vsel %vm1394, %v1379, %v935
      %v1420 = vsel %vm1394, %v1381, %v937
      %v1422 = vsel %vm1394, %v1383, %v939
      %v1424 = vsel %vm1394, %v1385, %v941
      %v1426 = vsel %vm1394, %v1387, %v943
      %v1428 = vsel %vm1394, %v1389, %v945
      %v1430 = vsel %vm1394, %v1391, %v947
      %v1432 = vsel %vm1394, %v1393, %v949
      %vm1433 = vcmask 326656
      %v1435 = vsel %vm1433, %v1396, %v992
      %v1437 = vsel %vm1433, %v1398, %v994
      %v1439 = vsel %vm1433, %v1400, %v996
      %v1441 = vsel %vm1433, %v1402, %v998
      %v1443 = vsel %vm1433, %v1404, %v1000
      %v1445 = vsel %vm1433, %v1406, %v1002
      %v1447 = vsel %vm1433, %v1408, %v1004
      %v1449 = vsel %vm1433, %v1410, %v1006
      %v1451 = vsel %vm1433, %v1412, %v1008
      %v1453 = vsel %vm1433, %v1414, %v1010
      %v1455 = vsel %vm1433, %v1416, %v1012
      %v1457 = vsel %vm1433, %v1418, %v1014
      %v1459 = vsel %vm1433, %v1420, %v1016
      %v1461 = vsel %vm1433, %v1422, %v1018
      %v1463 = vsel %vm1433, %v1424, %v1020
      %v1465 = vsel %vm1433, %v1426, %v1022
      %v1467 = vsel %vm1433, %v1428, %v1024
      %v1469 = vsel %vm1433, %v1430, %v1026
      %v1471 = vsel %vm1433, %v1432, %v1028
      %vm1472 = vcmask 392192
      %v1474 = vsel %vm1472, %v1435, %v1040
      %v1476 = vsel %vm1472, %v1437, %v1042
      %v1478 = vsel %vm1472, %v1439, %v1044
      %v1480 = vsel %vm1472, %v1441, %v1046
      %v1482 = vsel %vm1472, %v1443, %v1048
      %v1484 = vsel %vm1472, %v1445, %v1050
      %v1486 = vsel %vm1472, %v1447, %v1052
      %v1488 = vsel %vm1472, %v1449, %v1054
      %v1490 = vsel %vm1472, %v1451, %v1056
      %v1492 = vsel %vm1472, %v1453, %v1058
      %v1494 = vsel %vm1472, %v1455, %v1060
      %v1496 = vsel %vm1472, %v1457, %v1062
      %v1498 = vsel %vm1472, %v1459, %v1064
      %v1500 = vsel %vm1472, %v1461, %v1066
      %v1502 = vsel %vm1472, %v1463, %v1068
      %v1504 = vsel %vm1472, %v1465, %v1070
      %v1506 = vsel %vm1472, %v1467, %v1072
      %v1508 = vsel %vm1472, %v1469, %v1074
      %v1510 = vsel %vm1472, %v1471, %v1076
      %vm1511 = vcmask 457728
      %v1513 = vsel %vm1511, %v1474, %v1164
      %v1515 = vsel %vm1511, %v1476, %v1166
      %v1517 = vsel %vm1511, %v1478, %v1168
      %v1519 = vsel %vm1511, %v1480, %v1170
      %v1521 = vsel %vm1511, %v1482, %v1172
      %v1523 = vsel %vm1511, %v1484, %v1174
      %v1525 = vsel %vm1511, %v1486, %v1176
      %v1527 = vsel %vm1511, %v1488, %v1178
      %v1529 = vsel %vm1511, %v1490, %v1180
      %v1531 = vsel %vm1511, %v1492, %v1182
      %v1533 = vsel %vm1511, %v1494, %v1184
      %v1535 = vsel %vm1511, %v1496, %v1186
      %v1537 = vsel %vm1511, %v1498, %v1188
      %v1539 = vsel %vm1511, %v1500, %v1190
      %v1541 = vsel %vm1511, %v1502, %v1192
      %v1543 = vsel %vm1511, %v1504, %v1194
      %v1545 = vsel %vm1511, %v1506, %v1196
      %v1547 = vsel %vm1511, %v1508, %v1198
      %v1549 = vsel %vm1511, %v1510, %v1200
      %vm1550 = vcmask 523264
      %v1552 = vsel %vm1550, %v1513, %v1240
      %v1554 = vsel %vm1550, %v1515, %v1242
      %v1556 = vsel %vm1550, %v1517, %v1244
      %v1558 = vsel %vm1550, %v1519, %v1246
      %v1560 = vsel %vm1550, %v1521, %v1248
      %v1562 = vsel %vm1550, %v1523, %v1250
      %v1564 = vsel %vm1550, %v1525, %v1252
      %v1566 = vsel %vm1550, %v1527, %v1254
      %v1568 = vsel %vm1550, %v1529, %v1256
      %v1570 = vsel %vm1550, %v1531, %v1258
      %v1572 = vsel %vm1550, %v1533, %v1260
      %v1574 = vsel %vm1550, %v1535, %v1262
      %v1576 = vsel %vm1550, %v1537, %v1264
      %v1578 = vsel %vm1550, %v1539, %v1266
      %v1580 = vsel %vm1550, %v1541, %v1268
      %v1582 = vsel %vm1550, %v1543, %v1270
      %v1584 = vsel %vm1550, %v1545, %v1272
      %v1586 = vsel %vm1550, %v1547, %v1274
      %v1588 = vsel %vm1550, %v1549, %v1276
      %v1589 = vld [vmem:[%s1] sm:$0xf]
      %v1590 = vld [vmem:[%s1 + $0x4] sm:$0xf]
      %v1591 = vld [vmem:[%s1 + $0x8] sm:$0xf]
      %v1592 = vld [vmem:[%s1 + $0xc] sm:$0xf]
      %v1593 = vld [vmem:[%s1 + $0x10] sm:$0xf]
      %v1594 = vld [vmem:[%s1 + $0x14] sm:$0xf]
      %v1595 = vld [vmem:[%s1 + $0x18] sm:$0xf]
      %v1596 = vld [vmem:[%s1 + $0x1c] sm:$0xf]
      %v1597 = vld [vmem:[%s1 + $0x20] sm:$0xf]
      %v1598 = vld [vmem:[%s2] sm:$0x1]
      %v1600 = vlaneseq
      %v1601 = vshrl.u32 %v1600, 7
      %v1602 = vsub.s32 0, %v1601
      %v1603 = vrot.slane %v1598, %v1602
      %vm1605 = vsmask.f32 5376
      %v1606 = vshrl.u32 %v1552, 16
      %v1608 = vrot.slane %v1606, 2
      %v1609 = vshll.u32 %v1552, 16
      %v1611 = vrot.slane %v1609, 3
      %v1612 = vor.u32 %v1608, %v1611
      %v1613 = vshrl.u32 %v1554, 16
      %v1615 = vrot.slane %v1613, 2
      %v1616 = vshll.u32 %v1554, 16
      %v1618 = vrot.slane %v1616, 3
      %v1619 = vor.u32 %v1615, %v1618
      %v1620 = vsel %vm1605, %v1612, %v1619
      %v1621 = vshrl.u32 %v1556, 16
      %v1623 = vrot.slane %v1621, 2
      %v1624 = vshll.u32 %v1556, 16
      %v1626 = vrot.slane %v1624, 3
      %v1627 = vor.u32 %v1623, %v1626
      %v1628 = vsel %vm1605, %v1619, %v1627
      %v1629 = vshrl.u32 %v1558, 16
      %v1631 = vrot.slane %v1629, 2
      %v1632 = vshll.u32 %v1558, 16
      %v1634 = vrot.slane %v1632, 3
      %v1635 = vor.u32 %v1631, %v1634
      %v1636 = vsel %vm1605, %v1627, %v1635
      %v1637 = vshrl.u32 %v1560, 16
      %v1639 = vrot.slane %v1637, 2
      %v1640 = vshll.u32 %v1560, 16
      %v1642 = vrot.slane %v1640, 3
      %v1643 = vor.u32 %v1639, %v1642
      %v1644 = vsel %vm1605, %v1635, %v1643
      %v1645 = vshrl.u32 %v1562, 16
      %v1647 = vrot.slane %v1645, 2
      %v1648 = vshll.u32 %v1562, 16
      %v1650 = vrot.slane %v1648, 3
      %v1651 = vor.u32 %v1647, %v1650
      %v1652 = vsel %vm1605, %v1643, %v1651
      %v1653 = vshrl.u32 %v1564, 16
      %v1655 = vrot.slane %v1653, 2
      %v1656 = vshll.u32 %v1564, 16
      %v1658 = vrot.slane %v1656, 3
      %v1659 = vor.u32 %v1655, %v1658
      %v1660 = vsel %vm1605, %v1651, %v1659
      %v1661 = vshrl.u32 %v1566, 16
      %v1663 = vrot.slane %v1661, 2
      %v1664 = vshll.u32 %v1566, 16
      %v1666 = vrot.slane %v1664, 3
      %v1667 = vor.u32 %v1663, %v1666
      %v1668 = vsel %vm1605, %v1659, %v1667
      %v1669 = vshrl.u32 %v1568, 16
      %v1671 = vrot.slane %v1669, 2
      %v1672 = vshll.u32 %v1568, 16
      %v1674 = vrot.slane %v1672, 3
      %v1675 = vor.u32 %v1671, %v1674
      %v1676 = vsel %vm1605, %v1667, %v1675
      %v1677 = vshrl.u32 %v1570, 16
      %v1679 = vrot.slane %v1677, 2
      %v1680 = vshll.u32 %v1570, 16
      %v1682 = vrot.slane %v1680, 3
      %v1683 = vor.u32 %v1679, %v1682
      %v1684 = vsel %vm1605, %v1675, %v1683
      %v1685 = vshrl.u32 %v1572, 16
      %v1687 = vrot.slane %v1685, 2
      %v1688 = vshll.u32 %v1572, 16
      %v1690 = vrot.slane %v1688, 3
      %v1691 = vor.u32 %v1687, %v1690
      %v1692 = vsel %vm1605, %v1683, %v1691
      %v1693 = vshrl.u32 %v1574, 16
      %v1695 = vrot.slane %v1693, 2
      %v1696 = vshll.u32 %v1574, 16
      %v1698 = vrot.slane %v1696, 3
      %v1699 = vor.u32 %v1695, %v1698
      %v1700 = vsel %vm1605, %v1691, %v1699
      %v1701 = vshrl.u32 %v1576, 16
      %v1703 = vrot.slane %v1701, 2
      %v1704 = vshll.u32 %v1576, 16
      %v1706 = vrot.slane %v1704, 3
      %v1707 = vor.u32 %v1703, %v1706
      %v1708 = vsel %vm1605, %v1699, %v1707
      %v1709 = vshrl.u32 %v1578, 16
      %v1711 = vrot.slane %v1709, 2
      %v1712 = vshll.u32 %v1578, 16
      %v1714 = vrot.slane %v1712, 3
      %v1715 = vor.u32 %v1711, %v1714
      %v1716 = vsel %vm1605, %v1707, %v1715
      %v1717 = vshrl.u32 %v1580, 16
      %v1719 = vrot.slane %v1717, 2
      %v1720 = vshll.u32 %v1580, 16
      %v1722 = vrot.slane %v1720, 3
      %v1723 = vor.u32 %v1719, %v1722
      %v1724 = vsel %vm1605, %v1715, %v1723
      %v1725 = vshrl.u32 %v1582, 16
      %v1727 = vrot.slane %v1725, 2
      %v1728 = vshll.u32 %v1582, 16
      %v1730 = vrot.slane %v1728, 3
      %v1731 = vor.u32 %v1727, %v1730
      %v1732 = vsel %vm1605, %v1723, %v1731
      %v1733 = vshrl.u32 %v1584, 16
      %v1735 = vrot.slane %v1733, 2
      %v1736 = vshll.u32 %v1584, 16
      %v1738 = vrot.slane %v1736, 3
      %v1739 = vor.u32 %v1735, %v1738
      %v1740 = vsel %vm1605, %v1731, %v1739
      %v1741 = vshrl.u32 %v1586, 16
      %v1743 = vrot.slane %v1741, 2
      %v1744 = vshll.u32 %v1586, 16
      %v1746 = vrot.slane %v1744, 3
      %v1747 = vor.u32 %v1743, %v1746
      %v1748 = vsel %vm1605, %v1739, %v1747
      %v1749 = vshrl.u32 %v1588, 16
      %v1751 = vrot.slane %v1749, 2
      %v1752 = vshll.u32 %v1588, 16
      %v1754 = vrot.slane %v1752, 3
      %v1755 = vor.u32 %v1751, %v1754
      %v1756 = vsel %vm1605, %v1747, %v1755
      %v1766 = vunpack.c.l.b16 %v1589
      %v1767 = vunpack.c.l.b16 %v1590
      %v1768 = vunpack.c.l.b16 %v1591
      %v1769 = vunpack.c.l.b16 %v1592
      %v1770 = vunpack.c.l.b16 %v1593
      %v1771 = vunpack.c.l.b16 %v1594
      %v1772 = vunpack.c.l.b16 %v1595
      %v1773 = vunpack.c.l.b16 %v1596
      %v1774 = vunpack.c.l.b16 %v1597
      %v1775 = vpack.c.b16 %v1767, %v1766
      %v1776 = vpack.c.b16 %v1769, %v1768
      %v1777 = vpack.c.b16 %v1771, %v1770
      %v1778 = vpack.c.b16 %v1773, %v1772
      %v1779 = vpack.c.b16 %v1774, %v1774
      %vm1784 = vcmask 588800
      %v1786 = vsel %vm1784, %v1620, 0
      %v1789 = vsel %vm1784, %v1628, 0
      %v1792 = vsel %vm1784, %v1636, 0
      %v1795 = vsel %vm1784, %v1644, 0
      %v1798 = vsel %vm1784, %v1652, 0
      %v1801 = vsel %vm1784, %v1660, 0
      %v1804 = vsel %vm1784, %v1668, 0
      %v1807 = vsel %vm1784, %v1676, 0
      %v1810 = vsel %vm1784, %v1684, 0
      %v1813 = vsel %vm1784, %v1692, 0
      %v1816 = vsel %vm1784, %v1700, 0
      %v1819 = vsel %vm1784, %v1708, 0
      %v1822 = vsel %vm1784, %v1716, 0
      %v1825 = vsel %vm1784, %v1724, 0
      %v1828 = vsel %vm1784, %v1732, 0
      %v1831 = vsel %vm1784, %v1740, 0
      %v1834 = vsel %vm1784, %v1748, 0
      %v1837 = vsel %vm1784, %v1756, 0
      %vm1839 = vcmask 1043456
      %v1841 = vsel %vm1839, %v1779, 0
      %1843 = vmatprep.subr.bf16.mxu0 0
      %1844 = vmatpush1.bf16.msra.mxu0 %v1775
      %1845 = vmatprep.subr.bf16.mxu0 0
      %1846 = vmatpush1.bf16.msra.mxu0 %v1776
      %1847 = vmatprep.subr.bf16.mxu0 0
      %1848 = vmatpush1.bf16.msra.mxu0 %v1777
      %1849 = vmatprep.subr.bf16.mxu0 0
      %1850 = vmatpush1.bf16.msra.mxu0 %v1778
      %1851 = vmatprep.subr.bf16.mxu0 0
      %1852 = vmatpush1.bf16.msra.mxu0 %v1841
      %1853 = vmatprep.subr.bf16.mxu0 0
      %1854 = vmatpush1.bf16.msra.mxu0 0
      %1855 = vmatprep.subr.bf16.mxu0 0
      %1856 = vmatpush1.bf16.msra.mxu0 0
      %1857 = vmatprep.subr.bf16.mxu0 0
      %1858 = vmatpush1.bf16.msra.mxu0 0
      %1859 = vmatprep.subr.bf16.mxu0 0
      %1860 = vmatpush1.bf16.msra.mxu0 0
      %1861 = vmatprep.subr.bf16.mxu0 0
      %1862 = vmatpush1.bf16.msra.mxu0 0
      %1863 = vmatprep.subr.bf16.mxu0 0
      %1864 = vmatpush1.bf16.msra.mxu0 0
      %1865 = vmatprep.subr.bf16.mxu0 0
      %1866 = vmatpush1.bf16.msra.mxu0 0
      %1867 = vmatprep.subr.bf16.mxu0 0
      %1868 = vmatpush1.bf16.msra.mxu0 0
      %1869 = vmatprep.subr.bf16.mxu0 0
      %1870 = vmatpush1.bf16.msra.mxu0 0
      %1871 = vmatprep.subr.bf16.mxu0 0
      %1872 = vmatpush1.bf16.msra.mxu0 0
      %1873 = vmatprep.subr.bf16.mxu0 0
      %1874 = vmatpush1.bf16.msra.mxu0 0
      %1875 = vmatprep.mubr.bf16.mxu0 0
      %1876 = vmatmul.mubr.bf16.gmra.mrb[0].mxu0 %v1786
      %v1877 = vpop.f32.mrb[0].mxu0
      %v1878 = vadd.f32 %v1603, %v1877
      %v1879 = vpop.f32.mrb[0].mxu0
      %v1880 = vpop.f32.mrb[0].mxu0
      %v1881 = vadd.f32 %v1603, %v1880
      %v1882 = vpop.f32.mrb[0].mxu0
      %1883 = vmatprep.mubr.bf16.mxu0 0
      %1884 = vmatmul.mubr.bf16.gmra.mrb[0].mxu0 %v1789
      %v1885 = vpop.f32.mrb[0].mxu0
      %v1886 = vadd.f32 %v1603, %v1885
      %v1887 = vpop.f32.mrb[0].mxu0
      %v1888 = vpop.f32.mrb[0].mxu0
      %v1889 = vadd.f32 %v1603, %v1888
      %v1890 = vpop.f32.mrb[0].mxu0
      %1891 = vmatprep.mubr.bf16.mxu0 0
      %1892 = vmatmul.mubr.bf16.gmra.mrb[0].mxu0 %v1792
      %v1893 = vpop.f32.mrb[0].mxu0
      %v1894 = vadd.f32 %v1603, %v1893
      %v1895 = vpop.f32.mrb[0].mxu0
      %v1896 = vpop.f32.mrb[0].mxu0
      %v1897 = vadd.f32 %v1603, %v1896
      %v1898 = vpop.f32.mrb[0].mxu0
      %1899 = vmatprep.mubr.bf16.mxu0 0
      %1900 = vmatmul.mubr.bf16.gmra.mrb[0].mxu0 %v1795
      %v1901 = vpop.f32.mrb[0].mxu0
      %v1902 = vadd.f32 %v1603, %v1901
      %v1903 = vpop.f32.mrb[0].mxu0
      %v1904 = vpop.f32.mrb[0].mxu0
      %v1905 = vadd.f32 %v1603, %v1904
      %v1906 = vpop.f32.mrb[0].mxu0
      %1907 = vmatprep.mubr.bf16.mxu0 0
      %1908 = vmatmul.mubr.bf16.gmra.mrb[0].mxu0 %v1798
      %v1909 = vpop.f32.mrb[0].mxu0
      %v1910 = vadd.f32 %v1603, %v1909
      %v1911 = vpop.f32.mrb[0].mxu0
      %v1912 = vpop.f32.mrb[0].mxu0
      %v1913 = vadd.f32 %v1603, %v1912
      %v1914 = vpop.f32.mrb[0].mxu0
      %1915 = vmatprep.mubr.bf16.mxu0 0
      %1916 = vmatmul.mubr.bf16.gmra.mrb[0].mxu0 %v1801
      %v1917 = vpop.f32.mrb[0].mxu0
      %v1918 = vadd.f32 %v1603, %v1917
      %v1919 = vpop.f32.mrb[0].mxu0
      %v1920 = vpop.f32.mrb[0].mxu0
      %v1921 = vadd.f32 %v1603, %v1920
      %v1922 = vpop.f32.mrb[0].mxu0
      %1923 = vmatprep.mubr.bf16.mxu0 0
      %1924 = vmatmul.mubr.bf16.gmra.mrb[0].mxu0 %v1804
      %v1925 = vpop.f32.mrb[0].mxu0
      %v1926 = vadd.f32 %v1603, %v1925
      %v1927 = vpop.f32.mrb[0].mxu0
      %v1928 = vpop.f32.mrb[0].mxu0
      %v1929 = vadd.f32 %v1603, %v1928
      %v1930 = vpop.f32.mrb[0].mxu0
      %1931 = vmatprep.mubr.bf16.mxu0 0
      %1932 = vmatmul.mubr.bf16.gmra.mrb[0].mxu0 %v1807
      %v1933 = vpop.f32.mrb[0].mxu0
      %v1934 = vadd.f32 %v1603, %v1933
      %v1935 = vpop.f32.mrb[0].mxu0
      %v1936 = vpop.f32.mrb[0].mxu0
      %v1937 = vadd.f32 %v1603, %v1936
      %v1938 = vpop.f32.mrb[0].mxu0
      %1939 = vmatprep.mubr.bf16.mxu0 0
      %1940 = vmatmul.mubr.bf16.gmra.mrb[0].mxu0 %v1810
      %v1941 = vpop.f32.mrb[0].mxu0
      %v1942 = vadd.f32 %v1603, %v1941
      %v1943 = vpop.f32.mrb[0].mxu0
      %v1944 = vpop.f32.mrb[0].mxu0
      %v1945 = vadd.f32 %v1603, %v1944
      %v1946 = vpop.f32.mrb[0].mxu0
      %1947 = vmatprep.mubr.bf16.mxu0 0
      %1948 = vmatmul.mubr.bf16.gmra.mrb[0].mxu0 %v1813
      %v1949 = vpop.f32.mrb[0].mxu0
      %v1950 = vadd.f32 %v1603, %v1949
      %v1951 = vpop.f32.mrb[0].mxu0
      %v1952 = vpop.f32.mrb[0].mxu0
      %v1953 = vadd.f32 %v1603, %v1952
      %v1954 = vpop.f32.mrb[0].mxu0
      %1955 = vmatprep.mubr.bf16.mxu0 0
      %1956 = vmatmul.mubr.bf16.gmra.mrb[0].mxu0 %v1816
      %v1957 = vpop.f32.mrb[0].mxu0
      %v1958 = vadd.f32 %v1603, %v1957
      %v1959 = vpop.f32.mrb[0].mxu0
      %v1960 = vpop.f32.mrb[0].mxu0
      %v1961 = vadd.f32 %v1603, %v1960
      %v1962 = vpop.f32.mrb[0].mxu0
      %1963 = vmatprep.mubr.bf16.mxu0 0
      %1964 = vmatmul.mubr.bf16.gmra.mrb[0].mxu0 %v1819
      %v1965 = vpop.f32.mrb[0].mxu0
      %v1966 = vadd.f32 %v1603, %v1965
      %v1967 = vpop.f32.mrb[0].mxu0
      %v1968 = vpop.f32.mrb[0].mxu0
      %v1969 = vadd.f32 %v1603, %v1968
      %v1970 = vpop.f32.mrb[0].mxu0
      %1971 = vmatprep.mubr.bf16.mxu0 0
      %1972 = vmatmul.mubr.bf16.gmra.mrb[0].mxu0 %v1822
      %v1973 = vpop.f32.mrb[0].mxu0
      %v1974 = vadd.f32 %v1603, %v1973
      %v1975 = vpop.f32.mrb[0].mxu0
      %v1976 = vpop.f32.mrb[0].mxu0
      %v1977 = vadd.f32 %v1603, %v1976
      %v1978 = vpop.f32.mrb[0].mxu0
      %1979 = vmatprep.mubr.bf16.mxu0 0
      %1980 = vmatmul.mubr.bf16.gmra.mrb[0].mxu0 %v1825
      %v1981 = vpop.f32.mrb[0].mxu0
      %v1982 = vadd.f32 %v1603, %v1981
      %v1983 = vpop.f32.mrb[0].mxu0
      %v1984 = vpop.f32.mrb[0].mxu0
      %v1985 = vadd.f32 %v1603, %v1984
      %v1986 = vpop.f32.mrb[0].mxu0
      %1987 = vmatprep.mubr.bf16.mxu0 0
      %1988 = vmatmul.mubr.bf16.gmra.mrb[0].mxu0 %v1828
      %v1989 = vpop.f32.mrb[0].mxu0
      %v1990 = vadd.f32 %v1603, %v1989
      %v1991 = vpop.f32.mrb[0].mxu0
      %v1992 = vpop.f32.mrb[0].mxu0
      %v1993 = vadd.f32 %v1603, %v1992
      %v1994 = vpop.f32.mrb[0].mxu0
      %1995 = vmatprep.mubr.bf16.mxu0 0
      %1996 = vmatmul.mubr.bf16.gmra.mrb[0].mxu0 %v1831
      %v1997 = vpop.f32.mrb[0].mxu0
      %v1998 = vadd.f32 %v1603, %v1997
      %v1999 = vpop.f32.mrb[0].mxu0
      %v2000 = vpop.f32.mrb[0].mxu0
      %v2001 = vadd.f32 %v1603, %v2000
      %v2002 = vpop.f32.mrb[0].mxu0
      %2003 = vmatprep.mubr.bf16.mxu0 0
      %2004 = vmatmul.mubr.bf16.gmra.mrb[0].mxu0 %v1834
      %v2005 = vpop.f32.mrb[0].mxu0
      %v2006 = vadd.f32 %v1603, %v2005
      %v2007 = vpop.f32.mrb[0].mxu0
      %v2008 = vpop.f32.mrb[0].mxu0
      %v2009 = vadd.f32 %v1603, %v2008
      %v2010 = vpop.f32.mrb[0].mxu0
      %2011 = vmatprep.mubr.bf16.mxu0 0
      %2012 = vmatmul.mubr.bf16.gmra.mrb[0].mxu0 %v1837
      %v2013 = vpop.f32.mrb[0].mxu0
      %v2014 = vadd.f32 %v1603, %v2013
      %v2015 = vpop.f32.mrb[0].mxu0
      %v2016 = vpop.f32.mrb[0].mxu0
      %v2017 = vadd.f32 %v1603, %v2016
      %v2018 = vpop.f32.mrb[0].mxu0
      %2019 = vdwg.mxu0
      %v2020 = vmax.f32 %v1878, 0.0
      %v2021 = vmax.f32 %v1881, 0.0
      %v2022 = vmax.f32 %v1886, 0.0
      %v2023 = vmax.f32 %v1889, 0.0
      %v2024 = vmax.f32 %v1894, 0.0
      %v2025 = vmax.f32 %v1897, 0.0
      %v2026 = vmax.f32 %v1902, 0.0
      %v2027 = vmax.f32 %v1905, 0.0
      %v2028 = vmax.f32 %v1910, 0.0
      %v2029 = vmax.f32 %v1913, 0.0
      %v2030 = vmax.f32 %v1918, 0.0
      %v2031 = vmax.f32 %v1921, 0.0
      %v2032 = vmax.f32 %v1926, 0.0
      %v2033 = vmax.f32 %v1929, 0.0
      %v2034 = vmax.f32 %v1934, 0.0
      %v2035 = vmax.f32 %v1937, 0.0
      %v2036 = vmax.f32 %v1942, 0.0
      %v2037 = vmax.f32 %v1945, 0.0
      %v2038 = vmax.f32 %v1950, 0.0
      %v2039 = vmax.f32 %v1953, 0.0
      %v2040 = vmax.f32 %v1958, 0.0
      %v2041 = vmax.f32 %v1961, 0.0
      %v2042 = vmax.f32 %v1966, 0.0
      %v2043 = vmax.f32 %v1969, 0.0
      %v2044 = vmax.f32 %v1974, 0.0
      %v2045 = vmax.f32 %v1977, 0.0
      %v2046 = vmax.f32 %v1982, 0.0
      %v2047 = vmax.f32 %v1985, 0.0
      %v2048 = vmax.f32 %v1990, 0.0
      %v2049 = vmax.f32 %v1993, 0.0
      %v2050 = vmax.f32 %v1998, 0.0
      %v2051 = vmax.f32 %v2001, 0.0
      %v2052 = vmax.f32 %v2006, 0.0
      %v2053 = vmax.f32 %v2009, 0.0
      %v2054 = vmax.f32 %v2014, 0.0
      %v2055 = vmax.f32 %v2017, 0.0
      %v2056 = vpack.c.bf16 %v2021, %v2020
      %v2057 = vpack.c.bf16 %v2023, %v2022
      %v2058 = vpack.c.bf16 %v2025, %v2024
      %v2059 = vpack.c.bf16 %v2027, %v2026
      %v2060 = vpack.c.bf16 %v2029, %v2028
      %v2061 = vpack.c.bf16 %v2031, %v2030
      %v2062 = vpack.c.bf16 %v2033, %v2032
      %v2063 = vpack.c.bf16 %v2035, %v2034
      %v2064 = vpack.c.bf16 %v2037, %v2036
      %v2065 = vpack.c.bf16 %v2039, %v2038
      %v2066 = vpack.c.bf16 %v2041, %v2040
      %v2067 = vpack.c.bf16 %v2043, %v2042
      %v2068 = vpack.c.bf16 %v2045, %v2044
      %v2069 = vpack.c.bf16 %v2047, %v2046
      %v2070 = vpack.c.bf16 %v2049, %v2048
      %v2071 = vpack.c.bf16 %v2051, %v2050
      %v2072 = vpack.c.bf16 %v2053, %v2052
      %v2073 = vpack.c.bf16 %v2055, %v2054
      %v2074 = vld [vmem:[%s3] sm:$0xf]
      %v2075 = vld [vmem:[%s3 + $0x4] sm:$0xf]
      %v2076 = vld [vmem:[%s4] sm:$0xf]
      %v2077 = vsel %vm1277, %v732, 0
      %v2079 = vsel %vm1277, %v733, 0
      %v2081 = vsel %vm1277, %v734, 0
      %v2083 = vsel %vm1277, %v735, 0
      %v2085 = vsel %vm1277, %v736, 0
      %v2087 = vsel %vm1277, %v737, 0
      %v2089 = vsel %vm1277, %v738, 0
      %v2091 = vsel %vm1277, %v739, 0
      %v2093 = vsel %vm1277, %v740, 0
      %v2095 = vsel %vm1277, %v741, 0
      %v2097 = vsel %vm1277, %v742, 0
      %v2099 = vsel %vm1277, %v743, 0
      %v2101 = vsel %vm1277, %v744, 0
      %v2103 = vsel %vm1277, %v745, 0
      %v2105 = vsel %vm1277, %v746, 0
      %v2107 = vsel %vm1277, %v747, 0
      %v2109 = vsel %vm1277, %v748, 0
      %v2111 = vsel %vm1277, %v749, 0
      %v2114 = vsel %vm1839, %v2076, 0
      %2116 = vmatprep.subr.bf16.mxu0 0
      %2117 = vmatpush1.bf16.msra.mxu0 %v2114
      %2118 = vmatprep.subr.bf16.mxu0 0
      %2119 = vmatpush1.bf16.msra.mxu0 0
      %2120 = vmatprep.subr.bf16.mxu0 0
      %2121 = vmatpush1.bf16.msra.mxu0 0
      %2122 = vmatprep.subr.bf16.mxu0 0
      %2123 = vmatpush1.bf16.msra.mxu0 0
      %2124 = vmatprep.subr.bf16.mxu0 0
      %2125 = vmatpush1.bf16.msra.mxu0 0
      %2126 = vmatprep.subr.bf16.mxu0 0
      %2127 = vmatpush1.bf16.msra.mxu0 0
      %2128 = vmatprep.subr.bf16.mxu0 0
      %2129 = vmatpush1.bf16.msra.mxu0 0
      %2130 = vmatprep.subr.bf16.mxu0 0
      %2131 = vmatpush1.bf16.msra.mxu0 0
      %2132 = vmatprep.subr.bf16.mxu0 0
      %2133 = vmatpush1.bf16.msra.mxu0 0
      %2134 = vmatprep.subr.bf16.mxu0 0
      %2135 = vmatpush1.bf16.msra.mxu0 0
      %2136 = vmatprep.subr.bf16.mxu0 0
      %2137 = vmatpush1.bf16.msra.mxu0 0
      %2138 = vmatprep.subr.bf16.mxu0 0
      %2139 = vmatpush1.bf16.msra.mxu0 0
      %2140 = vmatprep.subr.bf16.mxu0 0
      %2141 = vmatpush1.bf16.msra.mxu0 0
      %2142 = vmatprep.subr.bf16.mxu0 0
      %2143 = vmatpush1.bf16.msra.mxu0 0
      %2144 = vmatprep.subr.bf16.mxu0 0
      %2145 = vmatpush1.bf16.msra.mxu0 0
      %2146 = vmatprep.subr.bf16.mxu0 0
      %2147 = vmatpush1.bf16.msra.mxu0 0
      %2148 = vmatprep.mubr.bf16.mxu0 0
      %2149 = vmatmul.mubr.bf16.gmra.mrb[0].mxu0 %v2077
      %v2150 = vpop.f32.mrb[0].mxu0
      %v2151 = vadd.f32 0.0, %v2150
      %v2152 = vpop.f32.mrb[0].mxu0
      %v2153 = vpop.f32.mrb[0].mxu0
      %v2154 = vadd.f32 0.0, %v2153
      %v2155 = vpop.f32.mrb[0].mxu0
      %2156 = vmatprep.mubr.bf16.mxu0 0
      %2157 = vmatmul.mubr.bf16.gmra.mrb[0].mxu0 %v2079
      %v2158 = vpop.f32.mrb[0].mxu0
      %v2159 = vadd.f32 0.0, %v2158
      %v2160 = vpop.f32.mrb[0].mxu0
      %v2161 = vpop.f32.mrb[0].mxu0
      %v2162 = vadd.f32 0.0, %v2161
      %v2163 = vpop.f32.mrb[0].mxu0
      %2164 = vmatprep.mubr.bf16.mxu0 0
      %2165 = vmatmul.mubr.bf16.gmra.mrb[0].mxu0 %v2081
      %v2166 = vpop.f32.mrb[0].mxu0
      %v2167 = vadd.f32 0.0, %v2166
      %v2168 = vpop.f32.mrb[0].mxu0
      %v2169 = vpop.f32.mrb[0].mxu0
      %v2170 = vadd.f32 0.0, %v2169
      %v2171 = vpop.f32.mrb[0].mxu0
      %2172 = vmatprep.mubr.bf16.mxu0 0
      %2173 = vmatmul.mubr.bf16.gmra.mrb[0].mxu0 %v2083
      %v2174 = vpop.f32.mrb[0].mxu0
      %v2175 = vadd.f32 0.0, %v2174
      %v2176 = vpop.f32.mrb[0].mxu0
      %v2177 = vpop.f32.mrb[0].mxu0
      %v2178 = vadd.f32 0.0, %v2177
      %v2179 = vpop.f32.mrb[0].mxu0
      %2180 = vmatprep.mubr.bf16.mxu0 0
      %2181 = vmatmul.mubr.bf16.gmra.mrb[0].mxu0 %v2085
      %v2182 = vpop.f32.mrb[0].mxu0
      %v2183 = vadd.f32 0.0, %v2182
      %v2184 = vpop.f32.mrb[0].mxu0
      %v2185 = vpop.f32.mrb[0].mxu0
      %v2186 = vadd.f32 0.0, %v2185
      %v2187 = vpop.f32.mrb[0].mxu0
      %2188 = vmatprep.mubr.bf16.mxu0 0
      %2189 = vmatmul.mubr.bf16.gmra.mrb[0].mxu0 %v2087
      %v2190 = vpop.f32.mrb[0].mxu0
      %v2191 = vadd.f32 0.0, %v2190
      %v2192 = vpop.f32.mrb[0].mxu0
      %v2193 = vpop.f32.mrb[0].mxu0
      %v2194 = vadd.f32 0.0, %v2193
      %v2195 = vpop.f32.mrb[0].mxu0
      %2196 = vmatprep.mubr.bf16.mxu0 0
      %2197 = vmatmul.mubr.bf16.gmra.mrb[0].mxu0 %v2089
      %v2198 = vpop.f32.mrb[0].mxu0
      %v2199 = vadd.f32 0.0, %v2198
      %v2200 = vpop.f32.mrb[0].mxu0
      %v2201 = vpop.f32.mrb[0].mxu0
      %v2202 = vadd.f32 0.0, %v2201
      %v2203 = vpop.f32.mrb[0].mxu0
      %2204 = vmatprep.mubr.bf16.mxu0 0
      %2205 = vmatmul.mubr.bf16.gmra.mrb[0].mxu0 %v2091
      %v2206 = vpop.f32.mrb[0].mxu0
      %v2207 = vadd.f32 0.0, %v2206
      %v2208 = vpop.f32.mrb[0].mxu0
      %v2209 = vpop.f32.mrb[0].mxu0
      %v2210 = vadd.f32 0.0, %v2209
      %v2211 = vpop.f32.mrb[0].mxu0
      %2212 = vmatprep.mubr.bf16.mxu0 0
      %2213 = vmatmul.mubr.bf16.gmra.mrb[0].mxu0 %v2093
      %v2214 = vpop.f32.mrb[0].mxu0
      %v2215 = vadd.f32 0.0, %v2214
      %v2216 = vpop.f32.mrb[0].mxu0
      %v2217 = vpop.f32.mrb[0].mxu0
      %v2218 = vadd.f32 0.0, %v2217
      %v2219 = vpop.f32.mrb[0].mxu0
      %2220 = vmatprep.mubr.bf16.mxu0 0
      %2221 = vmatmul.mubr.bf16.gmra.mrb[0].mxu0 %v2095
      %v2222 = vpop.f32.mrb[0].mxu0
      %v2223 = vadd.f32 0.0, %v2222
      %v2224 = vpop.f32.mrb[0].mxu0
      %v2225 = vpop.f32.mrb[0].mxu0
      %v2226 = vadd.f32 0.0, %v2225
      %v2227 = vpop.f32.mrb[0].mxu0
      %2228 = vmatprep.mubr.bf16.mxu0 0
      %2229 = vmatmul.mubr.bf16.gmra.mrb[0].mxu0 %v2097
      %v2230 = vpop.f32.mrb[0].mxu0
      %v2231 = vadd.f32 0.0, %v2230
      %v2232 = vpop.f32.mrb[0].mxu0
      %v2233 = vpop.f32.mrb[0].mxu0
      %v2234 = vadd.f32 0.0, %v2233
      %v2235 = vpop.f32.mrb[0].mxu0
      %2236 = vmatprep.mubr.bf16.mxu0 0
      %2237 = vmatmul.mubr.bf16.gmra.mrb[0].mxu0 %v2099
      %v2238 = vpop.f32.mrb[0].mxu0
      %v2239 = vadd.f32 0.0, %v2238
      %v2240 = vpop.f32.mrb[0].mxu0
      %v2241 = vpop.f32.mrb[0].mxu0
      %v2242 = vadd.f32 0.0, %v2241
      %v2243 = vpop.f32.mrb[0].mxu0
      %2244 = vmatprep.mubr.bf16.mxu0 0
      %2245 = vmatmul.mubr.bf16.gmra.mrb[0].mxu0 %v2101
      %v2246 = vpop.f32.mrb[0].mxu0
      %v2247 = vadd.f32 0.0, %v2246
      %v2248 = vpop.f32.mrb[0].mxu0
      %v2249 = vpop.f32.mrb[0].mxu0
      %v2250 = vadd.f32 0.0, %v2249
      %v2251 = vpop.f32.mrb[0].mxu0
      %2252 = vmatprep.mubr.bf16.mxu0 0
      %2253 = vmatmul.mubr.bf16.gmra.mrb[0].mxu0 %v2103
      %v2254 = vpop.f32.mrb[0].mxu0
      %v2255 = vadd.f32 0.0, %v2254
      %v2256 = vpop.f32.mrb[0].mxu0
      %v2257 = vpop.f32.mrb[0].mxu0
      %v2258 = vadd.f32 0.0, %v2257
      %v2259 = vpop.f32.mrb[0].mxu0
      %2260 = vmatprep.mubr.bf16.mxu0 0
      %2261 = vmatmul.mubr.bf16.gmra.mrb[0].mxu0 %v2105
      %v2262 = vpop.f32.mrb[0].mxu0
      %v2263 = vadd.f32 0.0, %v2262
      %v2264 = vpop.f32.mrb[0].mxu0
      %v2265 = vpop.f32.mrb[0].mxu0
      %v2266 = vadd.f32 0.0, %v2265
      %v2267 = vpop.f32.mrb[0].mxu0
      %2268 = vmatprep.mubr.bf16.mxu0 0
      %2269 = vmatmul.mubr.bf16.gmra.mrb[0].mxu0 %v2107
      %v2270 = vpop.f32.mrb[0].mxu0
      %v2271 = vadd.f32 0.0, %v2270
      %v2272 = vpop.f32.mrb[0].mxu0
      %v2273 = vpop.f32.mrb[0].mxu0
      %v2274 = vadd.f32 0.0, %v2273
      %v2275 = vpop.f32.mrb[0].mxu0
      %2276 = vmatprep.mubr.bf16.mxu0 0
      %2277 = vmatmul.mubr.bf16.gmra.mrb[0].mxu0 %v2109
      %v2278 = vpop.f32.mrb[0].mxu0
      %v2279 = vadd.f32 0.0, %v2278
      %v2280 = vpop.f32.mrb[0].mxu0
      %v2281 = vpop.f32.mrb[0].mxu0
      %v2282 = vadd.f32 0.0, %v2281
      %v2283 = vpop.f32.mrb[0].mxu0
      %2284 = vmatprep.mubr.bf16.mxu0 0
      %2285 = vmatmul.mubr.bf16.gmra.mrb[0].mxu0 %v2111
      %v2286 = vpop.f32.mrb[0].mxu0
      %v2287 = vadd.f32 0.0, %v2286
      %v2288 = vpop.f32.mrb[0].mxu0
      %v2289 = vpop.f32.mrb[0].mxu0
      %v2290 = vadd.f32 0.0, %v2289
      %v2291 = vpop.f32.mrb[0].mxu0
      %2292 = vdwg.mxu0
      %v2295 = vunpack.c.l.b16 %v2074
      %v2296 = vunpack.c.l.b16 %v2075
      %v2297 = vpack.c.b16 %v2296, %v2295
      %v2300 = vsel %vm1316, %v2056, 0
      %v2303 = vsel %vm1316, %v2057, 0
      %v2306 = vsel %vm1316, %v2058, 0
      %v2309 = vsel %vm1316, %v2059, 0
      %v2312 = vsel %vm1316, %v2060, 0
      %v2315 = vsel %vm1316, %v2061, 0
      %v2318 = vsel %vm1316, %v2062, 0
      %v2321 = vsel %vm1316, %v2063, 0
      %v2324 = vsel %vm1316, %v2064, 0
      %v2327 = vsel %vm1316, %v2065, 0
      %v2330 = vsel %vm1316, %v2066, 0
      %v2333 = vsel %vm1316, %v2067, 0
      %v2336 = vsel %vm1316, %v2068, 0
      %v2339 = vsel %vm1316, %v2069, 0
      %v2342 = vsel %vm1316, %v2070, 0
      %v2345 = vsel %vm1316, %v2071, 0
      %v2348 = vsel %vm1316, %v2072, 0
      %v2351 = vsel %vm1316, %v2073, 0
      %2353 = vmatprep.subr.bf16.mxu0 0
      %2354 = vmatpush1.bf16.msra.mxu0 %v2297
      %2355 = vmatprep.subr.bf16.mxu0 0
      %2356 = vmatpush1.bf16.msra.mxu0 0
      %2357 = vmatprep.subr.bf16.mxu0 0
      %2358 = vmatpush1.bf16.msra.mxu0 0
      %2359 = vmatprep.subr.bf16.mxu0 0
      %2360 = vmatpush1.bf16.msra.mxu0 0
      %2361 = vmatprep.subr.bf16.mxu0 0
      %2362 = vmatpush1.bf16.msra.mxu0 0
      %2363 = vmatprep.subr.bf16.mxu0 0
      %2364 = vmatpush1.bf16.msra.mxu0 0
      %2365 = vmatprep.subr.bf16.mxu0 0
      %2366 = vmatpush1.bf16.msra.mxu0 0
      %2367 = vmatprep.subr.bf16.mxu0 0
      %2368 = vmatpush1.bf16.msra.mxu0 0
      %2369 = vmatprep.subr.bf16.mxu0 0
      %2370 = vmatpush1.bf16.msra.mxu0 0
      %2371 = vmatprep.subr.bf16.mxu0 0
      %2372 = vmatpush1.bf16.msra.mxu0 0
      %2373 = vmatprep.subr.bf16.mxu0 0
      %2374 = vmatpush1.bf16.msra.mxu0 0
      %2375 = vmatprep.subr.bf16.mxu0 0
      %2376 = vmatpush1.bf16.msra.mxu0 0
      %2377 = vmatprep.subr.bf16.mxu0 0
      %2378 = vmatpush1.bf16.msra.mxu0 0
      %2379 = vmatprep.subr.bf16.mxu0 0
      %2380 = vmatpush1.bf16.msra.mxu0 0
      %2381 = vmatprep.subr.bf16.mxu0 0
      %2382 = vmatpush1.bf16.msra.mxu0 0
      %2383 = vmatprep.subr.bf16.mxu0 0
      %2384 = vmatpush1.bf16.msra.mxu0 0
      %2385 = vmatprep.mubr.bf16.mxu0 0
      %2386 = vmatmul.mubr.bf16.gmra.mrb[0].mxu0 %v2300
      %v2387 = vpop.f32.mrb[0].mxu0
      %v2388 = vadd.f32 %v2151, %v2387
      %v2389 = vpop.f32.mrb[0].mxu0
      %v2390 = vpop.f32.mrb[0].mxu0
      %v2391 = vadd.f32 %v2154, %v2390
      %v2392 = vpop.f32.mrb[0].mxu0
      %2393 = vmatprep.mubr.bf16.mxu0 0
      %2394 = vmatmul.mubr.bf16.gmra.mrb[0].mxu0 %v2303
      %v2395 = vpop.f32.mrb[0].mxu0
      %v2396 = vadd.f32 %v2159, %v2395
      %v2397 = vpop.f32.mrb[0].mxu0
      %v2398 = vpop.f32.mrb[0].mxu0
      %v2399 = vadd.f32 %v2162, %v2398
      %v2400 = vpop.f32.mrb[0].mxu0
      %2401 = vmatprep.mubr.bf16.mxu0 0
      %2402 = vmatmul.mubr.bf16.gmra.mrb[0].mxu0 %v2306
      %v2403 = vpop.f32.mrb[0].mxu0
      %v2404 = vadd.f32 %v2167, %v2403
      %v2405 = vpop.f32.mrb[0].mxu0
      %v2406 = vpop.f32.mrb[0].mxu0
      %v2407 = vadd.f32 %v2170, %v2406
      %v2408 = vpop.f32.mrb[0].mxu0
      %2409 = vmatprep.mubr.bf16.mxu0 0
      %2410 = vmatmul.mubr.bf16.gmra.mrb[0].mxu0 %v2309
      %v2411 = vpop.f32.mrb[0].mxu0
      %v2412 = vadd.f32 %v2175, %v2411
      %v2413 = vpop.f32.mrb[0].mxu0
      %v2414 = vpop.f32.mrb[0].mxu0
      %v2415 = vadd.f32 %v2178, %v2414
      %v2416 = vpop.f32.mrb[0].mxu0
      %2417 = vmatprep.mubr.bf16.mxu0 0
      %2418 = vmatmul.mubr.bf16.gmra.mrb[0].mxu0 %v2312
      %v2419 = vpop.f32.mrb[0].mxu0
      %v2420 = vadd.f32 %v2183, %v2419
      %v2421 = vpop.f32.mrb[0].mxu0
      %v2422 = vpop.f32.mrb[0].mxu0
      %v2423 = vadd.f32 %v2186, %v2422
      %v2424 = vpop.f32.mrb[0].mxu0
      %2425 = vmatprep.mubr.bf16.mxu0 0
      %2426 = vmatmul.mubr.bf16.gmra.mrb[0].mxu0 %v2315
      %v2427 = vpop.f32.mrb[0].mxu0
      %v2428 = vadd.f32 %v2191, %v2427
      %v2429 = vpop.f32.mrb[0].mxu0
      %v2430 = vpop.f32.mrb[0].mxu0
      %v2431 = vadd.f32 %v2194, %v2430
      %v2432 = vpop.f32.mrb[0].mxu0
      %2433 = vmatprep.mubr.bf16.mxu0 0
      %2434 = vmatmul.mubr.bf16.gmra.mrb[0].mxu0 %v2318
      %v2435 = vpop.f32.mrb[0].mxu0
      %v2436 = vadd.f32 %v2199, %v2435
      %v2437 = vpop.f32.mrb[0].mxu0
      %v2438 = vpop.f32.mrb[0].mxu0
      %v2439 = vadd.f32 %v2202, %v2438
      %v2440 = vpop.f32.mrb[0].mxu0
      %2441 = vmatprep.mubr.bf16.mxu0 0
      %2442 = vmatmul.mubr.bf16.gmra.mrb[0].mxu0 %v2321
      %v2443 = vpop.f32.mrb[0].mxu0
      %v2444 = vadd.f32 %v2207, %v2443
      %v2445 = vpop.f32.mrb[0].mxu0
      %v2446 = vpop.f32.mrb[0].mxu0
      %v2447 = vadd.f32 %v2210, %v2446
      %v2448 = vpop.f32.mrb[0].mxu0
      %2449 = vmatprep.mubr.bf16.mxu0 0
      %2450 = vmatmul.mubr.bf16.gmra.mrb[0].mxu0 %v2324
      %v2451 = vpop.f32.mrb[0].mxu0
      %v2452 = vadd.f32 %v2215, %v2451
      %v2453 = vpop.f32.mrb[0].mxu0
      %v2454 = vpop.f32.mrb[0].mxu0
      %v2455 = vadd.f32 %v2218, %v2454
      %v2456 = vpop.f32.mrb[0].mxu0
      %2457 = vmatprep.mubr.bf16.mxu0 0
      %2458 = vmatmul.mubr.bf16.gmra.mrb[0].mxu0 %v2327
      %v2459 = vpop.f32.mrb[0].mxu0
      %v2460 = vadd.f32 %v2223, %v2459
      %v2461 = vpop.f32.mrb[0].mxu0
      %v2462 = vpop.f32.mrb[0].mxu0
      %v2463 = vadd.f32 %v2226, %v2462
      %v2464 = vpop.f32.mrb[0].mxu0
      %2465 = vmatprep.mubr.bf16.mxu0 0
      %2466 = vmatmul.mubr.bf16.gmra.mrb[0].mxu0 %v2330
      %v2467 = vpop.f32.mrb[0].mxu0
      %v2468 = vadd.f32 %v2231, %v2467
      %v2469 = vpop.f32.mrb[0].mxu0
      %v2470 = vpop.f32.mrb[0].mxu0
      %v2471 = vadd.f32 %v2234, %v2470
      %v2472 = vpop.f32.mrb[0].mxu0
      %2473 = vmatprep.mubr.bf16.mxu0 0
      %2474 = vmatmul.mubr.bf16.gmra.mrb[0].mxu0 %v2333
      %v2475 = vpop.f32.mrb[0].mxu0
      %v2476 = vadd.f32 %v2239, %v2475
      %v2477 = vpop.f32.mrb[0].mxu0
      %v2478 = vpop.f32.mrb[0].mxu0
      %v2479 = vadd.f32 %v2242, %v2478
      %v2480 = vpop.f32.mrb[0].mxu0
      %2481 = vmatprep.mubr.bf16.mxu0 0
      %2482 = vmatmul.mubr.bf16.gmra.mrb[0].mxu0 %v2336
      %v2483 = vpop.f32.mrb[0].mxu0
      %v2484 = vadd.f32 %v2247, %v2483
      %v2485 = vpop.f32.mrb[0].mxu0
      %v2486 = vpop.f32.mrb[0].mxu0
      %v2487 = vadd.f32 %v2250, %v2486
      %v2488 = vpop.f32.mrb[0].mxu0
      %2489 = vmatprep.mubr.bf16.mxu0 0
      %2490 = vmatmul.mubr.bf16.gmra.mrb[0].mxu0 %v2339
      %v2491 = vpop.f32.mrb[0].mxu0
      %v2492 = vadd.f32 %v2255, %v2491
      %v2493 = vpop.f32.mrb[0].mxu0
      %v2494 = vpop.f32.mrb[0].mxu0
      %v2495 = vadd.f32 %v2258, %v2494
      %v2496 = vpop.f32.mrb[0].mxu0
      %2497 = vmatprep.mubr.bf16.mxu0 0
      %2498 = vmatmul.mubr.bf16.gmra.mrb[0].mxu0 %v2342
      %v2499 = vpop.f32.mrb[0].mxu0
      %v2500 = vadd.f32 %v2263, %v2499
      %v2501 = vpop.f32.mrb[0].mxu0
      %v2502 = vpop.f32.mrb[0].mxu0
      %v2503 = vadd.f32 %v2266, %v2502
      %v2504 = vpop.f32.mrb[0].mxu0
      %2505 = vmatprep.mubr.bf16.mxu0 0
      %2506 = vmatmul.mubr.bf16.gmra.mrb[0].mxu0 %v2345
      %v2507 = vpop.f32.mrb[0].mxu0
      %v2508 = vadd.f32 %v2271, %v2507
      %v2509 = vpop.f32.mrb[0].mxu0
      %v2510 = vpop.f32.mrb[0].mxu0
      %v2511 = vadd.f32 %v2274, %v2510
      %v2512 = vpop.f32.mrb[0].mxu0
      %2513 = vmatprep.mubr.bf16.mxu0 0
      %2514 = vmatmul.mubr.bf16.gmra.mrb[0].mxu0 %v2348
      %v2515 = vpop.f32.mrb[0].mxu0
      %v2516 = vadd.f32 %v2279, %v2515
      %v2517 = vpop.f32.mrb[0].mxu0
      %v2518 = vpop.f32.mrb[0].mxu0
      %v2519 = vadd.f32 %v2282, %v2518
      %v2520 = vpop.f32.mrb[0].mxu0
      %2521 = vmatprep.mubr.bf16.mxu0 0
      %2522 = vmatmul.mubr.bf16.gmra.mrb[0].mxu0 %v2351
      %v2523 = vpop.f32.mrb[0].mxu0
      %v2524 = vadd.f32 %v2287, %v2523
      %v2525 = vpop.f32.mrb[0].mxu0
      %v2526 = vpop.f32.mrb[0].mxu0
      %v2527 = vadd.f32 %v2290, %v2526
      %v2528 = vpop.f32.mrb[0].mxu0
      %2529 = vdwg.mxu0
      %v2530 = vld [vmem:[%s5] sm:$0x1]
      %v2532 = vlaneseq
      %v2533 = vshrl.u32 %v2532, 7
      %v2534 = vsub.s32 0, %v2533
      %v2535 = vrot.slane %v2530, %v2534
      %v2537 = vadd.f32 %v2388, %v2535
      %v2538 = vadd.f32 %v2391, %v2535
      %v2539 = vadd.f32 %v2396, %v2535
      %v2540 = vadd.f32 %v2399, %v2535
      %v2541 = vadd.f32 %v2404, %v2535
      %v2542 = vadd.f32 %v2407, %v2535
      %v2543 = vadd.f32 %v2412, %v2535
      %v2544 = vadd.f32 %v2415, %v2535
      %v2545 = vadd.f32 %v2420, %v2535
      %v2546 = vadd.f32 %v2423, %v2535
      %v2547 = vadd.f32 %v2428, %v2535
      %v2548 = vadd.f32 %v2431, %v2535
      %v2549 = vadd.f32 %v2436, %v2535
      %v2550 = vadd.f32 %v2439, %v2535
      %v2551 = vadd.f32 %v2444, %v2535
      %v2552 = vadd.f32 %v2447, %v2535
      %v2553 = vadd.f32 %v2452, %v2535
      %v2554 = vadd.f32 %v2455, %v2535
      %v2555 = vadd.f32 %v2460, %v2535
      %v2556 = vadd.f32 %v2463, %v2535
      %v2557 = vadd.f32 %v2468, %v2535
      %v2558 = vadd.f32 %v2471, %v2535
      %v2559 = vadd.f32 %v2476, %v2535
      %v2560 = vadd.f32 %v2479, %v2535
      %v2561 = vadd.f32 %v2484, %v2535
      %v2562 = vadd.f32 %v2487, %v2535
      %v2563 = vadd.f32 %v2492, %v2535
      %v2564 = vadd.f32 %v2495, %v2535
      %v2565 = vadd.f32 %v2500, %v2535
      %v2566 = vadd.f32 %v2503, %v2535
      %v2567 = vadd.f32 %v2508, %v2535
      %v2568 = vadd.f32 %v2511, %v2535
      %v2569 = vadd.f32 %v2516, %v2535
      %v2570 = vadd.f32 %v2519, %v2535
      %v2571 = vadd.f32 %v2524, %v2535
      %v2572 = vadd.f32 %v2527, %v2535
      %v2573 = vmax.f32 %v2537, 0.0
      %v2574 = vmax.f32 %v2538, 0.0
      %v2575 = vmax.f32 %v2539, 0.0
      %v2576 = vmax.f32 %v2540, 0.0
      %v2577 = vmax.f32 %v2541, 0.0
      %v2578 = vmax.f32 %v2542, 0.0
      %v2579 = vmax.f32 %v2543, 0.0
      %v2580 = vmax.f32 %v2544, 0.0
      %v2581 = vmax.f32 %v2545, 0.0
      %v2582 = vmax.f32 %v2546, 0.0
      %v2583 = vmax.f32 %v2547, 0.0
      %v2584 = vmax.f32 %v2548, 0.0
      %v2585 = vmax.f32 %v2549, 0.0
      %v2586 = vmax.f32 %v2550, 0.0
      %v2587 = vmax.f32 %v2551, 0.0
      %v2588 = vmax.f32 %v2552, 0.0
      %v2589 = vmax.f32 %v2553, 0.0
      %v2590 = vmax.f32 %v2554, 0.0
      %v2591 = vmax.f32 %v2555, 0.0
      %v2592 = vmax.f32 %v2556, 0.0
      %v2593 = vmax.f32 %v2557, 0.0
      %v2594 = vmax.f32 %v2558, 0.0
      %v2595 = vmax.f32 %v2559, 0.0
      %v2596 = vmax.f32 %v2560, 0.0
      %v2597 = vmax.f32 %v2561, 0.0
      %v2598 = vmax.f32 %v2562, 0.0
      %v2599 = vmax.f32 %v2563, 0.0
      %v2600 = vmax.f32 %v2564, 0.0
      %v2601 = vmax.f32 %v2565, 0.0
      %v2602 = vmax.f32 %v2566, 0.0
      %v2603 = vmax.f32 %v2567, 0.0
      %v2604 = vmax.f32 %v2568, 0.0
      %v2605 = vmax.f32 %v2569, 0.0
      %v2606 = vmax.f32 %v2570, 0.0
      %v2607 = vmax.f32 %v2571, 0.0
      %v2608 = vmax.f32 %v2572, 0.0
      %v2609 = vld [vmem:[%s6] sm:$0xff]
      %v2610 = vld [vmem:[%s6 + $0x8] sm:$0xff]
      %v2611 = vld [vmem:[%s6 + $0x10] sm:$0xff]
      %v2612 = vld [vmem:[%s6 + $0x18] sm:$0xff]
      %v2613 = vld [vmem:[%s6 + $0x20] sm:$0xff]
      %v2614 = vld [vmem:[%s6 + $0x28] sm:$0xff]
      %v2615 = vld [vmem:[%s6 + $0x30] sm:$0xff]
      %v2616 = vld [vmem:[%s6 + $0x38] sm:$0xff]
      %v2617 = vld [vmem:[%s6 + $0x40] sm:$0xff]
      %v2618 = vld [vmem:[%s6 + $0x48] sm:$0xff]
      %v2619 = vld [vmem:[%s6 + $0x50] sm:$0xff]
      %v2620 = vld [vmem:[%s6 + $0x58] sm:$0xff]
      %v2621 = vld [vmem:[%s6 + $0x60] sm:$0xff]
      %v2622 = vld [vmem:[%s6 + $0x68] sm:$0xff]
      %v2623 = vld [vmem:[%s6 + $0x70] sm:$0xff]
      %v2624 = vld [vmem:[%s6 + $0x78] sm:$0xff]
      %v2625 = vld [vmem:[%s6 + $0x80] sm:$0xff]
      %v2626 = vld [vmem:[%s6 + $0x88] sm:$0xff]
      %v2627 = vld [vmem:[%s6 + $0x90] sm:$0xff]
      %v2628 = vld [vmem:[%s6 + $0x98] sm:$0xff]
      %v2629 = vld [vmem:[%s6 + $0xa0] sm:$0xff]
      %v2630 = vld [vmem:[%s6 + $0xa8] sm:$0xff]
      %v2631 = vld [vmem:[%s6 + $0xb0] sm:$0xff]
      %v2632 = vld [vmem:[%s6 + $0xb8] sm:$0xff]
      %v2633 = vld [vmem:[%s6 + $0xc0] sm:$0xff]
      %v2634 = vld [vmem:[%s6 + $0xc8] sm:$0xff]
      %v2635 = vld [vmem:[%s6 + $0xd0] sm:$0xff]
      %v2636 = vld [vmem:[%s6 + $0xd8] sm:$0xff]
      %v2637 = vld [vmem:[%s6 + $0xe0] sm:$0xff]
      %v2638 = vld [vmem:[%s6 + $0xe8] sm:$0xff]
      %v2639 = vld [vmem:[%s6 + $0xf0] sm:$0xff]
      %v2640 = vld [vmem:[%s6 + $0xf8] sm:$0xff]
      %v2641 = vld [vmem:[%s6 + $0x100] sm:$0xff]
      %v2642 = vld [vmem:[%s6 + $0x108] sm:$0xff]
      %v2643 = vld [vmem:[%s6 + $0x110] sm:$0xff]
      %v2644 = vld [vmem:[%s6 + $0x118] sm:$0xff]
      %2646 = vset.pattern.permute.xlu0 0
      %2647 = vperm.xlu0 %2646, %v2609
      %v2648 = vpop.permute.xlu0 %2647
      %2651 = vset.pattern.permute.xlu0 0
      %2652 = vperm.xlu0 %2651, %v2610
      %v2653 = vpop.permute.xlu0 %2652
      %2656 = vset.pattern.permute.xlu0 0
      %2657 = vperm.xlu0 %2656, %v2611
      %v2658 = vpop.permute.xlu0 %2657
      %2661 = vset.pattern.permute.xlu0 0
      %2662 = vperm.xlu0 %2661, %v2612
      %v2663 = vpop.permute.xlu0 %2662
      %2666 = vset.pattern.permute.xlu0 0
      %2667 = vperm.xlu0 %2666, %v2613
      %v2668 = vpop.permute.xlu0 %2667
      %2671 = vset.pattern.permute.xlu0 0
      %2672 = vperm.xlu0 %2671, %v2614
      %v2673 = vpop.permute.xlu0 %2672
      %2676 = vset.pattern.permute.xlu0 0
      %2677 = vperm.xlu0 %2676, %v2615
      %v2678 = vpop.permute.xlu0 %2677
      %2681 = vset.pattern.permute.xlu0 0
      %2682 = vperm.xlu0 %2681, %v2616
      %v2683 = vpop.permute.xlu0 %2682
      %2686 = vset.pattern.permute.xlu0 0
      %2687 = vperm.xlu0 %2686, %v2617
      %v2688 = vpop.permute.xlu0 %2687
      %2691 = vset.pattern.permute.xlu0 0
      %2692 = vperm.xlu0 %2691, %v2618
      %v2693 = vpop.permute.xlu0 %2692
      %2696 = vset.pattern.permute.xlu0 0
      %2697 = vperm.xlu0 %2696, %v2619
      %v2698 = vpop.permute.xlu0 %2697
      %2701 = vset.pattern.permute.xlu0 0
      %2702 = vperm.xlu0 %2701, %v2620
      %v2703 = vpop.permute.xlu0 %2702
      %2706 = vset.pattern.permute.xlu0 0
      %2707 = vperm.xlu0 %2706, %v2621
      %v2708 = vpop.permute.xlu0 %2707
      %2711 = vset.pattern.permute.xlu0 0
      %2712 = vperm.xlu0 %2711, %v2622
      %v2713 = vpop.permute.xlu0 %2712
      %2716 = vset.pattern.permute.xlu0 0
      %2717 = vperm.xlu0 %2716, %v2623
      %v2718 = vpop.permute.xlu0 %2717
      %2721 = vset.pattern.permute.xlu0 0
      %2722 = vperm.xlu0 %2721, %v2624
      %v2723 = vpop.permute.xlu0 %2722
      %2726 = vset.pattern.permute.xlu0 0
      %2727 = vperm.xlu0 %2726, %v2625
      %v2728 = vpop.permute.xlu0 %2727
      %2731 = vset.pattern.permute.xlu0 0
      %2732 = vperm.xlu0 %2731, %v2626
      %v2733 = vpop.permute.xlu0 %2732
      %2736 = vset.pattern.permute.xlu0 0
      %2737 = vperm.xlu0 %2736, %v2627
      %v2738 = vpop.permute.xlu0 %2737
      %2741 = vset.pattern.permute.xlu0 0
      %2742 = vperm.xlu0 %2741, %v2628
      %v2743 = vpop.permute.xlu0 %2742
      %2746 = vset.pattern.permute.xlu0 0
      %2747 = vperm.xlu0 %2746, %v2629
      %v2748 = vpop.permute.xlu0 %2747
      %2751 = vset.pattern.permute.xlu0 0
      %2752 = vperm.xlu0 %2751, %v2630
      %v2753 = vpop.permute.xlu0 %2752
      %2756 = vset.pattern.permute.xlu0 0
      %2757 = vperm.xlu0 %2756, %v2631
      %v2758 = vpop.permute.xlu0 %2757
      %2761 = vset.pattern.permute.xlu0 0
      %2762 = vperm.xlu0 %2761, %v2632
      %v2763 = vpop.permute.xlu0 %2762
      %2766 = vset.pattern.permute.xlu0 0
      %2767 = vperm.xlu0 %2766, %v2633
      %v2768 = vpop.permute.xlu0 %2767
      %2771 = vset.pattern.permute.xlu0 0
      %2772 = vperm.xlu0 %2771, %v2634
      %v2773 = vpop.permute.xlu0 %2772
      %2776 = vset.pattern.permute.xlu0 0
      %2777 = vperm.xlu0 %2776, %v2635
      %v2778 = vpop.permute.xlu0 %2777
      %2781 = vset.pattern.permute.xlu0 0
      %2782 = vperm.xlu0 %2781, %v2636
      %v2783 = vpop.permute.xlu0 %2782
      %2786 = vset.pattern.permute.xlu0 0
      %2787 = vperm.xlu0 %2786, %v2637
      %v2788 = vpop.permute.xlu0 %2787
      %2791 = vset.pattern.permute.xlu0 0
      %2792 = vperm.xlu0 %2791, %v2638
      %v2793 = vpop.permute.xlu0 %2792
      %2796 = vset.pattern.permute.xlu0 0
      %2797 = vperm.xlu0 %2796, %v2639
      %v2798 = vpop.permute.xlu0 %2797
      %2801 = vset.pattern.permute.xlu0 0
      %2802 = vperm.xlu0 %2801, %v2640
      %v2803 = vpop.permute.xlu0 %2802
      %2806 = vset.pattern.permute.xlu0 0
      %2807 = vperm.xlu0 %2806, %v2641
      %v2808 = vpop.permute.xlu0 %2807
      %2811 = vset.pattern.permute.xlu0 0
      %2812 = vperm.xlu0 %2811, %v2642
      %v2813 = vpop.permute.xlu0 %2812
      %2816 = vset.pattern.permute.xlu0 0
      %2817 = vperm.xlu0 %2816, %v2643
      %v2818 = vpop.permute.xlu0 %2817
      %2821 = vset.pattern.permute.xlu0 0
      %2822 = vperm.xlu0 %2821, %v2644
      %v2823 = vpop.permute.xlu0 %2822
      %v2825 = vmul.f32 %v2573, %v2648
      %v2826 = vmul.f32 %v2574, %v2653
      %v2827 = vmul.f32 %v2575, %v2658
      %v2828 = vmul.f32 %v2576, %v2663
      %v2829 = vmul.f32 %v2577, %v2668
      %v2830 = vmul.f32 %v2578, %v2673
      %v2831 = vmul.f32 %v2579, %v2678
      %v2832 = vmul.f32 %v2580, %v2683
      %v2833 = vmul.f32 %v2581, %v2688
      %v2834 = vmul.f32 %v2582, %v2693
      %v2835 = vmul.f32 %v2583, %v2698
      %v2836 = vmul.f32 %v2584, %v2703
      %v2837 = vmul.f32 %v2585, %v2708
      %v2838 = vmul.f32 %v2586, %v2713
      %v2839 = vmul.f32 %v2587, %v2718
      %v2840 = vmul.f32 %v2588, %v2723
      %v2841 = vmul.f32 %v2589, %v2728
      %v2842 = vmul.f32 %v2590, %v2733
      %v2843 = vmul.f32 %v2591, %v2738
      %v2844 = vmul.f32 %v2592, %v2743
      %v2845 = vmul.f32 %v2593, %v2748
      %v2846 = vmul.f32 %v2594, %v2753
      %v2847 = vmul.f32 %v2595, %v2758
      %v2848 = vmul.f32 %v2596, %v2763
      %v2849 = vmul.f32 %v2597, %v2768
      %v2850 = vmul.f32 %v2598, %v2773
      %v2851 = vmul.f32 %v2599, %v2778
      %v2852 = vmul.f32 %v2600, %v2783
      %v2853 = vmul.f32 %v2601, %v2788
      %v2854 = vmul.f32 %v2602, %v2793
      %v2855 = vmul.f32 %v2603, %v2798
      %v2856 = vmul.f32 %v2604, %v2803
      %v2857 = vmul.f32 %v2605, %v2808
      %v2858 = vmul.f32 %v2606, %v2813
      %v2859 = vmul.f32 %v2607, %v2818
      %v2860 = vmul.f32 %v2608, %v2823
      %v2861 = vpack.c.bf16 %v2826, %v2825
      %v2862 = vpack.c.bf16 %v2828, %v2827
      %v2863 = vpack.c.bf16 %v2830, %v2829
      %v2864 = vpack.c.bf16 %v2832, %v2831
      %v2865 = vpack.c.bf16 %v2834, %v2833
      %v2866 = vpack.c.bf16 %v2836, %v2835
      %v2867 = vpack.c.bf16 %v2838, %v2837
      %v2868 = vpack.c.bf16 %v2840, %v2839
      %v2869 = vpack.c.bf16 %v2842, %v2841
      %v2870 = vpack.c.bf16 %v2844, %v2843
      %v2871 = vpack.c.bf16 %v2846, %v2845
      %v2872 = vpack.c.bf16 %v2848, %v2847
      %v2873 = vpack.c.bf16 %v2850, %v2849
      %v2874 = vpack.c.bf16 %v2852, %v2851
      %v2875 = vpack.c.bf16 %v2854, %v2853
      %v2876 = vpack.c.bf16 %v2856, %v2855
      %v2877 = vpack.c.bf16 %v2858, %v2857
      %v2878 = vpack.c.bf16 %v2860, %v2859
      %v2897 = vunpack.c.l.b16 %v2861
      %v2898 = vunpack.c.h.b16 %v2861
      %v2899 = vunpack.c.l.b16 %v2862
      %v2900 = vunpack.c.h.b16 %v2862
      %v2901 = vunpack.c.l.b16 %v2863
      %v2902 = vunpack.c.h.b16 %v2863
      %v2903 = vunpack.c.l.b16 %v2864
      %v2904 = vunpack.c.h.b16 %v2864
      %v2905 = vunpack.c.l.b16 %v2865
      %v2906 = vunpack.c.h.b16 %v2865
      %v2907 = vunpack.c.l.b16 %v2866
      %v2908 = vunpack.c.h.b16 %v2866
      %v2909 = vunpack.c.l.b16 %v2867
      %v2910 = vunpack.c.h.b16 %v2867
      %v2911 = vunpack.c.l.b16 %v2868
      %v2912 = vunpack.c.h.b16 %v2868
      %v2913 = vunpack.c.l.b16 %v2869
      %v2914 = vunpack.c.h.b16 %v2869
      %v2915 = vunpack.c.l.b16 %v2870
      %v2916 = vunpack.c.h.b16 %v2870
      %v2917 = vunpack.c.l.b16 %v2871
      %v2918 = vunpack.c.h.b16 %v2871
      %v2919 = vunpack.c.l.b16 %v2872
      %v2920 = vunpack.c.h.b16 %v2872
      %v2921 = vunpack.c.l.b16 %v2873
      %v2922 = vunpack.c.h.b16 %v2873
      %v2923 = vunpack.c.l.b16 %v2874
      %v2924 = vunpack.c.h.b16 %v2874
      %v2925 = vunpack.c.l.b16 %v2875
      %v2926 = vunpack.c.h.b16 %v2875
      %v2927 = vunpack.c.l.b16 %v2876
      %v2928 = vunpack.c.h.b16 %v2876
      %v2929 = vunpack.c.l.b16 %v2877
      %v2930 = vunpack.c.h.b16 %v2877
      %v2931 = vunpack.c.l.b16 %v2878
      %v2932 = vunpack.c.h.b16 %v2878
      %v2933 = vpack.c.b16 %v2897, %v2897
      %v2934 = vpack.c.b16 %v2898, %v2898
      %v2935 = vpack.c.b16 %v2899, %v2899
      %v2936 = vpack.c.b16 %v2900, %v2900
      %v2937 = vpack.c.b16 %v2901, %v2901
      %v2938 = vpack.c.b16 %v2902, %v2902
      %v2939 = vpack.c.b16 %v2903, %v2903
      %v2940 = vpack.c.b16 %v2904, %v2904
      %v2941 = vpack.c.b16 %v2905, %v2905
      %v2942 = vpack.c.b16 %v2906, %v2906
      %v2943 = vpack.c.b16 %v2907, %v2907
      %v2944 = vpack.c.b16 %v2908, %v2908
      %v2945 = vpack.c.b16 %v2909, %v2909
      %v2946 = vpack.c.b16 %v2910, %v2910
      %v2947 = vpack.c.b16 %v2911, %v2911
      %v2948 = vpack.c.b16 %v2912, %v2912
      %v2949 = vpack.c.b16 %v2913, %v2913
      %v2950 = vpack.c.b16 %v2914, %v2914
      %v2951 = vpack.c.b16 %v2915, %v2915
      %v2952 = vpack.c.b16 %v2916, %v2916
      %v2953 = vpack.c.b16 %v2917, %v2917
      %v2954 = vpack.c.b16 %v2918, %v2918
      %v2955 = vpack.c.b16 %v2919, %v2919
      %v2956 = vpack.c.b16 %v2920, %v2920
      %v2957 = vpack.c.b16 %v2921, %v2921
      %v2958 = vpack.c.b16 %v2922, %v2922
      %v2959 = vpack.c.b16 %v2923, %v2923
      %v2960 = vpack.c.b16 %v2924, %v2924
      %v2961 = vpack.c.b16 %v2925, %v2925
      %v2962 = vpack.c.b16 %v2926, %v2926
      %v2963 = vpack.c.b16 %v2927, %v2927
      %v2964 = vpack.c.b16 %v2928, %v2928
      %v2965 = vpack.c.b16 %v2929, %v2929
      %v2966 = vpack.c.b16 %v2930, %v2930
      %v2967 = vpack.c.b16 %v2931, %v2931
      %v2968 = vpack.c.b16 %v2932, %v2932
      %vm3005 = vcmask 125952
      %3006 = vst.msk [vmem:[%s280] sm:$0xf] %vm3005, %v2933
      %3007 = vst.msk [vmem:[%s280 + $0x4] sm:$0xf] %vm3005, %v2934
      %3008 = vst.msk [vmem:[%s280 + $0x8] sm:$0xf] %vm3005, %v2935
      %3009 = vst.msk [vmem:[%s280 + $0xc] sm:$0xf] %vm3005, %v2936
      %3010 = vst.msk [vmem:[%s280 + $0x10] sm:$0xf] %vm3005, %v2937
      %3011 = vst.msk [vmem:[%s280 + $0x14] sm:$0xf] %vm3005, %v2938
      %3012 = vst.msk [vmem:[%s280 + $0x18] sm:$0xf] %vm3005, %v2939
      %3013 = vst.msk [vmem:[%s280 + $0x1c] sm:$0xf] %vm3005, %v2940
      %3014 = vst.msk [vmem:[%s280 + $0x20] sm:$0xf] %vm3005, %v2941
      %3015 = vst.msk [vmem:[%s280 + $0x24] sm:$0xf] %vm3005, %v2942
      %3016 = vst.msk [vmem:[%s280 + $0x28] sm:$0xf] %vm3005, %v2943
      %3017 = vst.msk [vmem:[%s280 + $0x2c] sm:$0xf] %vm3005, %v2944
      %3018 = vst.msk [vmem:[%s280 + $0x30] sm:$0xf] %vm3005, %v2945
      %3019 = vst.msk [vmem:[%s280 + $0x34] sm:$0xf] %vm3005, %v2946
      %3020 = vst.msk [vmem:[%s280 + $0x38] sm:$0xf] %vm3005, %v2947
      %3021 = vst.msk [vmem:[%s280 + $0x3c] sm:$0xf] %vm3005, %v2948
      %3022 = vst.msk [vmem:[%s280 + $0x40] sm:$0xf] %vm3005, %v2949
      %3023 = vst.msk [vmem:[%s280 + $0x44] sm:$0xf] %vm3005, %v2950
      %3024 = vst.msk [vmem:[%s280 + $0x48] sm:$0xf] %vm3005, %v2951
      %3025 = vst.msk [vmem:[%s280 + $0x4c] sm:$0xf] %vm3005, %v2952
      %3026 = vst.msk [vmem:[%s280 + $0x50] sm:$0xf] %vm3005, %v2953
      %3027 = vst.msk [vmem:[%s280 + $0x54] sm:$0xf] %vm3005, %v2954
      %3028 = vst.msk [vmem:[%s280 + $0x58] sm:$0xf] %vm3005, %v2955
      %3029 = vst.msk [vmem:[%s280 + $0x5c] sm:$0xf] %vm3005, %v2956
      %3030 = vst.msk [vmem:[%s280 + $0x60] sm:$0xf] %vm3005, %v2957
      %3031 = vst.msk [vmem:[%s280 + $0x64] sm:$0xf] %vm3005, %v2958
      %3032 = vst.msk [vmem:[%s280 + $0x68] sm:$0xf] %vm3005, %v2959
      %3033 = vst.msk [vmem:[%s280 + $0x6c] sm:$0xf] %vm3005, %v2960
      %3034 = vst.msk [vmem:[%s280 + $0x70] sm:$0xf] %vm3005, %v2961
      %3035 = vst.msk [vmem:[%s280 + $0x74] sm:$0xf] %vm3005, %v2962
      %3036 = vst.msk [vmem:[%s280 + $0x78] sm:$0xf] %vm3005, %v2963
      %3037 = vst.msk [vmem:[%s280 + $0x7c] sm:$0xf] %vm3005, %v2964
      %3038 = vst.msk [vmem:[%s280 + $0x80] sm:$0xf] %vm3005, %v2965
      %3039 = vst.msk [vmem:[%s280 + $0x84] sm:$0xf] %vm3005, %v2966
      %3040 = vst.msk [vmem:[%s280 + $0x88] sm:$0xf] %vm3005, %v2967
      %3041 = vst.msk [vmem:[%s280 + $0x8c] sm:$0xf] %vm3005, %v2968
      %s3042 = smul.u32 36, %s18
      %p3043 = scmp.lt.s32.totalorder %s3042, 71
      %s3044 = scalar_select %p3043, %s3042, 71
      %s3045 = smul.addr %s3044, 4
      %s3046 = scalar_lea.vmem %s7, %s3045
      // Predicated region
      $region49: #{resnet_forward.6} parent=47 // pred_check
        %p3047 = pneg %p188
      $region50: #{resnet_forward.6} parent=47 // pred_check_branch
        %3049 = sbr.rel (%p3047) target = $region52
      $region51: #{resnet_forward.6} parent=47 // pred_region
        %s3050 = smul.u32 36, %s18
      $region52: #{resnet_forward.6} parent=47 // pred_fallthru
        _
    $region48: #{resnet_forward.6} parent=5 // pred_fallthru
      _
    %p3051 = scmp.le.s32.totalorder 2, %s13
    // Predicated region
    $region53: #{resnet_forward.6} parent=5 // pred_check
      %p3052 = pneg %p3051
    $region54: #{resnet_forward.6} parent=5 // pred_check_branch
      %3054 = sbr.rel (%p3052) target = $region56
    $region55: #{resnet_forward.6} parent=5 // pred_region
      %s3055 = ssub.s32 %s13, 2
      // Predicated region
      $region57: #{resnet_forward.6} parent=55 // pred_check
        %p3056 = pneg %p194
      $region58: #{resnet_forward.6} parent=55 // pred_check_branch
        %3058 = sbr.rel (%p3056) target = $region60
      $region59: #{resnet_forward.6} parent=55 // pred_region
        %s3059 = smul.u32 36, %s19
        %p3060 = scmp.lt.s32.totalorder %s3059, 71
        %s3061 = scalar_select %p3060, %s3059, 71
        %s3062 = smul.addr %s3061, 4
        %s3063 = scalar_lea.vmem %s7, %s3062
      $region60: #{resnet_forward.6} parent=55 // pred_fallthru
        _
    $region56: #{resnet_forward.6} parent=5 // pred_fallthru
      _
  $region6: #{resnet_forward.6} parent=0 // loop_footer
    %s17 = sadd.s32 1, %s13
  $region7: #{resnet_forward.6} parent=0 // loop_footer_branch
    %12 = sbr.rel target = $region3
  $region8: #{resnet_forward.6} parent=0 // loop_exit
    _

</llo_original>
